<compile_context>
chip_gen: v5e
topology: v5e:2x2
jax: 0.10.0
libtpu: 0.0.40
codegen_flags: <defaults>
</compile_context>

<pallas_src>
import math
import functools

import jax
import jax.numpy as jnp
from jax.experimental import pallas as pl
from jax.experimental.pallas import tpu as pltpu

N_EMBD = 128
N_HEAD = 4
LN_EPS = 1e-5


def _layer_norm(v, gamma, beta):
    # v: (N, C) f32; gamma/beta: (1, C) f32
    mu = jnp.mean(v, axis=-1, keepdims=True)
    var = jnp.mean((v - mu) ** 2, axis=-1, keepdims=True)
    return (v - mu) * jax.lax.rsqrt(var + LN_EPS) * gamma + beta


def block_kernel(x_ref,
                 ln1g_ref, ln1b_ref,
                 wqkv_ref, bqkv_ref,
                 wo_ref, bo_ref,
                 ln2g_ref, ln2b_ref,
                 w1_ref, b1_ref,
                 w2_ref, b2_ref,
                 o_ref,
                 *, num_heads):
    Bb, T, C = x_ref.shape
    H = num_heads
    hd = C // H
    N = Bb * T
    bf16 = jnp.bfloat16
    f32 = jnp.float32

    # Flatten the Bb sequences into one (N, C) slab for all linear layers
    # (leading-dim reshape only -- no relayout).
    x = x_ref[...].reshape(N, C).astype(f32)

    # ---- self-attention branch: x + Wo(MHA(LN1(x))) + bo ----
    h = _layer_norm(x, ln1g_ref[...], ln1b_ref[...])

    # 1/sqrt(hd) is pre-folded into the q columns of wqkv / bqkv (wrapper).
    qkv = jnp.dot(h.astype(bf16), wqkv_ref[...],
                  preferred_element_type=f32) + bqkv_ref[...]       # (N, 3C) f32
    q = qkv[:, 0 * C:1 * C]
    k = qkv[:, 1 * C:2 * C]
    v = qkv[:, 2 * C:3 * C]

    # Per-head loop (H is small & static); each head batched over the Bb
    # sequences with 3-D einsums.  Head outputs are concatenated at static
    # lane offsets into one (N, C) slab so the out-projection is a single
    # K=C matmul instead of H small K=hd matmuls.
    head_outs = []
    for hh in range(H):
        lo = hh * hd
        qh = q[:, lo:lo + hd].reshape(Bb, T, hd).astype(bf16)
        kh = k[:, lo:lo + hd].reshape(Bb, T, hd).astype(bf16)
        vh = v[:, lo:lo + hd].reshape(Bb, T, hd).astype(bf16)
        s = jnp.einsum('bqd,bkd->bqk', qh, kh,
                       preferred_element_type=f32)                  # (Bb, T, T) f32
        s = s - jnp.max(s, axis=-1, keepdims=True)
        p = jnp.exp(s)
        p = p / jnp.sum(p, axis=-1, keepdims=True)                  # exact softmax
        oh = jnp.einsum('bqk,bkd->bqd', p.astype(bf16), vh,
                        preferred_element_type=f32)                 # (Bb, T, hd)
        head_outs.append(oh.reshape(N, hd))
    o_cat = jnp.concatenate(head_outs, axis=-1).astype(bf16)        # (N, C)

    attn = jnp.dot(o_cat, wo_ref[...],
                   preferred_element_type=f32) + bo_ref[...]        # (N, C) f32
    x = x + attn

    # ---- feed-forward branch: x + FFN(LN2(x)) ----
    h2 = _layer_norm(x, ln2g_ref[...], ln2b_ref[...])
    hid = jnp.dot(h2.astype(bf16), w1_ref[...],
                  preferred_element_type=f32) + b1_ref[...]         # (N, 4C) f32
    hid = jnp.maximum(hid, 0.0).astype(bf16)                        # ReLU, bf16 MXU lhs
    ffn = jnp.dot(hid, w2_ref[...],
                  preferred_element_type=f32) + b2_ref[...]         # (N, C) f32
    # Dropout(p=0.0) is identity.
    o_ref[...] = (x + ffn).reshape(Bb, T, C)


def _pick_block_batch(B, T, target_rows=256, min_rows=128):
    """How many sequences to process per grid step.

    Aim for >= target_rows MXU rows per step (256-wide v6e/v7x MXU), but keep
    at least 2 grid steps when that doesn't starve the MXU M-dim (or when the
    whole problem is below min_rows anyway), so v7x's two TensorCores both
    get work from the "parallel" grid axis.  Single-TC v5e/v6e pay one extra
    ~0.35us step in the worst case, which is negligible.
    """
    bb = max(1, min(B, -(-target_rows // T)))
    while B % bb:       # keep the grid exact
        bb -= 1
    if bb == B and B > 1:
        half = max(1, B // 2)
        while B % half:
            half -= 1
        if half * T >= min_rows or B * T < min_rows:
            bb = half
    return bb


def _vmem_limit_bytes(Bb, T, C, H):
    """Rough VMEM need (activations + weights + intermediates) with headroom."""
    n = Bb * T
    act = 2 * 2 * n * C * 4                                   # x in + out, 2-buffered
    w = (C * 3 * C + C * C + 8 * C * C) * 2 + (17 * C) * 4    # bf16 mats + f32 vecs
    inter = n * (3 * C + 8 * C) * 4 + Bb * H * T * T * 4      # qkv, hid, scores
    est = act + 2 * w + inter
    return int(min(max(4 * est, 32 * 1024 * 1024), 96 * 1024 * 1024))


def block_forward(x, params, *, num_heads=N_HEAD, block_batch=None):
    B, T, C = x.shape
    assert C % num_heads == 0
    if block_batch is None:
        block_batch = _pick_block_batch(B, T)
    assert B % block_batch == 0

    f32, bf16 = jnp.float32, jnp.bfloat16
    hd = C // num_heads
    scale = 1.0 / math.sqrt(hd)

    # Fold 1/sqrt(hd) into the q-columns of the packed qkv projection so the
    # kernel never scales the (Bb, T, T) score tiles.
    wqkv = params["wqkv"].astype(f32).at[:, :C].multiply(scale)
    bqkv = params["bqkv"].astype(f32).at[:, :C].multiply(scale)

    # Matmul weights go to the MXU in bf16; LN params and biases stay f32.
    weight_list = [
        params["ln1_gamma"].astype(f32), params["ln1_beta"].astype(f32),
        wqkv.astype(bf16), bqkv,
        params["wo"].astype(bf16), params["bo"].astype(f32),
        params["ln2_gamma"].astype(f32), params["ln2_beta"].astype(f32),
        params["w1"].astype(bf16), params["b1"].astype(f32),
        params["w2"].astype(bf16), params["b2"].astype(f32),
    ]

    kernel = functools.partial(block_kernel, num_heads=num_heads)
    out_shape = jax.ShapeDtypeStruct((B, T, C), f32)

    def build(single_buffer_weights):
        def full_spec(w):
            idx = lambda b, _nd=w.ndim: (0,) * _nd
            if single_buffer_weights:
                # Constant-index weight blocks: no need to double-buffer.
                return pl.BlockSpec(w.shape, idx, pipeline_mode=pl.Buffered(1))
            return pl.BlockSpec(w.shape, idx)

        in_specs = [pl.BlockSpec((block_batch, T, C), lambda b: (b, 0, 0))] + [
            full_spec(w) for w in weight_list
        ]
        out_spec = pl.BlockSpec((block_batch, T, C), lambda b: (b, 0, 0))

        return pl.pallas_call(
            kernel,
            out_shape=out_shape,
            grid_spec=pltpu.PrefetchScalarGridSpec(
                num_scalar_prefetch=0,
                grid=(B // block_batch,),
                in_specs=in_specs,
                out_specs=out_spec,
            ),
            compiler_params=pltpu.CompilerParams(
                dimension_semantics=("parallel",),
                vmem_limit_bytes=_vmem_limit_bytes(block_batch, T, C, num_heads),
            ),
        )

    xs = x.astype(f32)
    try:
        return build(True)(xs, *weight_list)
    except Exception:
        # pipeline_mode single-buffering unsupported on this jax/libtpu --
        # fall back to default double-buffered weight blocks (same math).
        return build(False)(xs, *weight_list)


def init_params(key, n_embd=N_EMBD):
    ks = jax.random.split(key, 6)
    s_attn = 1.0 / math.sqrt(n_embd)
    s_ffn1 = 1.0 / math.sqrt(n_embd)
    s_ffn2 = 1.0 / math.sqrt(4 * n_embd)
    return {
        # LayerNorm 1 / 2 (default init: gamma=1, beta=0)
        "ln1_gamma": jnp.ones((1, n_embd), jnp.float32),
        "ln1_beta": jnp.zeros((1, n_embd), jnp.float32),
        "ln2_gamma": jnp.ones((1, n_embd), jnp.float32),
        "ln2_beta": jnp.zeros((1, n_embd), jnp.float32),
        # MultiheadAttention in-projection (packed q,k,v) and out-projection,
        # stored as (in, out) so the kernel does x @ W + b.
        "wqkv": jax.random.uniform(ks[0], (n_embd, 3 * n_embd), jnp.float32,
                                   -s_attn, s_attn),
        "bqkv": jnp.zeros((1, 3 * n_embd), jnp.float32),
        "wo": jax.random.uniform(ks[1], (n_embd, n_embd), jnp.float32,
                                 -s_attn, s_attn),
        "bo": jnp.zeros((1, n_embd), jnp.float32),
        # FeedForward: Linear(C, 4C) -> ReLU -> Linear(4C, C)
        "w1": jax.random.uniform(ks[2], (n_embd, 4 * n_embd), jnp.float32,
                                 -s_ffn1, s_ffn1),
        "b1": jax.random.uniform(ks[3], (1, 4 * n_embd), jnp.float32,
                                 -s_ffn1, s_ffn1),
        "w2": jax.random.uniform(ks[4], (4 * n_embd, n_embd), jnp.float32,
                                 -s_ffn2, s_ffn2),
        "b2": jax.random.uniform(ks[5], (1, n_embd), jnp.float32,
                                 -s_ffn2, s_ffn2),
    }


def block_ref(x, p, num_heads=N_HEAD):
    """Pure-JAX f32 reference (same math as the PyTorch module)."""
    def ln(v, g, b):
        mu = jnp.mean(v, -1, keepdims=True)
        var = jnp.mean((v - mu) ** 2, -1, keepdims=True)
        return (v - mu) / jnp.sqrt(var + LN_EPS) * g + b

    B, T, C = x.shape
    hd = C // num_heads
    h = ln(x, p["ln1_gamma"], p["ln1_beta"])
    qkv = h @ p["wqkv"] + p["bqkv"]
    q, k, v = jnp.split(qkv, 3, axis=-1)
    q = q.reshape(B, T, num_heads, hd).transpose(0, 2, 1, 3)
    k = k.reshape(B, T, num_heads, hd).transpose(0, 2, 1, 3)
    v = v.reshape(B, T, num_heads, hd).transpose(0, 2, 1, 3)
    a = jax.nn.softmax(jnp.einsum("bhqd,bhkd->bhqk", q, k) / math.sqrt(hd), -1)
    o = jnp.einsum("bhqk,bhkd->bhqd", a, v).transpose(0, 2, 1, 3).reshape(B, T, C)
    x = x + (o @ p["wo"] + p["bo"])
    h2 = ln(x, p["ln2_gamma"], p["ln2_beta"])
    ffn = jnp.maximum(h2 @ p["w1"] + p["b1"], 0.0) @ p["w2"] + p["b2"]
    return x + ffn


if __name__ == "__main__":
    key = jax.random.PRNGKey(0)
    kx, kp = jax.random.split(key)

    B, T, C = 2, 8, N_EMBD
    x = jax.random.normal(kx, (B, T, C), jnp.float32)
    params = init_params(kp, C)

    out = block_forward(x, params, num_heads=N_HEAD)
    out = jax.block_until_ready(out)

    ref = block_ref(x, params, N_HEAD)
    assert out.shape == (B, T, C)
    # Tolerance vs. the f32 reference because MXU operands are bf16.
    err = float(jnp.max(jnp.abs(out - ref)))
    assert err < 5e-2, err

    print("KERNEL_OK")
</pallas_src>

<mosaic_0001>
module attributes {stable_mosaic.version = 11 : i64} {
  func.func @block_kernel(%arg0: i32, %arg1: memref<1x8x128xf32, #tpu.memory_space<vmem>>, %arg2: memref<1x128xf32, #tpu.memory_space<vmem>>, %arg3: memref<1x128xf32, #tpu.memory_space<vmem>>, %arg4: memref<128x384xbf16, #tpu.memory_space<vmem>>, %arg5: memref<1x384xf32, #tpu.memory_space<vmem>>, %arg6: memref<128x128xbf16, #tpu.memory_space<vmem>>, %arg7: memref<1x128xf32, #tpu.memory_space<vmem>>, %arg8: memref<1x128xf32, #tpu.memory_space<vmem>>, %arg9: memref<1x128xf32, #tpu.memory_space<vmem>>, %arg10: memref<128x512xbf16, #tpu.memory_space<vmem>>, %arg11: memref<1x512xf32, #tpu.memory_space<vmem>>, %arg12: memref<512x128xbf16, #tpu.memory_space<vmem>>, %arg13: memref<1x128xf32, #tpu.memory_space<vmem>>, %arg14: memref<1x8x128xf32, #tpu.memory_space<vmem>>) attributes {dimension_semantics = [#tpu.dimension_semantics<parallel>], iteration_bounds = array<i64: 2>, scalar_prefetch = 0 : i64, scratch_operands = 0 : i64, tpu.core_type = #tpu.core_type<tc>, window_params = [{transform_indices = @transform_0, window_bounds = array<i64: 1, 8, 128>}, {pipeline_mode = #tpu.pipeline_mode<synchronous>, transform_indices = @transform_1, window_bounds = array<i64: 1, 128>}, {pipeline_mode = #tpu.pipeline_mode<synchronous>, transform_indices = @transform_2, window_bounds = array<i64: 1, 128>}, {pipeline_mode = #tpu.pipeline_mode<synchronous>, transform_indices = @transform_3, window_bounds = array<i64: 128, 384>}, {pipeline_mode = #tpu.pipeline_mode<synchronous>, transform_indices = @transform_4, window_bounds = array<i64: 1, 384>}, {pipeline_mode = #tpu.pipeline_mode<synchronous>, transform_indices = @transform_5, window_bounds = array<i64: 128, 128>}, {pipeline_mode = #tpu.pipeline_mode<synchronous>, transform_indices = @transform_6, window_bounds = array<i64: 1, 128>}, {pipeline_mode = #tpu.pipeline_mode<synchronous>, transform_indices = @transform_7, window_bounds = array<i64: 1, 128>}, {pipeline_mode = #tpu.pipeline_mode<synchronous>, transform_indices = @transform_8, window_bounds = array<i64: 1, 128>}, {pipeline_mode = #tpu.pipeline_mode<synchronous>, transform_indices = @transform_9, window_bounds = array<i64: 128, 512>}, {pipeline_mode = #tpu.pipeline_mode<synchronous>, transform_indices = @transform_10, window_bounds = array<i64: 1, 512>}, {pipeline_mode = #tpu.pipeline_mode<synchronous>, transform_indices = @transform_11, window_bounds = array<i64: 512, 128>}, {pipeline_mode = #tpu.pipeline_mode<synchronous>, transform_indices = @transform_12, window_bounds = array<i64: 1, 128>}, {transform_indices = @transform_13, window_bounds = array<i64: 1, 8, 128>}]} {
    %c0 = arith.constant 0 : index
    %c0_0 = arith.constant 0 : index
    %c0_1 = arith.constant 0 : index
    %0 = vector.load %arg1[%c0, %c0_0, %c0_1] : memref<1x8x128xf32, #tpu.memory_space<vmem>>, vector<1x8x128xf32>
    %1 = vector.shape_cast %0 : vector<1x8x128xf32> to vector<8x128xf32>
    %c0_2 = arith.constant 0 : index
    %c0_3 = arith.constant 0 : index
    %2 = vector.load %arg2[%c0_2, %c0_3] : memref<1x128xf32, #tpu.memory_space<vmem>>, vector<1x128xf32>
    %c0_4 = arith.constant 0 : index
    %c0_5 = arith.constant 0 : index
    %3 = vector.load %arg3[%c0_4, %c0_5] : memref<1x128xf32, #tpu.memory_space<vmem>>, vector<1x128xf32>
    %cst = arith.constant dense<0.000000e+00> : vector<8xf32>
    %4 = vector.multi_reduction <add>, %1, %cst [1] : vector<8x128xf32> to vector<8xf32>
    %5 = vector.shape_cast %4 : vector<8xf32> to vector<8x1xf32>
    %cst_6 = arith.constant 1.280000e+02 : f32
    %6 = vector.broadcast %cst_6 : f32 to vector<8x1xf32>
    %7 = arith.divf %5, %6 : vector<8x1xf32>
    %8 = vector.broadcast %7 : vector<8x1xf32> to vector<8x128xf32>
    %9 = arith.subf %1, %8 : vector<8x128xf32>
    %10 = arith.mulf %9, %9 : vector<8x128xf32>
    %cst_7 = arith.constant dense<0.000000e+00> : vector<8xf32>
    %11 = vector.multi_reduction <add>, %10, %cst_7 [1] : vector<8x128xf32> to vector<8xf32>
    %12 = vector.shape_cast %11 : vector<8xf32> to vector<8x1xf32>
    %cst_8 = arith.constant 1.280000e+02 : f32
    %13 = vector.broadcast %cst_8 : f32 to vector<8x1xf32>
    %14 = arith.divf %12, %13 : vector<8x1xf32>
    %15 = vector.broadcast %7 : vector<8x1xf32> to vector<8x128xf32>
    %16 = arith.subf %1, %15 : vector<8x128xf32>
    %cst_9 = arith.constant 9.99999974E-6 : f32
    %17 = vector.broadcast %cst_9 : f32 to vector<8x1xf32>
    %18 = arith.addf %14, %17 : vector<8x1xf32>
    %19 = math.rsqrt %18 : vector<8x1xf32>
    %20 = vector.broadcast %19 : vector<8x1xf32> to vector<8x128xf32>
    %21 = arith.mulf %16, %20 : vector<8x128xf32>
    %22 = vector.broadcast %2 : vector<1x128xf32> to vector<8x128xf32>
    %23 = arith.mulf %21, %22 : vector<8x128xf32>
    %24 = vector.broadcast %3 : vector<1x128xf32> to vector<8x128xf32>
    %25 = arith.addf %23, %24 : vector<8x128xf32>
    %26 = arith.truncf %25 : vector<8x128xf32> to vector<8x128xbf16>
    %c0_10 = arith.constant 0 : index
    %c0_11 = arith.constant 0 : index
    %27 = vector.load %arg4[%c0_10, %c0_11] : memref<128x384xbf16, #tpu.memory_space<vmem>>, vector<128x384xbf16>
    %cst_12 = arith.constant dense<0.000000e+00> : vector<8x384xf32>
    %28 = tpu.matmul %26, %27, %cst_12 {dimension_numbers = #tpu.dot_dimension_numbers<[1], [0], [0], [1], [0, 0, 1, 1], [], []>} : vector<8x128xbf16>, vector<128x384xbf16>, vector<8x384xf32> -> vector<8x384xf32>
    %c0_13 = arith.constant 0 : index
    %c0_14 = arith.constant 0 : index
    %29 = vector.load %arg5[%c0_13, %c0_14] : memref<1x384xf32, #tpu.memory_space<vmem>>, vector<1x384xf32>
    %30 = vector.broadcast %29 : vector<1x384xf32> to vector<8x384xf32>
    %31 = arith.addf %28, %30 : vector<8x384xf32>
    %32 = vector.extract_strided_slice %31 {offsets = [0, 0], sizes = [8, 128], strides = [1, 1]} : vector<8x384xf32> to vector<8x128xf32>
    %33 = vector.extract_strided_slice %31 {offsets = [0, 128], sizes = [8, 128], strides = [1, 1]} : vector<8x384xf32> to vector<8x128xf32>
    %34 = vector.extract_strided_slice %31 {offsets = [0, 256], sizes = [8, 128], strides = [1, 1]} : vector<8x384xf32> to vector<8x128xf32>
    %35 = vector.extract_strided_slice %32 {offsets = [0, 0], sizes = [8, 32], strides = [1, 1]} : vector<8x128xf32> to vector<8x32xf32>
    %36 = vector.shape_cast %35 : vector<8x32xf32> to vector<1x8x32xf32>
    %37 = arith.truncf %36 : vector<1x8x32xf32> to vector<1x8x32xbf16>
    %38 = vector.extract_strided_slice %33 {offsets = [0, 0], sizes = [8, 32], strides = [1, 1]} : vector<8x128xf32> to vector<8x32xf32>
    %39 = vector.shape_cast %38 : vector<8x32xf32> to vector<1x8x32xf32>
    %40 = arith.truncf %39 : vector<1x8x32xf32> to vector<1x8x32xbf16>
    %41 = vector.extract_strided_slice %34 {offsets = [0, 0], sizes = [8, 32], strides = [1, 1]} : vector<8x128xf32> to vector<8x32xf32>
    %42 = vector.shape_cast %41 : vector<8x32xf32> to vector<1x8x32xf32>
    %43 = arith.truncf %42 : vector<1x8x32xf32> to vector<1x8x32xbf16>
    "tpu.trace_start"() <{level = 10 : i32, message = "bqd,bkd->bqk"}> : () -> ()
    %cst_15 = arith.constant dense<0.000000e+00> : vector<1x8x8xf32>
    %44 = tpu.matmul %37, %40, %cst_15 {dimension_numbers = #tpu.dot_dimension_numbers<[2], [2], [1], [1], [0, 0, 0, 1, 1, 1], [0], [0]>} : vector<1x8x32xbf16>, vector<1x8x32xbf16>, vector<1x8x8xf32> -> vector<1x8x8xf32>
    "tpu.trace_stop"() : () -> ()
    %cst_16 = arith.constant dense<0xFF800000> : vector<1x8xf32>
    %45 = vector.multi_reduction <maximumf>, %44, %cst_16 [2] : vector<1x8x8xf32> to vector<1x8xf32>
    %46 = vector.shape_cast %45 : vector<1x8xf32> to vector<1x8x1xf32>
    %47 = vector.broadcast %46 : vector<1x8x1xf32> to vector<1x8x8xf32>
    %48 = arith.subf %44, %47 : vector<1x8x8xf32>
    %49 = math.exp %48 : vector<1x8x8xf32>
    %cst_17 = arith.constant dense<0.000000e+00> : vector<1x8xf32>
    %50 = vector.multi_reduction <add>, %49, %cst_17 [2] : vector<1x8x8xf32> to vector<1x8xf32>
    %51 = vector.shape_cast %50 : vector<1x8xf32> to vector<1x8x1xf32>
    %52 = vector.broadcast %51 : vector<1x8x1xf32> to vector<1x8x8xf32>
    %53 = arith.divf %49, %52 : vector<1x8x8xf32>
    %54 = arith.truncf %53 : vector<1x8x8xf32> to vector<1x8x8xbf16>
    "tpu.trace_start"() <{level = 10 : i32, message = "bqk,bkd->bqd"}> : () -> ()
    %cst_18 = arith.constant dense<0.000000e+00> : vector<1x8x32xf32>
    %55 = tpu.matmul %54, %43, %cst_18 {dimension_numbers = #tpu.dot_dimension_numbers<[2], [1], [1], [2], [0, 0, 0, 1, 1, 2], [0], [0]>} : vector<1x8x8xbf16>, vector<1x8x32xbf16>, vector<1x8x32xf32> -> vector<1x8x32xf32>
    "tpu.trace_stop"() : () -> ()
    %56 = vector.shape_cast %55 : vector<1x8x32xf32> to vector<8x32xf32>
    %57 = vector.extract_strided_slice %32 {offsets = [0, 32], sizes = [8, 32], strides = [1, 1]} : vector<8x128xf32> to vector<8x32xf32>
    %58 = vector.shape_cast %57 : vector<8x32xf32> to vector<1x8x32xf32>
    %59 = arith.truncf %58 : vector<1x8x32xf32> to vector<1x8x32xbf16>
    %60 = vector.extract_strided_slice %33 {offsets = [0, 32], sizes = [8, 32], strides = [1, 1]} : vector<8x128xf32> to vector<8x32xf32>
    %61 = vector.shape_cast %60 : vector<8x32xf32> to vector<1x8x32xf32>
    %62 = arith.truncf %61 : vector<1x8x32xf32> to vector<1x8x32xbf16>
    %63 = vector.extract_strided_slice %34 {offsets = [0, 32], sizes = [8, 32], strides = [1, 1]} : vector<8x128xf32> to vector<8x32xf32>
    %64 = vector.shape_cast %63 : vector<8x32xf32> to vector<1x8x32xf32>
    %65 = arith.truncf %64 : vector<1x8x32xf32> to vector<1x8x32xbf16>
    "tpu.trace_start"() <{level = 10 : i32, message = "bqd,bkd->bqk"}> : () -> ()
    %cst_19 = arith.constant dense<0.000000e+00> : vector<1x8x8xf32>
    %66 = tpu.matmul %59, %62, %cst_19 {dimension_numbers = #tpu.dot_dimension_numbers<[2], [2], [1], [1], [0, 0, 0, 1, 1, 1], [0], [0]>} : vector<1x8x32xbf16>, vector<1x8x32xbf16>, vector<1x8x8xf32> -> vector<1x8x8xf32>
    "tpu.trace_stop"() : () -> ()
    %cst_20 = arith.constant dense<0xFF800000> : vector<1x8xf32>
    %67 = vector.multi_reduction <maximumf>, %66, %cst_20 [2] : vector<1x8x8xf32> to vector<1x8xf32>
    %68 = vector.shape_cast %67 : vector<1x8xf32> to vector<1x8x1xf32>
    %69 = vector.broadcast %68 : vector<1x8x1xf32> to vector<1x8x8xf32>
    %70 = arith.subf %66, %69 : vector<1x8x8xf32>
    %71 = math.exp %70 : vector<1x8x8xf32>
    %cst_21 = arith.constant dense<0.000000e+00> : vector<1x8xf32>
    %72 = vector.multi_reduction <add>, %71, %cst_21 [2] : vector<1x8x8xf32> to vector<1x8xf32>
    %73 = vector.shape_cast %72 : vector<1x8xf32> to vector<1x8x1xf32>
    %74 = vector.broadcast %73 : vector<1x8x1xf32> to vector<1x8x8xf32>
    %75 = arith.divf %71, %74 : vector<1x8x8xf32>
    %76 = arith.truncf %75 : vector<1x8x8xf32> to vector<1x8x8xbf16>
    "tpu.trace_start"() <{level = 10 : i32, message = "bqk,bkd->bqd"}> : () -> ()
    %cst_22 = arith.constant dense<0.000000e+00> : vector<1x8x32xf32>
    %77 = tpu.matmul %76, %65, %cst_22 {dimension_numbers = #tpu.dot_dimension_numbers<[2], [1], [1], [2], [0, 0, 0, 1, 1, 2], [0], [0]>} : vector<1x8x8xbf16>, vector<1x8x32xbf16>, vector<1x8x32xf32> -> vector<1x8x32xf32>
    "tpu.trace_stop"() : () -> ()
    %78 = vector.shape_cast %77 : vector<1x8x32xf32> to vector<8x32xf32>
    %79 = vector.extract_strided_slice %32 {offsets = [0, 64], sizes = [8, 32], strides = [1, 1]} : vector<8x128xf32> to vector<8x32xf32>
    %80 = vector.shape_cast %79 : vector<8x32xf32> to vector<1x8x32xf32>
    %81 = arith.truncf %80 : vector<1x8x32xf32> to vector<1x8x32xbf16>
    %82 = vector.extract_strided_slice %33 {offsets = [0, 64], sizes = [8, 32], strides = [1, 1]} : vector<8x128xf32> to vector<8x32xf32>
    %83 = vector.shape_cast %82 : vector<8x32xf32> to vector<1x8x32xf32>
    %84 = arith.truncf %83 : vector<1x8x32xf32> to vector<1x8x32xbf16>
    %85 = vector.extract_strided_slice %34 {offsets = [0, 64], sizes = [8, 32], strides = [1, 1]} : vector<8x128xf32> to vector<8x32xf32>
    %86 = vector.shape_cast %85 : vector<8x32xf32> to vector<1x8x32xf32>
    %87 = arith.truncf %86 : vector<1x8x32xf32> to vector<1x8x32xbf16>
    "tpu.trace_start"() <{level = 10 : i32, message = "bqd,bkd->bqk"}> : () -> ()
    %cst_23 = arith.constant dense<0.000000e+00> : vector<1x8x8xf32>
    %88 = tpu.matmul %81, %84, %cst_23 {dimension_numbers = #tpu.dot_dimension_numbers<[2], [2], [1], [1], [0, 0, 0, 1, 1, 1], [0], [0]>} : vector<1x8x32xbf16>, vector<1x8x32xbf16>, vector<1x8x8xf32> -> vector<1x8x8xf32>
    "tpu.trace_stop"() : () -> ()
    %cst_24 = arith.constant dense<0xFF800000> : vector<1x8xf32>
    %89 = vector.multi_reduction <maximumf>, %88, %cst_24 [2] : vector<1x8x8xf32> to vector<1x8xf32>
    %90 = vector.shape_cast %89 : vector<1x8xf32> to vector<1x8x1xf32>
    %91 = vector.broadcast %90 : vector<1x8x1xf32> to vector<1x8x8xf32>
    %92 = arith.subf %88, %91 : vector<1x8x8xf32>
    %93 = math.exp %92 : vector<1x8x8xf32>
    %cst_25 = arith.constant dense<0.000000e+00> : vector<1x8xf32>
    %94 = vector.multi_reduction <add>, %93, %cst_25 [2] : vector<1x8x8xf32> to vector<1x8xf32>
    %95 = vector.shape_cast %94 : vector<1x8xf32> to vector<1x8x1xf32>
    %96 = vector.broadcast %95 : vector<1x8x1xf32> to vector<1x8x8xf32>
    %97 = arith.divf %93, %96 : vector<1x8x8xf32>
    %98 = arith.truncf %97 : vector<1x8x8xf32> to vector<1x8x8xbf16>
    "tpu.trace_start"() <{level = 10 : i32, message = "bqk,bkd->bqd"}> : () -> ()
    %cst_26 = arith.constant dense<0.000000e+00> : vector<1x8x32xf32>
    %99 = tpu.matmul %98, %87, %cst_26 {dimension_numbers = #tpu.dot_dimension_numbers<[2], [1], [1], [2], [0, 0, 0, 1, 1, 2], [0], [0]>} : vector<1x8x8xbf16>, vector<1x8x32xbf16>, vector<1x8x32xf32> -> vector<1x8x32xf32>
    "tpu.trace_stop"() : () -> ()
    %100 = vector.shape_cast %99 : vector<1x8x32xf32> to vector<8x32xf32>
    %101 = vector.extract_strided_slice %32 {offsets = [0, 96], sizes = [8, 32], strides = [1, 1]} : vector<8x128xf32> to vector<8x32xf32>
    %102 = vector.shape_cast %101 : vector<8x32xf32> to vector<1x8x32xf32>
    %103 = arith.truncf %102 : vector<1x8x32xf32> to vector<1x8x32xbf16>
    %104 = vector.extract_strided_slice %33 {offsets = [0, 96], sizes = [8, 32], strides = [1, 1]} : vector<8x128xf32> to vector<8x32xf32>
    %105 = vector.shape_cast %104 : vector<8x32xf32> to vector<1x8x32xf32>
    %106 = arith.truncf %105 : vector<1x8x32xf32> to vector<1x8x32xbf16>
    %107 = vector.extract_strided_slice %34 {offsets = [0, 96], sizes = [8, 32], strides = [1, 1]} : vector<8x128xf32> to vector<8x32xf32>
    %108 = vector.shape_cast %107 : vector<8x32xf32> to vector<1x8x32xf32>
    %109 = arith.truncf %108 : vector<1x8x32xf32> to vector<1x8x32xbf16>
    "tpu.trace_start"() <{level = 10 : i32, message = "bqd,bkd->bqk"}> : () -> ()
    %cst_27 = arith.constant dense<0.000000e+00> : vector<1x8x8xf32>
    %110 = tpu.matmul %103, %106, %cst_27 {dimension_numbers = #tpu.dot_dimension_numbers<[2], [2], [1], [1], [0, 0, 0, 1, 1, 1], [0], [0]>} : vector<1x8x32xbf16>, vector<1x8x32xbf16>, vector<1x8x8xf32> -> vector<1x8x8xf32>
    "tpu.trace_stop"() : () -> ()
    %cst_28 = arith.constant dense<0xFF800000> : vector<1x8xf32>
    %111 = vector.multi_reduction <maximumf>, %110, %cst_28 [2] : vector<1x8x8xf32> to vector<1x8xf32>
    %112 = vector.shape_cast %111 : vector<1x8xf32> to vector<1x8x1xf32>
    %113 = vector.broadcast %112 : vector<1x8x1xf32> to vector<1x8x8xf32>
    %114 = arith.subf %110, %113 : vector<1x8x8xf32>
    %115 = math.exp %114 : vector<1x8x8xf32>
    %cst_29 = arith.constant dense<0.000000e+00> : vector<1x8xf32>
    %116 = vector.multi_reduction <add>, %115, %cst_29 [2] : vector<1x8x8xf32> to vector<1x8xf32>
    %117 = vector.shape_cast %116 : vector<1x8xf32> to vector<1x8x1xf32>
    %118 = vector.broadcast %117 : vector<1x8x1xf32> to vector<1x8x8xf32>
    %119 = arith.divf %115, %118 : vector<1x8x8xf32>
    %120 = arith.truncf %119 : vector<1x8x8xf32> to vector<1x8x8xbf16>
    "tpu.trace_start"() <{level = 10 : i32, message = "bqk,bkd->bqd"}> : () -> ()
    %cst_30 = arith.constant dense<0.000000e+00> : vector<1x8x32xf32>
    %121 = tpu.matmul %120, %109, %cst_30 {dimension_numbers = #tpu.dot_dimension_numbers<[2], [1], [1], [2], [0, 0, 0, 1, 1, 2], [0], [0]>} : vector<1x8x8xbf16>, vector<1x8x32xbf16>, vector<1x8x32xf32> -> vector<1x8x32xf32>
    "tpu.trace_stop"() : () -> ()
    %122 = vector.shape_cast %121 : vector<1x8x32xf32> to vector<8x32xf32>
    %123 = tpu.concatenate %56, %78, %100, %122 in 1 : vector<8x32xf32>, vector<8x32xf32>, vector<8x32xf32>, vector<8x32xf32> -> vector<8x128xf32>
    %124 = arith.truncf %123 : vector<8x128xf32> to vector<8x128xbf16>
    %c0_31 = arith.constant 0 : index
    %c0_32 = arith.constant 0 : index
    %125 = vector.load %arg6[%c0_31, %c0_32] : memref<128x128xbf16, #tpu.memory_space<vmem>>, vector<128x128xbf16>
    %cst_33 = arith.constant dense<0.000000e+00> : vector<8x128xf32>
    %126 = tpu.matmul %124, %125, %cst_33 {dimension_numbers = #tpu.dot_dimension_numbers<[1], [0], [0], [1], [0, 0, 1, 1], [], []>} : vector<8x128xbf16>, vector<128x128xbf16>, vector<8x128xf32> -> vector<8x128xf32>
    %c0_34 = arith.constant 0 : index
    %c0_35 = arith.constant 0 : index
    %127 = vector.load %arg7[%c0_34, %c0_35] : memref<1x128xf32, #tpu.memory_space<vmem>>, vector<1x128xf32>
    %128 = vector.broadcast %127 : vector<1x128xf32> to vector<8x128xf32>
    %129 = arith.addf %126, %128 : vector<8x128xf32>
    %130 = arith.addf %1, %129 : vector<8x128xf32>
    %c0_36 = arith.constant 0 : index
    %c0_37 = arith.constant 0 : index
    %131 = vector.load %arg8[%c0_36, %c0_37] : memref<1x128xf32, #tpu.memory_space<vmem>>, vector<1x128xf32>
    %c0_38 = arith.constant 0 : index
    %c0_39 = arith.constant 0 : index
    %132 = vector.load %arg9[%c0_38, %c0_39] : memref<1x128xf32, #tpu.memory_space<vmem>>, vector<1x128xf32>
    %cst_40 = arith.constant dense<0.000000e+00> : vector<8xf32>
    %133 = vector.multi_reduction <add>, %130, %cst_40 [1] : vector<8x128xf32> to vector<8xf32>
    %134 = vector.shape_cast %133 : vector<8xf32> to vector<8x1xf32>
    %cst_41 = arith.constant 1.280000e+02 : f32
    %135 = vector.broadcast %cst_41 : f32 to vector<8x1xf32>
    %136 = arith.divf %134, %135 : vector<8x1xf32>
    %137 = vector.broadcast %136 : vector<8x1xf32> to vector<8x128xf32>
    %138 = arith.subf %130, %137 : vector<8x128xf32>
    %139 = arith.mulf %138, %138 : vector<8x128xf32>
    %cst_42 = arith.constant dense<0.000000e+00> : vector<8xf32>
    %140 = vector.multi_reduction <add>, %139, %cst_42 [1] : vector<8x128xf32> to vector<8xf32>
    %141 = vector.shape_cast %140 : vector<8xf32> to vector<8x1xf32>
    %cst_43 = arith.constant 1.280000e+02 : f32
    %142 = vector.broadcast %cst_43 : f32 to vector<8x1xf32>
    %143 = arith.divf %141, %142 : vector<8x1xf32>
    %144 = vector.broadcast %136 : vector<8x1xf32> to vector<8x128xf32>
    %145 = arith.subf %130, %144 : vector<8x128xf32>
    %cst_44 = arith.constant 9.99999974E-6 : f32
    %146 = vector.broadcast %cst_44 : f32 to vector<8x1xf32>
    %147 = arith.addf %143, %146 : vector<8x1xf32>
    %148 = math.rsqrt %147 : vector<8x1xf32>
    %149 = vector.broadcast %148 : vector<8x1xf32> to vector<8x128xf32>
    %150 = arith.mulf %145, %149 : vector<8x128xf32>
    %151 = vector.broadcast %131 : vector<1x128xf32> to vector<8x128xf32>
    %152 = arith.mulf %150, %151 : vector<8x128xf32>
    %153 = vector.broadcast %132 : vector<1x128xf32> to vector<8x128xf32>
    %154 = arith.addf %152, %153 : vector<8x128xf32>
    %155 = arith.truncf %154 : vector<8x128xf32> to vector<8x128xbf16>
    %c0_45 = arith.constant 0 : index
    %c0_46 = arith.constant 0 : index
    %156 = vector.load %arg10[%c0_45, %c0_46] : memref<128x512xbf16, #tpu.memory_space<vmem>>, vector<128x512xbf16>
    %cst_47 = arith.constant dense<0.000000e+00> : vector<8x512xf32>
    %157 = tpu.matmul %155, %156, %cst_47 {dimension_numbers = #tpu.dot_dimension_numbers<[1], [0], [0], [1], [0, 0, 1, 1], [], []>} : vector<8x128xbf16>, vector<128x512xbf16>, vector<8x512xf32> -> vector<8x512xf32>
    %c0_48 = arith.constant 0 : index
    %c0_49 = arith.constant 0 : index
    %158 = vector.load %arg11[%c0_48, %c0_49] : memref<1x512xf32, #tpu.memory_space<vmem>>, vector<1x512xf32>
    %159 = vector.broadcast %158 : vector<1x512xf32> to vector<8x512xf32>
    %160 = arith.addf %157, %159 : vector<8x512xf32>
    %cst_50 = arith.constant 0.000000e+00 : f32
    %161 = vector.broadcast %cst_50 : f32 to vector<8x512xf32>
    %162 = arith.maximumf %160, %161 : vector<8x512xf32>
    %163 = arith.truncf %162 : vector<8x512xf32> to vector<8x512xbf16>
    %c0_51 = arith.constant 0 : index
    %c0_52 = arith.constant 0 : index
    %164 = vector.load %arg12[%c0_51, %c0_52] : memref<512x128xbf16, #tpu.memory_space<vmem>>, vector<512x128xbf16>
    %cst_53 = arith.constant dense<0.000000e+00> : vector<8x128xf32>
    %165 = tpu.matmul %163, %164, %cst_53 {dimension_numbers = #tpu.dot_dimension_numbers<[1], [0], [0], [1], [0, 0, 1, 1], [], []>} : vector<8x512xbf16>, vector<512x128xbf16>, vector<8x128xf32> -> vector<8x128xf32>
    %c0_54 = arith.constant 0 : index
    %c0_55 = arith.constant 0 : index
    %166 = vector.load %arg13[%c0_54, %c0_55] : memref<1x128xf32, #tpu.memory_space<vmem>>, vector<1x128xf32>
    %167 = vector.broadcast %166 : vector<1x128xf32> to vector<8x128xf32>
    %168 = arith.addf %165, %167 : vector<8x128xf32>
    %169 = arith.addf %130, %168 : vector<8x128xf32>
    %170 = vector.shape_cast %169 : vector<8x128xf32> to vector<1x8x128xf32>
    %c0_56 = arith.constant 0 : index
    %c0_57 = arith.constant 0 : index
    %c0_58 = arith.constant 0 : index
    %171 = vector.load %arg14[%c0_56, %c0_57, %c0_58] : memref<1x8x128xf32, #tpu.memory_space<vmem>>, vector<1x8x128xf32>
    tpu.vector_store %arg14[%c0_56, %c0_57, %c0_58], %170 {strides = array<i32>} : memref<1x8x128xf32, #tpu.memory_space<vmem>>, vector<1x8x128xf32>,
    return
  }
  func.func @transform_0(%arg0: i32) -> (i32, i32, i32) {
    %c0_i32 = arith.constant 0 : i32
    %c0_i32_0 = arith.constant 0 : i32
    %c0_i32_1 = arith.constant 0 : i32
    return %arg0, %c0_i32, %c0_i32_0 : i32, i32, i32
  }
  func.func @transform_1(%arg0: i32) -> (i32, i32) {
    %c0_i32 = arith.constant 0 : i32
    %c0_i32_0 = arith.constant 0 : i32
    %c0_i32_1 = arith.constant 0 : i32
    return %c0_i32, %c0_i32_0 : i32, i32
  }
  func.func @transform_2(%arg0: i32) -> (i32, i32) {
    %c0_i32 = arith.constant 0 : i32
    %c0_i32_0 = arith.constant 0 : i32
    %c0_i32_1 = arith.constant 0 : i32
    return %c0_i32, %c0_i32_0 : i32, i32
  }
  func.func @transform_3(%arg0: i32) -> (i32, i32) {
    %c0_i32 = arith.constant 0 : i32
    %c0_i32_0 = arith.constant 0 : i32
    %c0_i32_1 = arith.constant 0 : i32
    return %c0_i32, %c0_i32_0 : i32, i32
  }
  func.func @transform_4(%arg0: i32) -> (i32, i32) {
    %c0_i32 = arith.constant 0 : i32
    %c0_i32_0 = arith.constant 0 : i32
    %c0_i32_1 = arith.constant 0 : i32
    return %c0_i32, %c0_i32_0 : i32, i32
  }
  func.func @transform_5(%arg0: i32) -> (i32, i32) {
    %c0_i32 = arith.constant 0 : i32
    %c0_i32_0 = arith.constant 0 : i32
    %c0_i32_1 = arith.constant 0 : i32
    return %c0_i32, %c0_i32_0 : i32, i32
  }
  func.func @transform_6(%arg0: i32) -> (i32, i32) {
    %c0_i32 = arith.constant 0 : i32
    %c0_i32_0 = arith.constant 0 : i32
    %c0_i32_1 = arith.constant 0 : i32
    return %c0_i32, %c0_i32_0 : i32, i32
  }
  func.func @transform_7(%arg0: i32) -> (i32, i32) {
    %c0_i32 = arith.constant 0 : i32
    %c0_i32_0 = arith.constant 0 : i32
    %c0_i32_1 = arith.constant 0 : i32
    return %c0_i32, %c0_i32_0 : i32, i32
  }
  func.func @transform_8(%arg0: i32) -> (i32, i32) {
    %c0_i32 = arith.constant 0 : i32
    %c0_i32_0 = arith.constant 0 : i32
    %c0_i32_1 = arith.constant 0 : i32
    return %c0_i32, %c0_i32_0 : i32, i32
  }
  func.func @transform_9(%arg0: i32) -> (i32, i32) {
    %c0_i32 = arith.constant 0 : i32
    %c0_i32_0 = arith.constant 0 : i32
    %c0_i32_1 = arith.constant 0 : i32
    return %c0_i32, %c0_i32_0 : i32, i32
  }
  func.func @transform_10(%arg0: i32) -> (i32, i32) {
    %c0_i32 = arith.constant 0 : i32
    %c0_i32_0 = arith.constant 0 : i32
    %c0_i32_1 = arith.constant 0 : i32
    return %c0_i32, %c0_i32_0 : i32, i32
  }
  func.func @transform_11(%arg0: i32) -> (i32, i32) {
    %c0_i32 = arith.constant 0 : i32
    %c0_i32_0 = arith.constant 0 : i32
    %c0_i32_1 = arith.constant 0 : i32
    return %c0_i32, %c0_i32_0 : i32, i32
  }
  func.func @transform_12(%arg0: i32) -> (i32, i32) {
    %c0_i32 = arith.constant 0 : i32
    %c0_i32_0 = arith.constant 0 : i32
    %c0_i32_1 = arith.constant 0 : i32
    return %c0_i32, %c0_i32_0 : i32, i32
  }
  func.func @transform_13(%arg0: i32) -> (i32, i32, i32) {
    %c0_i32 = arith.constant 0 : i32
    %c0_i32_0 = arith.constant 0 : i32
    %c0_i32_1 = arith.constant 0 : i32
    return %arg0, %c0_i32, %c0_i32_0 : i32, i32, i32
  }
}

module attributes {stable_mosaic.version = 11 : i64} {
  func.func @block_kernel(%arg0: i32, %arg1: memref<1x8x128xf32, #tpu.memory_space<vmem>>, %arg2: memref<1x128xf32, #tpu.memory_space<vmem>>, %arg3: memref<1x128xf32, #tpu.memory_space<vmem>>, %arg4: memref<128x384xbf16, #tpu.memory_space<vmem>>, %arg5: memref<1x384xf32, #tpu.memory_space<vmem>>, %arg6: memref<128x128xbf16, #tpu.memory_space<vmem>>, %arg7: memref<1x128xf32, #tpu.memory_space<vmem>>, %arg8: memref<1x128xf32, #tpu.memory_space<vmem>>, %arg9: memref<1x128xf32, #tpu.memory_space<vmem>>, %arg10: memref<128x512xbf16, #tpu.memory_space<vmem>>, %arg11: memref<1x512xf32, #tpu.memory_space<vmem>>, %arg12: memref<512x128xbf16, #tpu.memory_space<vmem>>, %arg13: memref<1x128xf32, #tpu.memory_space<vmem>>, %arg14: memref<1x8x128xf32, #tpu.memory_space<vmem>>) attributes {dimension_semantics = [#tpu.dimension_semantics<parallel>], iteration_bounds = array<i64: 2>, scalar_prefetch = 0 : i64, scratch_operands = 0 : i64, tpu.core_type = #tpu.core_type<tc>, window_params = [{transform_indices = @transform_0, window_bounds = array<i64: 1, 8, 128>}, {pipeline_mode = #tpu.pipeline_mode<synchronous>, transform_indices = @transform_1, window_bounds = array<i64: 1, 128>}, {pipeline_mode = #tpu.pipeline_mode<synchronous>, transform_indices = @transform_2, window_bounds = array<i64: 1, 128>}, {pipeline_mode = #tpu.pipeline_mode<synchronous>, transform_indices = @transform_3, window_bounds = array<i64: 128, 384>}, {pipeline_mode = #tpu.pipeline_mode<synchronous>, transform_indices = @transform_4, window_bounds = array<i64: 1, 384>}, {pipeline_mode = #tpu.pipeline_mode<synchronous>, transform_indices = @transform_5, window_bounds = array<i64: 128, 128>}, {pipeline_mode = #tpu.pipeline_mode<synchronous>, transform_indices = @transform_6, window_bounds = array<i64: 1, 128>}, {pipeline_mode = #tpu.pipeline_mode<synchronous>, transform_indices = @transform_7, window_bounds = array<i64: 1, 128>}, {pipeline_mode = #tpu.pipeline_mode<synchronous>, transform_indices = @transform_8, window_bounds = array<i64: 1, 128>}, {pipeline_mode = #tpu.pipeline_mode<synchronous>, transform_indices = @transform_9, window_bounds = array<i64: 128, 512>}, {pipeline_mode = #tpu.pipeline_mode<synchronous>, transform_indices = @transform_10, window_bounds = array<i64: 1, 512>}, {pipeline_mode = #tpu.pipeline_mode<synchronous>, transform_indices = @transform_11, window_bounds = array<i64: 512, 128>}, {pipeline_mode = #tpu.pipeline_mode<synchronous>, transform_indices = @transform_12, window_bounds = array<i64: 1, 128>}, {transform_indices = @transform_13, window_bounds = array<i64: 1, 8, 128>}]} {
    %c0 = arith.constant 0 : index
    %c0_0 = arith.constant 0 : index
    %c0_1 = arith.constant 0 : index
    %0 = vector.load %arg1[%c0, %c0_0, %c0_1] : memref<1x8x128xf32, #tpu.memory_space<vmem>>, vector<1x8x128xf32>
    %1 = vector.shape_cast %0 : vector<1x8x128xf32> to vector<8x128xf32>
    %c0_2 = arith.constant 0 : index
    %c0_3 = arith.constant 0 : index
    %2 = vector.load %arg2[%c0_2, %c0_3] : memref<1x128xf32, #tpu.memory_space<vmem>>, vector<1x128xf32>
    %c0_4 = arith.constant 0 : index
    %c0_5 = arith.constant 0 : index
    %3 = vector.load %arg3[%c0_4, %c0_5] : memref<1x128xf32, #tpu.memory_space<vmem>>, vector<1x128xf32>
    %cst = arith.constant dense<0.000000e+00> : vector<8xf32>
    %4 = vector.multi_reduction <add>, %1, %cst [1] : vector<8x128xf32> to vector<8xf32>
    %5 = vector.shape_cast %4 : vector<8xf32> to vector<8x1xf32>
    %cst_6 = arith.constant 1.280000e+02 : f32
    %6 = vector.broadcast %cst_6 : f32 to vector<8x1xf32>
    %7 = arith.divf %5, %6 : vector<8x1xf32>
    %8 = vector.broadcast %7 : vector<8x1xf32> to vector<8x128xf32>
    %9 = arith.subf %1, %8 : vector<8x128xf32>
    %10 = arith.mulf %9, %9 : vector<8x128xf32>
    %cst_7 = arith.constant dense<0.000000e+00> : vector<8xf32>
    %11 = vector.multi_reduction <add>, %10, %cst_7 [1] : vector<8x128xf32> to vector<8xf32>
    %12 = vector.shape_cast %11 : vector<8xf32> to vector<8x1xf32>
    %cst_8 = arith.constant 1.280000e+02 : f32
    %13 = vector.broadcast %cst_8 : f32 to vector<8x1xf32>
    %14 = arith.divf %12, %13 : vector<8x1xf32>
    %15 = vector.broadcast %7 : vector<8x1xf32> to vector<8x128xf32>
    %16 = arith.subf %1, %15 : vector<8x128xf32>
    %cst_9 = arith.constant 9.99999974E-6 : f32
    %17 = vector.broadcast %cst_9 : f32 to vector<8x1xf32>
    %18 = arith.addf %14, %17 : vector<8x1xf32>
    %19 = math.rsqrt %18 : vector<8x1xf32>
    %20 = vector.broadcast %19 : vector<8x1xf32> to vector<8x128xf32>
    %21 = arith.mulf %16, %20 : vector<8x128xf32>
    %22 = vector.broadcast %2 : vector<1x128xf32> to vector<8x128xf32>
    %23 = arith.mulf %21, %22 : vector<8x128xf32>
    %24 = vector.broadcast %3 : vector<1x128xf32> to vector<8x128xf32>
    %25 = arith.addf %23, %24 : vector<8x128xf32>
    %26 = arith.truncf %25 : vector<8x128xf32> to vector<8x128xbf16>
    %c0_10 = arith.constant 0 : index
    %c0_11 = arith.constant 0 : index
    %27 = vector.load %arg4[%c0_10, %c0_11] : memref<128x384xbf16, #tpu.memory_space<vmem>>, vector<128x384xbf16>
    %cst_12 = arith.constant dense<0.000000e+00> : vector<8x384xf32>
    %28 = tpu.matmul %26, %27, %cst_12 {dimension_numbers = #tpu.dot_dimension_numbers<[1], [0], [0], [1], [0, 0, 1, 1], [], []>} : vector<8x128xbf16>, vector<128x384xbf16>, vector<8x384xf32> -> vector<8x384xf32>
    %c0_13 = arith.constant 0 : index
    %c0_14 = arith.constant 0 : index
    %29 = vector.load %arg5[%c0_13, %c0_14] : memref<1x384xf32, #tpu.memory_space<vmem>>, vector<1x384xf32>
    %30 = vector.broadcast %29 : vector<1x384xf32> to vector<8x384xf32>
    %31 = arith.addf %28, %30 : vector<8x384xf32>
    %32 = vector.extract_strided_slice %31 {offsets = [0, 0], sizes = [8, 128], strides = [1, 1]} : vector<8x384xf32> to vector<8x128xf32>
    %33 = vector.extract_strided_slice %31 {offsets = [0, 128], sizes = [8, 128], strides = [1, 1]} : vector<8x384xf32> to vector<8x128xf32>
    %34 = vector.extract_strided_slice %31 {offsets = [0, 256], sizes = [8, 128], strides = [1, 1]} : vector<8x384xf32> to vector<8x128xf32>
    %35 = vector.extract_strided_slice %32 {offsets = [0, 0], sizes = [8, 32], strides = [1, 1]} : vector<8x128xf32> to vector<8x32xf32>
    %36 = vector.shape_cast %35 : vector<8x32xf32> to vector<1x8x32xf32>
    %37 = arith.truncf %36 : vector<1x8x32xf32> to vector<1x8x32xbf16>
    %38 = vector.extract_strided_slice %33 {offsets = [0, 0], sizes = [8, 32], strides = [1, 1]} : vector<8x128xf32> to vector<8x32xf32>
    %39 = vector.shape_cast %38 : vector<8x32xf32> to vector<1x8x32xf32>
    %40 = arith.truncf %39 : vector<1x8x32xf32> to vector<1x8x32xbf16>
    %41 = vector.extract_strided_slice %34 {offsets = [0, 0], sizes = [8, 32], strides = [1, 1]} : vector<8x128xf32> to vector<8x32xf32>
    %42 = vector.shape_cast %41 : vector<8x32xf32> to vector<1x8x32xf32>
    %43 = arith.truncf %42 : vector<1x8x32xf32> to vector<1x8x32xbf16>
    "tpu.trace_start"() <{level = 10 : i32, message = "bqd,bkd->bqk"}> : () -> ()
    %cst_15 = arith.constant dense<0.000000e+00> : vector<1x8x8xf32>
    %44 = tpu.matmul %37, %40, %cst_15 {dimension_numbers = #tpu.dot_dimension_numbers<[2], [2], [1], [1], [0, 0, 0, 1, 1, 1], [0], [0]>} : vector<1x8x32xbf16>, vector<1x8x32xbf16>, vector<1x8x8xf32> -> vector<1x8x8xf32>
    "tpu.trace_stop"() : () -> ()
    %cst_16 = arith.constant dense<0xFF800000> : vector<1x8xf32>
    %45 = vector.multi_reduction <maximumf>, %44, %cst_16 [2] : vector<1x8x8xf32> to vector<1x8xf32>
    %46 = vector.shape_cast %45 : vector<1x8xf32> to vector<1x8x1xf32>
    %47 = vector.broadcast %46 : vector<1x8x1xf32> to vector<1x8x8xf32>
    %48 = arith.subf %44, %47 : vector<1x8x8xf32>
    %49 = math.exp %48 : vector<1x8x8xf32>
    %cst_17 = arith.constant dense<0.000000e+00> : vector<1x8xf32>
    %50 = vector.multi_reduction <add>, %49, %cst_17 [2] : vector<1x8x8xf32> to vector<1x8xf32>
    %51 = vector.shape_cast %50 : vector<1x8xf32> to vector<1x8x1xf32>
    %52 = vector.broadcast %51 : vector<1x8x1xf32> to vector<1x8x8xf32>
    %53 = arith.divf %49, %52 : vector<1x8x8xf32>
    %54 = arith.truncf %53 : vector<1x8x8xf32> to vector<1x8x8xbf16>
    "tpu.trace_start"() <{level = 10 : i32, message = "bqk,bkd->bqd"}> : () -> ()
    %cst_18 = arith.constant dense<0.000000e+00> : vector<1x8x32xf32>
    %55 = tpu.matmul %54, %43, %cst_18 {dimension_numbers = #tpu.dot_dimension_numbers<[2], [1], [1], [2], [0, 0, 0, 1, 1, 2], [0], [0]>} : vector<1x8x8xbf16>, vector<1x8x32xbf16>, vector<1x8x32xf32> -> vector<1x8x32xf32>
    "tpu.trace_stop"() : () -> ()
    %56 = vector.shape_cast %55 : vector<1x8x32xf32> to vector<8x32xf32>
    %57 = vector.extract_strided_slice %32 {offsets = [0, 32], sizes = [8, 32], strides = [1, 1]} : vector<8x128xf32> to vector<8x32xf32>
    %58 = vector.shape_cast %57 : vector<8x32xf32> to vector<1x8x32xf32>
    %59 = arith.truncf %58 : vector<1x8x32xf32> to vector<1x8x32xbf16>
    %60 = vector.extract_strided_slice %33 {offsets = [0, 32], sizes = [8, 32], strides = [1, 1]} : vector<8x128xf32> to vector<8x32xf32>
    %61 = vector.shape_cast %60 : vector<8x32xf32> to vector<1x8x32xf32>
    %62 = arith.truncf %61 : vector<1x8x32xf32> to vector<1x8x32xbf16>
    %63 = vector.extract_strided_slice %34 {offsets = [0, 32], sizes = [8, 32], strides = [1, 1]} : vector<8x128xf32> to vector<8x32xf32>
    %64 = vector.shape_cast %63 : vector<8x32xf32> to vector<1x8x32xf32>
    %65 = arith.truncf %64 : vector<1x8x32xf32> to vector<1x8x32xbf16>
    "tpu.trace_start"() <{level = 10 : i32, message = "bqd,bkd->bqk"}> : () -> ()
    %cst_19 = arith.constant dense<0.000000e+00> : vector<1x8x8xf32>
    %66 = tpu.matmul %59, %62, %cst_19 {dimension_numbers = #tpu.dot_dimension_numbers<[2], [2], [1], [1], [0, 0, 0, 1, 1, 1], [0], [0]>} : vector<1x8x32xbf16>, vector<1x8x32xbf16>, vector<1x8x8xf32> -> vector<1x8x8xf32>
    "tpu.trace_stop"() : () -> ()
    %cst_20 = arith.constant dense<0xFF800000> : vector<1x8xf32>
    %67 = vector.multi_reduction <maximumf>, %66, %cst_20 [2] : vector<1x8x8xf32> to vector<1x8xf32>
    %68 = vector.shape_cast %67 : vector<1x8xf32> to vector<1x8x1xf32>
    %69 = vector.broadcast %68 : vector<1x8x1xf32> to vector<1x8x8xf32>
    %70 = arith.subf %66, %69 : vector<1x8x8xf32>
    %71 = math.exp %70 : vector<1x8x8xf32>
    %cst_21 = arith.constant dense<0.000000e+00> : vector<1x8xf32>
    %72 = vector.multi_reduction <add>, %71, %cst_21 [2] : vector<1x8x8xf32> to vector<1x8xf32>
    %73 = vector.shape_cast %72 : vector<1x8xf32> to vector<1x8x1xf32>
    %74 = vector.broadcast %73 : vector<1x8x1xf32> to vector<1x8x8xf32>
    %75 = arith.divf %71, %74 : vector<1x8x8xf32>
    %76 = arith.truncf %75 : vector<1x8x8xf32> to vector<1x8x8xbf16>
    "tpu.trace_start"() <{level = 10 : i32, message = "bqk,bkd->bqd"}> : () -> ()
    %cst_22 = arith.constant dense<0.000000e+00> : vector<1x8x32xf32>
    %77 = tpu.matmul %76, %65, %cst_22 {dimension_numbers = #tpu.dot_dimension_numbers<[2], [1], [1], [2], [0, 0, 0, 1, 1, 2], [0], [0]>} : vector<1x8x8xbf16>, vector<1x8x32xbf16>, vector<1x8x32xf32> -> vector<1x8x32xf32>
    "tpu.trace_stop"() : () -> ()
    %78 = vector.shape_cast %77 : vector<1x8x32xf32> to vector<8x32xf32>
    %79 = vector.extract_strided_slice %32 {offsets = [0, 64], sizes = [8, 32], strides = [1, 1]} : vector<8x128xf32> to vector<8x32xf32>
    %80 = vector.shape_cast %79 : vector<8x32xf32> to vector<1x8x32xf32>
    %81 = arith.truncf %80 : vector<1x8x32xf32> to vector<1x8x32xbf16>
    %82 = vector.extract_strided_slice %33 {offsets = [0, 64], sizes = [8, 32], strides = [1, 1]} : vector<8x128xf32> to vector<8x32xf32>
    %83 = vector.shape_cast %82 : vector<8x32xf32> to vector<1x8x32xf32>
    %84 = arith.truncf %83 : vector<1x8x32xf32> to vector<1x8x32xbf16>
    %85 = vector.extract_strided_slice %34 {offsets = [0, 64], sizes = [8, 32], strides = [1, 1]} : vector<8x128xf32> to vector<8x32xf32>
    %86 = vector.shape_cast %85 : vector<8x32xf32> to vector<1x8x32xf32>
    %87 = arith.truncf %86 : vector<1x8x32xf32> to vector<1x8x32xbf16>
    "tpu.trace_start"() <{level = 10 : i32, message = "bqd,bkd->bqk"}> : () -> ()
    %cst_23 = arith.constant dense<0.000000e+00> : vector<1x8x8xf32>
    %88 = tpu.matmul %81, %84, %cst_23 {dimension_numbers = #tpu.dot_dimension_numbers<[2], [2], [1], [1], [0, 0, 0, 1, 1, 1], [0], [0]>} : vector<1x8x32xbf16>, vector<1x8x32xbf16>, vector<1x8x8xf32> -> vector<1x8x8xf32>
    "tpu.trace_stop"() : () -> ()
    %cst_24 = arith.constant dense<0xFF800000> : vector<1x8xf32>
    %89 = vector.multi_reduction <maximumf>, %88, %cst_24 [2] : vector<1x8x8xf32> to vector<1x8xf32>
    %90 = vector.shape_cast %89 : vector<1x8xf32> to vector<1x8x1xf32>
    %91 = vector.broadcast %90 : vector<1x8x1xf32> to vector<1x8x8xf32>
    %92 = arith.subf %88, %91 : vector<1x8x8xf32>
    %93 = math.exp %92 : vector<1x8x8xf32>
    %cst_25 = arith.constant dense<0.000000e+00> : vector<1x8xf32>
    %94 = vector.multi_reduction <add>, %93, %cst_25 [2] : vector<1x8x8xf32> to vector<1x8xf32>
    %95 = vector.shape_cast %94 : vector<1x8xf32> to vector<1x8x1xf32>
    %96 = vector.broadcast %95 : vector<1x8x1xf32> to vector<1x8x8xf32>
    %97 = arith.divf %93, %96 : vector<1x8x8xf32>
    %98 = arith.truncf %97 : vector<1x8x8xf32> to vector<1x8x8xbf16>
    "tpu.trace_start"() <{level = 10 : i32, message = "bqk,bkd->bqd"}> : () -> ()
    %cst_26 = arith.constant dense<0.000000e+00> : vector<1x8x32xf32>
    %99 = tpu.matmul %98, %87, %cst_26 {dimension_numbers = #tpu.dot_dimension_numbers<[2], [1], [1], [2], [0, 0, 0, 1, 1, 2], [0], [0]>} : vector<1x8x8xbf16>, vector<1x8x32xbf16>, vector<1x8x32xf32> -> vector<1x8x32xf32>
    "tpu.trace_stop"() : () -> ()
    %100 = vector.shape_cast %99 : vector<1x8x32xf32> to vector<8x32xf32>
    %101 = vector.extract_strided_slice %32 {offsets = [0, 96], sizes = [8, 32], strides = [1, 1]} : vector<8x128xf32> to vector<8x32xf32>
    %102 = vector.shape_cast %101 : vector<8x32xf32> to vector<1x8x32xf32>
    %103 = arith.truncf %102 : vector<1x8x32xf32> to vector<1x8x32xbf16>
    %104 = vector.extract_strided_slice %33 {offsets = [0, 96], sizes = [8, 32], strides = [1, 1]} : vector<8x128xf32> to vector<8x32xf32>
    %105 = vector.shape_cast %104 : vector<8x32xf32> to vector<1x8x32xf32>
    %106 = arith.truncf %105 : vector<1x8x32xf32> to vector<1x8x32xbf16>
    %107 = vector.extract_strided_slice %34 {offsets = [0, 96], sizes = [8, 32], strides = [1, 1]} : vector<8x128xf32> to vector<8x32xf32>
    %108 = vector.shape_cast %107 : vector<8x32xf32> to vector<1x8x32xf32>
    %109 = arith.truncf %108 : vector<1x8x32xf32> to vector<1x8x32xbf16>
    "tpu.trace_start"() <{level = 10 : i32, message = "bqd,bkd->bqk"}> : () -> ()
    %cst_27 = arith.constant dense<0.000000e+00> : vector<1x8x8xf32>
    %110 = tpu.matmul %103, %106, %cst_27 {dimension_numbers = #tpu.dot_dimension_numbers<[2], [2], [1], [1], [0, 0, 0, 1, 1, 1], [0], [0]>} : vector<1x8x32xbf16>, vector<1x8x32xbf16>, vector<1x8x8xf32> -> vector<1x8x8xf32>
    "tpu.trace_stop"() : () -> ()
    %cst_28 = arith.constant dense<0xFF800000> : vector<1x8xf32>
    %111 = vector.multi_reduction <maximumf>, %110, %cst_28 [2] : vector<1x8x8xf32> to vector<1x8xf32>
    %112 = vector.shape_cast %111 : vector<1x8xf32> to vector<1x8x1xf32>
    %113 = vector.broadcast %112 : vector<1x8x1xf32> to vector<1x8x8xf32>
    %114 = arith.subf %110, %113 : vector<1x8x8xf32>
    %115 = math.exp %114 : vector<1x8x8xf32>
    %cst_29 = arith.constant dense<0.000000e+00> : vector<1x8xf32>
    %116 = vector.multi_reduction <add>, %115, %cst_29 [2] : vector<1x8x8xf32> to vector<1x8xf32>
    %117 = vector.shape_cast %116 : vector<1x8xf32> to vector<1x8x1xf32>
    %118 = vector.broadcast %117 : vector<1x8x1xf32> to vector<1x8x8xf32>
    %119 = arith.divf %115, %118 : vector<1x8x8xf32>
    %120 = arith.truncf %119 : vector<1x8x8xf32> to vector<1x8x8xbf16>
    "tpu.trace_start"() <{level = 10 : i32, message = "bqk,bkd->bqd"}> : () -> ()
    %cst_30 = arith.constant dense<0.000000e+00> : vector<1x8x32xf32>
    %121 = tpu.matmul %120, %109, %cst_30 {dimension_numbers = #tpu.dot_dimension_numbers<[2], [1], [1], [2], [0, 0, 0, 1, 1, 2], [0], [0]>} : vector<1x8x8xbf16>, vector<1x8x32xbf16>, vector<1x8x32xf32> -> vector<1x8x32xf32>
    "tpu.trace_stop"() : () -> ()
    %122 = vector.shape_cast %121 : vector<1x8x32xf32> to vector<8x32xf32>
    %123 = tpu.concatenate %56, %78, %100, %122 in 1 : vector<8x32xf32>, vector<8x32xf32>, vector<8x32xf32>, vector<8x32xf32> -> vector<8x128xf32>
    %124 = arith.truncf %123 : vector<8x128xf32> to vector<8x128xbf16>
    %c0_31 = arith.constant 0 : index
    %c0_32 = arith.constant 0 : index
    %125 = vector.load %arg6[%c0_31, %c0_32] : memref<128x128xbf16, #tpu.memory_space<vmem>>, vector<128x128xbf16>
    %cst_33 = arith.constant dense<0.000000e+00> : vector<8x128xf32>
    %126 = tpu.matmul %124, %125, %cst_33 {dimension_numbers = #tpu.dot_dimension_numbers<[1], [0], [0], [1], [0, 0, 1, 1], [], []>} : vector<8x128xbf16>, vector<128x128xbf16>, vector<8x128xf32> -> vector<8x128xf32>
    %c0_34 = arith.constant 0 : index
    %c0_35 = arith.constant 0 : index
    %127 = vector.load %arg7[%c0_34, %c0_35] : memref<1x128xf32, #tpu.memory_space<vmem>>, vector<1x128xf32>
    %128 = vector.broadcast %127 : vector<1x128xf32> to vector<8x128xf32>
    %129 = arith.addf %126, %128 : vector<8x128xf32>
    %130 = arith.addf %1, %129 : vector<8x128xf32>
    %c0_36 = arith.constant 0 : index
    %c0_37 = arith.constant 0 : index
    %131 = vector.load %arg8[%c0_36, %c0_37] : memref<1x128xf32, #tpu.memory_space<vmem>>, vector<1x128xf32>
    %c0_38 = arith.constant 0 : index
    %c0_39 = arith.constant 0 : index
    %132 = vector.load %arg9[%c0_38, %c0_39] : memref<1x128xf32, #tpu.memory_space<vmem>>, vector<1x128xf32>
    %cst_40 = arith.constant dense<0.000000e+00> : vector<8xf32>
    %133 = vector.multi_reduction <add>, %130, %cst_40 [1] : vector<8x128xf32> to vector<8xf32>
    %134 = vector.shape_cast %133 : vector<8xf32> to vector<8x1xf32>
    %cst_41 = arith.constant 1.280000e+02 : f32
    %135 = vector.broadcast %cst_41 : f32 to vector<8x1xf32>
    %136 = arith.divf %134, %135 : vector<8x1xf32>
    %137 = vector.broadcast %136 : vector<8x1xf32> to vector<8x128xf32>
    %138 = arith.subf %130, %137 : vector<8x128xf32>
    %139 = arith.mulf %138, %138 : vector<8x128xf32>
    %cst_42 = arith.constant dense<0.000000e+00> : vector<8xf32>
    %140 = vector.multi_reduction <add>, %139, %cst_42 [1] : vector<8x128xf32> to vector<8xf32>
    %141 = vector.shape_cast %140 : vector<8xf32> to vector<8x1xf32>
    %cst_43 = arith.constant 1.280000e+02 : f32
    %142 = vector.broadcast %cst_43 : f32 to vector<8x1xf32>
    %143 = arith.divf %141, %142 : vector<8x1xf32>
    %144 = vector.broadcast %136 : vector<8x1xf32> to vector<8x128xf32>
    %145 = arith.subf %130, %144 : vector<8x128xf32>
    %cst_44 = arith.constant 9.99999974E-6 : f32
    %146 = vector.broadcast %cst_44 : f32 to vector<8x1xf32>
    %147 = arith.addf %143, %146 : vector<8x1xf32>
    %148 = math.rsqrt %147 : vector<8x1xf32>
    %149 = vector.broadcast %148 : vector<8x1xf32> to vector<8x128xf32>
    %150 = arith.mulf %145, %149 : vector<8x128xf32>
    %151 = vector.broadcast %131 : vector<1x128xf32> to vector<8x128xf32>
    %152 = arith.mulf %150, %151 : vector<8x128xf32>
    %153 = vector.broadcast %132 : vector<1x128xf32> to vector<8x128xf32>
    %154 = arith.addf %152, %153 : vector<8x128xf32>
    %155 = arith.truncf %154 : vector<8x128xf32> to vector<8x128xbf16>
    %c0_45 = arith.constant 0 : index
    %c0_46 = arith.constant 0 : index
    %156 = vector.load %arg10[%c0_45, %c0_46] : memref<128x512xbf16, #tpu.memory_space<vmem>>, vector<128x512xbf16>
    %cst_47 = arith.constant dense<0.000000e+00> : vector<8x512xf32>
    %157 = tpu.matmul %155, %156, %cst_47 {dimension_numbers = #tpu.dot_dimension_numbers<[1], [0], [0], [1], [0, 0, 1, 1], [], []>} : vector<8x128xbf16>, vector<128x512xbf16>, vector<8x512xf32> -> vector<8x512xf32>
    %c0_48 = arith.constant 0 : index
    %c0_49 = arith.constant 0 : index
    %158 = vector.load %arg11[%c0_48, %c0_49] : memref<1x512xf32, #tpu.memory_space<vmem>>, vector<1x512xf32>
    %159 = vector.broadcast %158 : vector<1x512xf32> to vector<8x512xf32>
    %160 = arith.addf %157, %159 : vector<8x512xf32>
    %cst_50 = arith.constant 0.000000e+00 : f32
    %161 = vector.broadcast %cst_50 : f32 to vector<8x512xf32>
    %162 = arith.maximumf %160, %161 : vector<8x512xf32>
    %163 = arith.truncf %162 : vector<8x512xf32> to vector<8x512xbf16>
    %c0_51 = arith.constant 0 : index
    %c0_52 = arith.constant 0 : index
    %164 = vector.load %arg12[%c0_51, %c0_52] : memref<512x128xbf16, #tpu.memory_space<vmem>>, vector<512x128xbf16>
    %cst_53 = arith.constant dense<0.000000e+00> : vector<8x128xf32>
    %165 = tpu.matmul %163, %164, %cst_53 {dimension_numbers = #tpu.dot_dimension_numbers<[1], [0], [0], [1], [0, 0, 1, 1], [], []>} : vector<8x512xbf16>, vector<512x128xbf16>, vector<8x128xf32> -> vector<8x128xf32>
    %c0_54 = arith.constant 0 : index
    %c0_55 = arith.constant 0 : index
    %166 = vector.load %arg13[%c0_54, %c0_55] : memref<1x128xf32, #tpu.memory_space<vmem>>, vector<1x128xf32>
    %167 = vector.broadcast %166 : vector<1x128xf32> to vector<8x128xf32>
    %168 = arith.addf %165, %167 : vector<8x128xf32>
    %169 = arith.addf %130, %168 : vector<8x128xf32>
    %170 = vector.shape_cast %169 : vector<8x128xf32> to vector<1x8x128xf32>
    %c0_56 = arith.constant 0 : index
    %c0_57 = arith.constant 0 : index
    %c0_58 = arith.constant 0 : index
    %171 = vector.load %arg14[%c0_56, %c0_57, %c0_58] : memref<1x8x128xf32, #tpu.memory_space<vmem>>, vector<1x8x128xf32>
    tpu.vector_store %arg14[%c0_56, %c0_57, %c0_58], %170 {strides = array<i32>} : memref<1x8x128xf32, #tpu.memory_space<vmem>>, vector<1x8x128xf32>,
    return
  }
  func.func @transform_0(%arg0: i32) -> (i32, i32, i32) {
    %c0_i32 = arith.constant 0 : i32
    %c0_i32_0 = arith.constant 0 : i32
    %c0_i32_1 = arith.constant 0 : i32
    return %arg0, %c0_i32, %c0_i32_0 : i32, i32, i32
  }
  func.func @transform_1(%arg0: i32) -> (i32, i32) {
    %c0_i32 = arith.constant 0 : i32
    %c0_i32_0 = arith.constant 0 : i32
    %c0_i32_1 = arith.constant 0 : i32
    return %c0_i32, %c0_i32_0 : i32, i32
  }
  func.func @transform_2(%arg0: i32) -> (i32, i32) {
    %c0_i32 = arith.constant 0 : i32
    %c0_i32_0 = arith.constant 0 : i32
    %c0_i32_1 = arith.constant 0 : i32
    return %c0_i32, %c0_i32_0 : i32, i32
  }
  func.func @transform_3(%arg0: i32) -> (i32, i32) {
    %c0_i32 = arith.constant 0 : i32
    %c0_i32_0 = arith.constant 0 : i32
    %c0_i32_1 = arith.constant 0 : i32
    return %c0_i32, %c0_i32_0 : i32, i32
  }
  func.func @transform_4(%arg0: i32) -> (i32, i32) {
    %c0_i32 = arith.constant 0 : i32
    %c0_i32_0 = arith.constant 0 : i32
    %c0_i32_1 = arith.constant 0 : i32
    return %c0_i32, %c0_i32_0 : i32, i32
  }
  func.func @transform_5(%arg0: i32) -> (i32, i32) {
    %c0_i32 = arith.constant 0 : i32
    %c0_i32_0 = arith.constant 0 : i32
    %c0_i32_1 = arith.constant 0 : i32
    return %c0_i32, %c0_i32_0 : i32, i32
  }
  func.func @transform_6(%arg0: i32) -> (i32, i32) {
    %c0_i32 = arith.constant 0 : i32
    %c0_i32_0 = arith.constant 0 : i32
    %c0_i32_1 = arith.constant 0 : i32
    return %c0_i32, %c0_i32_0 : i32, i32
  }
  func.func @transform_7(%arg0: i32) -> (i32, i32) {
    %c0_i32 = arith.constant 0 : i32
    %c0_i32_0 = arith.constant 0 : i32
    %c0_i32_1 = arith.constant 0 : i32
    return %c0_i32, %c0_i32_0 : i32, i32
  }
  func.func @transform_8(%arg0: i32) -> (i32, i32) {
    %c0_i32 = arith.constant 0 : i32
    %c0_i32_0 = arith.constant 0 : i32
    %c0_i32_1 = arith.constant 0 : i32
    return %c0_i32, %c0_i32_0 : i32, i32
  }
  func.func @transform_9(%arg0: i32) -> (i32, i32) {
    %c0_i32 = arith.constant 0 : i32
    %c0_i32_0 = arith.constant 0 : i32
    %c0_i32_1 = arith.constant 0 : i32
    return %c0_i32, %c0_i32_0 : i32, i32
  }
  func.func @transform_10(%arg0: i32) -> (i32, i32) {
    %c0_i32 = arith.constant 0 : i32
    %c0_i32_0 = arith.constant 0 : i32
    %c0_i32_1 = arith.constant 0 : i32
    return %c0_i32, %c0_i32_0 : i32, i32
  }
  func.func @transform_11(%arg0: i32) -> (i32, i32) {
    %c0_i32 = arith.constant 0 : i32
    %c0_i32_0 = arith.constant 0 : i32
    %c0_i32_1 = arith.constant 0 : i32
    return %c0_i32, %c0_i32_0 : i32, i32
  }
  func.func @transform_12(%arg0: i32) -> (i32, i32) {
    %c0_i32 = arith.constant 0 : i32
    %c0_i32_0 = arith.constant 0 : i32
    %c0_i32_1 = arith.constant 0 : i32
    return %c0_i32, %c0_i32_0 : i32, i32
  }
  func.func @transform_13(%arg0: i32) -> (i32, i32, i32) {
    %c0_i32 = arith.constant 0 : i32
    %c0_i32_0 = arith.constant 0 : i32
    %c0_i32_1 = arith.constant 0 : i32
    return %arg0, %c0_i32, %c0_i32_0 : i32, i32, i32
  }
}

</mosaic_0001>

<llo_original>
// kernel: tpu_custom_call.1
$region0: #{tpu_custom_call.1}
  #allocation0 [shape = 'u32[]', space=smem, size = 0x4, offset = 0x4, fixed_abs, tag = 'smem constant byte address 0x4 - core index']
  #allocation1 [shape = 'u32[72,128]{1,0:T(1,128)}', space=vmem, size = 0x9000, scoped, tag = 'internal scratch']
  %s0 = inlined_call_operand.hbm [shape: f32[2,8,128], index: 0, kind: input, shape index: {}]
  %s1 = inlined_call_operand.hbm [shape: f32[1,128], index: 1, kind: input, shape index: {}]
  %s2 = inlined_call_operand.hbm [shape: f32[1,128], index: 2, kind: input, shape index: {}]
  %s3 = inlined_call_operand.hbm [shape: bf16[128,384], index: 3, kind: input, shape index: {}]
  %s4 = inlined_call_operand.vmem [shape: f32[1,384], index: 4, kind: input, shape index: {}]
  %s5 = inlined_call_operand.hbm [shape: bf16[128,128], index: 5, kind: input, shape index: {}]
  %s6 = inlined_call_operand.hbm [shape: f32[1,128], index: 6, kind: input, shape index: {}]
  %s7 = inlined_call_operand.hbm [shape: f32[1,128], index: 7, kind: input, shape index: {}]
  %s8 = inlined_call_operand.hbm [shape: f32[1,128], index: 8, kind: input, shape index: {}]
  %s9 = inlined_call_operand.hbm [shape: bf16[128,512], index: 9, kind: input, shape index: {}]
  %s10 = inlined_call_operand.vmem [shape: f32[1,512], index: 10, kind: input, shape index: {}]
  %s11 = inlined_call_operand.hbm [shape: bf16[512,128], index: 11, kind: input, shape index: {}]
  %s12 = inlined_call_operand.vmem [shape: f32[1,128], index: 12, kind: input, shape index: {}]
  %s13 = inlined_call_operand.hbm [shape: f32[2,8,128], index: 13, kind: output, shape index: {}]
  %s14 = sld [smem:[#allocation0]]
  $region125: #{tpu_custom_call.1} parent=0
    _
  %s16 = ssub.s32 1, %s14
  %s17 = scalar_select 0, %s16, %s14
  $region1: #{tpu_custom_call.1} parent=0
    #allocation2 [shape = 'u8[8192]{0}', space=vmem, size = 0x2000, scoped, tag = 'input window, operand 0']
    #allocation3 [shape = 's32[2]{0}', space=sflag, size = 0x8, scoped, tag = 'scoped memory for tpu_custom_call.1']
    #allocation4 [shape = 's32[2]{0}', space=sflag, size = 0x8, scoped, tag = 'scoped memory for tpu_custom_call.1']
    #allocation5 [shape = 'u8[512]{0}', space=vmem, size = 0x400, scoped, tag = 'input window, operand 1, single buffered']
    #allocation6 [shape = 's32[1]{0}', space=sflag, size = 0x4, scoped, tag = 'scoped memory for tpu_custom_call.1']
    #allocation7 [shape = 'u8[512]{0}', space=vmem, size = 0x400, scoped, tag = 'input window, operand 2, single buffered']
    #allocation8 [shape = 'u8[98304]{0}', space=vmem, size = 0x18000, scoped, tag = 'input window, operand 3, single buffered']
    #allocation9 [shape = 's32[1]{0}', space=sflag, size = 0x4, scoped, tag = 'scoped memory for tpu_custom_call.1']
    #allocation10 [shape = 'u8[32768]{0}', space=vmem, size = 0x8000, scoped, tag = 'input window, operand 5, single buffered']
    #allocation11 [shape = 'u8[512]{0}', space=vmem, size = 0x400, scoped, tag = 'input window, operand 6, single buffered']
    #allocation12 [shape = 's32[1]{0}', space=sflag, size = 0x4, scoped, tag = 'scoped memory for tpu_custom_call.1']
    #allocation13 [shape = 'u8[512]{0}', space=vmem, size = 0x400, scoped, tag = 'input window, operand 7, single buffered']
    #allocation14 [shape = 'u8[512]{0}', space=vmem, size = 0x400, scoped, tag = 'input window, operand 8, single buffered']
    #allocation15 [shape = 's32[1]{0}', space=sflag, size = 0x4, scoped, tag = 'scoped memory for tpu_custom_call.1']
    #allocation16 [shape = 'u8[131072]{0}', space=vmem, size = 0x20000, scoped, tag = 'input window, operand 9, single buffered']
    #allocation17 [shape = 'u8[131072]{0}', space=vmem, size = 0x20000, scoped, tag = 'input window, operand 11, single buffered']
    #allocation18 [shape = 's32[1]{0}', space=sflag, size = 0x4, scoped, tag = 'scoped memory for tpu_custom_call.1']
    #allocation19 [shape = 'u8[8192]{0}', space=vmem, size = 0x2000, scoped, tag = 'output window, operand 0']
    %18 = vsyncpa [#allocation3], 0
    %s19 = scalar_lea.sflag [#allocation3], 1
    %20 = vsyncpa %s19, 0
    %21 = vsyncpa [#allocation6], 0
    %22 = vsyncpa [#allocation9], 0
    %23 = vsyncpa [#allocation12], 0
    %24 = vsyncpa [#allocation15], 0
    %25 = vsyncpa [#allocation18], 0
    %26 = vsyncpa [#allocation4], 0
    %s27 = scalar_lea.sflag [#allocation4], 1
    %28 = vsyncpa %s27, 0
    loop: start=0, step=1, limit=4
    $region2: #{tpu_custom_call.1} parent=1 // loop_pre_header
      _
    $region3: #{tpu_custom_call.1} parent=1 // loop_header
      %s30 = sphi 0, %s34
      %p31 = scmp.ge.s32.totalorder %s30, 4
      %s40 = sphi 0, %s42
      %s43 = sphi 0, %s40
      %s44 = sphi 0, %s43
      %s60 = sphi 0, %s44
      %s64 = sphi 0, %s64
      %s66 = sphi 0, %s64
      %s67 = sphi 0, %s66
      %s81 = sphi 0, %s67
      %s85 = sphi 0, %s85
      %s87 = sphi 0, %s85
      %s88 = sphi 0, %s87
      %s102 = sphi 0, %s88
      %s106 = sphi 0, %s106
      %s108 = sphi 0, %s106
      %s109 = sphi 0, %s108
      %s123 = sphi 0, %s109
      %s127 = sphi 0, %s127
      %s129 = sphi 0, %s127
      %s130 = sphi 0, %s129
      %s144 = sphi 0, %s130
      %s148 = sphi 0, %s148
      %s150 = sphi 0, %s148
      %s151 = sphi 0, %s150
      %s165 = sphi 0, %s151
      %s169 = sphi 0, %s169
      %s171 = sphi 0, %s169
      %s172 = sphi 0, %s171
      %s186 = sphi 0, %s172
      %s190 = sphi 0, %s190
      %s192 = sphi 0, %s190
      %s193 = sphi 0, %s192
      %s207 = sphi 0, %s193
      %s211 = sphi 0, %s211
      %s213 = sphi 0, %s211
      %s214 = sphi 0, %s213
      %s228 = sphi 0, %s214
      %s232 = sphi 0, %s232
      %s234 = sphi 0, %s232
      %s235 = sphi 0, %s234
      %s249 = sphi 0, %s235
      %s253 = sphi 0, %s253
      %s255 = sphi 0, %s253
      %s256 = sphi 0, %s255
      %s270 = sphi 0, %s256
      %s274 = sphi 0, %s274
      %s276 = sphi 0, %s274
      %s277 = sphi 0, %s276
      %s291 = sphi 0, %s277
      %s295 = sphi 0, %s295
      %s297 = sphi 0, %s295
      %s298 = sphi 0, %s297
      %s312 = sphi 0, %s298
      %s318 = sphi 0, %s320
      %s321 = sphi 0, %s318
      %s322 = sphi 0, %s321
      %s338 = sphi 0, %s322
    $region4: #{tpu_custom_call.1} parent=1 // loop_header_branch
      %33 = sbr.rel (%p31) target = $region8
    $region5: #{tpu_custom_call.1} parent=1 // loop_body
      %s35 = ssub.s32 %s30, 1
      %s36 = ssub.s32 %s30, 2
      %s37 = sadd.s32 %s30, 1
      %s38 = ssub.s32 %s30, %s37
      %p39 = scmp.eq.s32.totalorder %s38, 0
      %s41 = sadd.s32 %s40, 1
      %s42 = scalar_select %p39, %s40, %s41
      %p45 = pneg %p39
      %p46 = scmp.eq.s32.totalorder %s30, 1
      %p47 = por %p45, %p46
      %p48 = scmp.ne.s32.totalorder %s40, %s43
      %p49 = scmp.eq.s32.totalorder %s30, 0
      %p50 = por %p48, %p49
      %p51 = scmp.ne.s32.totalorder %s40, %s43
      %p52 = scmp.eq.s32.totalorder %s35, 1
      %p53 = por %p51, %p52
      %p54 = scmp.ne.s32.totalorder %s43, %s44
      %p55 = scmp.eq.s32.totalorder %s35, 0
      %p56 = por %p54, %p55
      %p57 = scmp.ne.s32.totalorder %s43, %s44
      %p58 = scmp.eq.s32.totalorder %s36, 1
      %p59 = por %p57, %p58
      %p61 = scmp.ne.s32.totalorder %s44, %s60
      %p62 = scmp.eq.s32.totalorder %s36, 0
      %p63 = por %p61, %p62
      %s65 = sadd.s32 %s64, 1
      %p68 = scmp.eq.s32.totalorder %s30, 1
      %p69 = scmp.ne.s32.totalorder %s64, %s66
      %p70 = scmp.eq.s32.totalorder %s30, 0
      %p71 = por %p69, %p70
      %p72 = scmp.ne.s32.totalorder %s64, %s66
      %p73 = scmp.eq.s32.totalorder %s35, 1
      %p74 = por %p72, %p73
      %p75 = scmp.ne.s32.totalorder %s66, %s67
      %p76 = scmp.eq.s32.totalorder %s35, 0
      %p77 = por %p75, %p76
      %p78 = scmp.ne.s32.totalorder %s66, %s67
      %p79 = scmp.eq.s32.totalorder %s36, 1
      %p80 = por %p78, %p79
      %p82 = scmp.ne.s32.totalorder %s67, %s81
      %p83 = scmp.eq.s32.totalorder %s36, 0
      %p84 = por %p82, %p83
      %s86 = sadd.s32 %s85, 1
      %p89 = scmp.eq.s32.totalorder %s30, 1
      %p90 = scmp.ne.s32.totalorder %s85, %s87
      %p91 = scmp.eq.s32.totalorder %s30, 0
      %p92 = por %p90, %p91
      %p93 = scmp.ne.s32.totalorder %s85, %s87
      %p94 = scmp.eq.s32.totalorder %s35, 1
      %p95 = por %p93, %p94
      %p96 = scmp.ne.s32.totalorder %s87, %s88
      %p97 = scmp.eq.s32.totalorder %s35, 0
      %p98 = por %p96, %p97
      %p99 = scmp.ne.s32.totalorder %s87, %s88
      %p100 = scmp.eq.s32.totalorder %s36, 1
      %p101 = por %p99, %p100
      %p103 = scmp.ne.s32.totalorder %s88, %s102
      %p104 = scmp.eq.s32.totalorder %s36, 0
      %p105 = por %p103, %p104
      %s107 = sadd.s32 %s106, 1
      %p110 = scmp.eq.s32.totalorder %s30, 1
      %p111 = scmp.ne.s32.totalorder %s106, %s108
      %p112 = scmp.eq.s32.totalorder %s30, 0
      %p113 = por %p111, %p112
      %p114 = scmp.ne.s32.totalorder %s106, %s108
      %p115 = scmp.eq.s32.totalorder %s35, 1
      %p116 = por %p114, %p115
      %p117 = scmp.ne.s32.totalorder %s108, %s109
      %p118 = scmp.eq.s32.totalorder %s35, 0
      %p119 = por %p117, %p118
      %p120 = scmp.ne.s32.totalorder %s108, %s109
      %p121 = scmp.eq.s32.totalorder %s36, 1
      %p122 = por %p120, %p121
      %p124 = scmp.ne.s32.totalorder %s109, %s123
      %p125 = scmp.eq.s32.totalorder %s36, 0
      %p126 = por %p124, %p125
      %s128 = sadd.s32 %s127, 1
      %p131 = scmp.eq.s32.totalorder %s30, 1
      %p132 = scmp.ne.s32.totalorder %s127, %s129
      %p133 = scmp.eq.s32.totalorder %s30, 0
      %p134 = por %p132, %p133
      %p135 = scmp.ne.s32.totalorder %s127, %s129
      %p136 = scmp.eq.s32.totalorder %s35, 1
      %p137 = por %p135, %p136
      %p138 = scmp.ne.s32.totalorder %s129, %s130
      %p139 = scmp.eq.s32.totalorder %s35, 0
      %p140 = por %p138, %p139
      %p141 = scmp.ne.s32.totalorder %s129, %s130
      %p142 = scmp.eq.s32.totalorder %s36, 1
      %p143 = por %p141, %p142
      %p145 = scmp.ne.s32.totalorder %s130, %s144
      %p146 = scmp.eq.s32.totalorder %s36, 0
      %p147 = por %p145, %p146
      %s149 = sadd.s32 %s148, 1
      %p152 = scmp.eq.s32.totalorder %s30, 1
      %p153 = scmp.ne.s32.totalorder %s148, %s150
      %p154 = scmp.eq.s32.totalorder %s30, 0
      %p155 = por %p153, %p154
      %p156 = scmp.ne.s32.totalorder %s148, %s150
      %p157 = scmp.eq.s32.totalorder %s35, 1
      %p158 = por %p156, %p157
      %p159 = scmp.ne.s32.totalorder %s150, %s151
      %p160 = scmp.eq.s32.totalorder %s35, 0
      %p161 = por %p159, %p160
      %p162 = scmp.ne.s32.totalorder %s150, %s151
      %p163 = scmp.eq.s32.totalorder %s36, 1
      %p164 = por %p162, %p163
      %p166 = scmp.ne.s32.totalorder %s151, %s165
      %p167 = scmp.eq.s32.totalorder %s36, 0
      %p168 = por %p166, %p167
      %s170 = sadd.s32 %s169, 1
      %p173 = scmp.eq.s32.totalorder %s30, 1
      %p174 = scmp.ne.s32.totalorder %s169, %s171
      %p175 = scmp.eq.s32.totalorder %s30, 0
      %p176 = por %p174, %p175
      %p177 = scmp.ne.s32.totalorder %s169, %s171
      %p178 = scmp.eq.s32.totalorder %s35, 1
      %p179 = por %p177, %p178
      %p180 = scmp.ne.s32.totalorder %s171, %s172
      %p181 = scmp.eq.s32.totalorder %s35, 0
      %p182 = por %p180, %p181
      %p183 = scmp.ne.s32.totalorder %s171, %s172
      %p184 = scmp.eq.s32.totalorder %s36, 1
      %p185 = por %p183, %p184
      %p187 = scmp.ne.s32.totalorder %s172, %s186
      %p188 = scmp.eq.s32.totalorder %s36, 0
      %p189 = por %p187, %p188
      %s191 = sadd.s32 %s190, 1
      %p194 = scmp.eq.s32.totalorder %s30, 1
      %p195 = scmp.ne.s32.totalorder %s190, %s192
      %p196 = scmp.eq.s32.totalorder %s30, 0
      %p197 = por %p195, %p196
      %p198 = scmp.ne.s32.totalorder %s190, %s192
      %p199 = scmp.eq.s32.totalorder %s35, 1
      %p200 = por %p198, %p199
      %p201 = scmp.ne.s32.totalorder %s192, %s193
      %p202 = scmp.eq.s32.totalorder %s35, 0
      %p203 = por %p201, %p202
      %p204 = scmp.ne.s32.totalorder %s192, %s193
      %p205 = scmp.eq.s32.totalorder %s36, 1
      %p206 = por %p204, %p205
      %p208 = scmp.ne.s32.totalorder %s193, %s207
      %p209 = scmp.eq.s32.totalorder %s36, 0
      %p210 = por %p208, %p209
      %s212 = sadd.s32 %s211, 1
      %p215 = scmp.eq.s32.totalorder %s30, 1
      %p216 = scmp.ne.s32.totalorder %s211, %s213
      %p217 = scmp.eq.s32.totalorder %s30, 0
      %p218 = por %p216, %p217
      %p219 = scmp.ne.s32.totalorder %s211, %s213
      %p220 = scmp.eq.s32.totalorder %s35, 1
      %p221 = por %p219, %p220
      %p222 = scmp.ne.s32.totalorder %s213, %s214
      %p223 = scmp.eq.s32.totalorder %s35, 0
      %p224 = por %p222, %p223
      %p225 = scmp.ne.s32.totalorder %s213, %s214
      %p226 = scmp.eq.s32.totalorder %s36, 1
      %p227 = por %p225, %p226
      %p229 = scmp.ne.s32.totalorder %s214, %s228
      %p230 = scmp.eq.s32.totalorder %s36, 0
      %p231 = por %p229, %p230
      %s233 = sadd.s32 %s232, 1
      %p236 = scmp.eq.s32.totalorder %s30, 1
      %p237 = scmp.ne.s32.totalorder %s232, %s234
      %p238 = scmp.eq.s32.totalorder %s30, 0
      %p239 = por %p237, %p238
      %p240 = scmp.ne.s32.totalorder %s232, %s234
      %p241 = scmp.eq.s32.totalorder %s35, 1
      %p242 = por %p240, %p241
      %p243 = scmp.ne.s32.totalorder %s234, %s235
      %p244 = scmp.eq.s32.totalorder %s35, 0
      %p245 = por %p243, %p244
      %p246 = scmp.ne.s32.totalorder %s234, %s235
      %p247 = scmp.eq.s32.totalorder %s36, 1
      %p248 = por %p246, %p247
      %p250 = scmp.ne.s32.totalorder %s235, %s249
      %p251 = scmp.eq.s32.totalorder %s36, 0
      %p252 = por %p250, %p251
      %s254 = sadd.s32 %s253, 1
      %p257 = scmp.eq.s32.totalorder %s30, 1
      %p258 = scmp.ne.s32.totalorder %s253, %s255
      %p259 = scmp.eq.s32.totalorder %s30, 0
      %p260 = por %p258, %p259
      %p261 = scmp.ne.s32.totalorder %s253, %s255
      %p262 = scmp.eq.s32.totalorder %s35, 1
      %p263 = por %p261, %p262
      %p264 = scmp.ne.s32.totalorder %s255, %s256
      %p265 = scmp.eq.s32.totalorder %s35, 0
      %p266 = por %p264, %p265
      %p267 = scmp.ne.s32.totalorder %s255, %s256
      %p268 = scmp.eq.s32.totalorder %s36, 1
      %p269 = por %p267, %p268
      %p271 = scmp.ne.s32.totalorder %s256, %s270
      %p272 = scmp.eq.s32.totalorder %s36, 0
      %p273 = por %p271, %p272
      %s275 = sadd.s32 %s274, 1
      %p278 = scmp.eq.s32.totalorder %s30, 1
      %p279 = scmp.ne.s32.totalorder %s274, %s276
      %p280 = scmp.eq.s32.totalorder %s30, 0
      %p281 = por %p279, %p280
      %p282 = scmp.ne.s32.totalorder %s274, %s276
      %p283 = scmp.eq.s32.totalorder %s35, 1
      %p284 = por %p282, %p283
      %p285 = scmp.ne.s32.totalorder %s276, %s277
      %p286 = scmp.eq.s32.totalorder %s35, 0
      %p287 = por %p285, %p286
      %p288 = scmp.ne.s32.totalorder %s276, %s277
      %p289 = scmp.eq.s32.totalorder %s36, 1
      %p290 = por %p288, %p289
      %p292 = scmp.ne.s32.totalorder %s277, %s291
      %p293 = scmp.eq.s32.totalorder %s36, 0
      %p294 = por %p292, %p293
      %s296 = sadd.s32 %s295, 1
      %p299 = scmp.eq.s32.totalorder %s30, 1
      %p300 = scmp.ne.s32.totalorder %s295, %s297
      %p301 = scmp.eq.s32.totalorder %s30, 0
      %p302 = por %p300, %p301
      %p303 = scmp.ne.s32.totalorder %s295, %s297
      %p304 = scmp.eq.s32.totalorder %s35, 1
      %p305 = por %p303, %p304
      %p306 = scmp.ne.s32.totalorder %s297, %s298
      %p307 = scmp.eq.s32.totalorder %s35, 0
      %p308 = por %p306, %p307
      %p309 = scmp.ne.s32.totalorder %s297, %s298
      %p310 = scmp.eq.s32.totalorder %s36, 1
      %p311 = por %p309, %p310
      %p313 = scmp.ne.s32.totalorder %s298, %s312
      %p314 = scmp.eq.s32.totalorder %s36, 0
      %p315 = por %p313, %p314
      %s316 = ssub.s32 %s30, %s37
      %p317 = scmp.eq.s32.totalorder %s316, 0
      %s319 = sadd.s32 %s318, 1
      %s320 = scalar_select %p317, %s318, %s319
      %p323 = pneg %p317
      %p324 = scmp.eq.s32.totalorder %s30, 1
      %p325 = por %p323, %p324
      %p326 = scmp.ne.s32.totalorder %s318, %s321
      %p327 = scmp.eq.s32.totalorder %s30, 0
      %p328 = por %p326, %p327
      %p329 = scmp.ne.s32.totalorder %s318, %s321
      %p330 = scmp.eq.s32.totalorder %s35, 1
      %p331 = por %p329, %p330
      %p332 = scmp.ne.s32.totalorder %s321, %s322
      %p333 = scmp.eq.s32.totalorder %s35, 0
      %p334 = por %p332, %p333
      %p335 = scmp.ne.s32.totalorder %s321, %s322
      %p336 = scmp.eq.s32.totalorder %s36, 1
      %p337 = por %p335, %p336
      %p339 = scmp.ne.s32.totalorder %s322, %s338
      %p340 = scmp.eq.s32.totalorder %s36, 0
      %p341 = por %p339, %p340
      %p342 = scmp.le.s32.totalorder 1, %s30
      %p343 = scmp.lt.s32.totalorder %s30, 3
      %p344 = pnand %p342, %p343
      %p345 = pneg %p344
      // Predicated region
      $region9: #{tpu_custom_call.1} parent=5 // pred_check
        _
      $region10: #{tpu_custom_call.1} parent=5 // pred_check_branch
        %347 = sbr.rel (%p344) target = $region12
      $region11: #{tpu_custom_call.1} parent=5 // pred_region
        %s348 = ssub.s32 %s30, 1
        // Predicated region
        $region13: #{tpu_custom_call.1} parent=11 // pred_check
          %p349 = pneg %p77
        $region14: #{tpu_custom_call.1} parent=11 // pred_check_branch
          %351 = sbr.rel (%p349) target = $region16
        $region15: #{tpu_custom_call.1} parent=11 // pred_region
          %353 = vsyncadd [#allocation6], 0
          %s355 = sshll.u32 %s1, 4
          %s356 = int_to_ptr.hbm [resolvable:$true] %s355
          %s357 = sshll.u32 [#allocation5], 4
          %s358 = int_to_ptr.vmem [resolvable:$true] %s357
          %360 = dma.hbm_to_vmem [thread:$0]  %s356, 16, %s358, [#allocation6]
        $region16: #{tpu_custom_call.1} parent=11 // pred_fallthru
          _
        // Predicated region
        $region17: #{tpu_custom_call.1} parent=11 // pred_check
          %p361 = pneg %p98
        $region18: #{tpu_custom_call.1} parent=11 // pred_check_branch
          %363 = sbr.rel (%p361) target = $region20
        $region19: #{tpu_custom_call.1} parent=11 // pred_region
          %365 = vsyncadd [#allocation6], 0
          %s367 = sshll.u32 %s2, 4
          %s368 = int_to_ptr.hbm [resolvable:$true] %s367
          %s369 = sshll.u32 [#allocation7], 4
          %s370 = int_to_ptr.vmem [resolvable:$true] %s369
          %372 = dma.hbm_to_vmem [thread:$0]  %s368, 16, %s370, [#allocation6]
        $region20: #{tpu_custom_call.1} parent=11 // pred_fallthru
          _
        // Predicated region
        $region21: #{tpu_custom_call.1} parent=11 // pred_check
          %p373 = pneg %p119
        $region22: #{tpu_custom_call.1} parent=11 // pred_check_branch
          %375 = sbr.rel (%p373) target = $region24
        $region23: #{tpu_custom_call.1} parent=11 // pred_region
          %377 = vsyncadd [#allocation9], 0
          %s378 = sshll.u32 %s3, 4
          %s379 = int_to_ptr.hbm [resolvable:$true] %s378
          %s380 = sshll.u32 [#allocation8], 4
          %s381 = int_to_ptr.vmem [resolvable:$true] %s380
          %386 = dma.hbm_to_vmem [thread:$0]  %s379, 3072, %s381, [#allocation9], 192, 192, 12
        $region24: #{tpu_custom_call.1} parent=11 // pred_fallthru
          _
        // Predicated region
        $region25: #{tpu_custom_call.1} parent=11 // pred_check
          %p387 = pneg %p140
        $region26: #{tpu_custom_call.1} parent=11 // pred_check_branch
          %389 = sbr.rel (%p387) target = $region28
        $region27: #{tpu_custom_call.1} parent=11 // pred_region
          _
        $region28: #{tpu_custom_call.1} parent=11 // pred_fallthru
          _
        // Predicated region
        $region29: #{tpu_custom_call.1} parent=11 // pred_check
          %p390 = pneg %p161
        $region30: #{tpu_custom_call.1} parent=11 // pred_check_branch
          %392 = sbr.rel (%p390) target = $region32
        $region31: #{tpu_custom_call.1} parent=11 // pred_region
          %394 = vsyncadd [#allocation9], 0
          %s395 = sshll.u32 %s5, 4
          %s396 = int_to_ptr.hbm [resolvable:$true] %s395
          %s397 = sshll.u32 [#allocation10], 4
          %s398 = int_to_ptr.vmem [resolvable:$true] %s397
          %403 = dma.hbm_to_vmem [thread:$0]  %s396, 1024, %s398, [#allocation9], 64, 64, 4
        $region32: #{tpu_custom_call.1} parent=11 // pred_fallthru
          _
        // Predicated region
        $region33: #{tpu_custom_call.1} parent=11 // pred_check
          %p404 = pneg %p182
        $region34: #{tpu_custom_call.1} parent=11 // pred_check_branch
          %406 = sbr.rel (%p404) target = $region36
        $region35: #{tpu_custom_call.1} parent=11 // pred_region
          %408 = vsyncadd [#allocation12], 0
          %s410 = sshll.u32 %s6, 4
          %s411 = int_to_ptr.hbm [resolvable:$true] %s410
          %s412 = sshll.u32 [#allocation11], 4
          %s413 = int_to_ptr.vmem [resolvable:$true] %s412
          %415 = dma.hbm_to_vmem [thread:$0]  %s411, 16, %s413, [#allocation12]
        $region36: #{tpu_custom_call.1} parent=11 // pred_fallthru
          _
        // Predicated region
        $region37: #{tpu_custom_call.1} parent=11 // pred_check
          %p416 = pneg %p203
        $region38: #{tpu_custom_call.1} parent=11 // pred_check_branch
          %418 = sbr.rel (%p416) target = $region40
        $region39: #{tpu_custom_call.1} parent=11 // pred_region
          %420 = vsyncadd [#allocation12], 0
          %s422 = sshll.u32 %s7, 4
          %s423 = int_to_ptr.hbm [resolvable:$true] %s422
          %s424 = sshll.u32 [#allocation13], 4
          %s425 = int_to_ptr.vmem [resolvable:$true] %s424
          %427 = dma.hbm_to_vmem [thread:$0]  %s423, 16, %s425, [#allocation12]
        $region40: #{tpu_custom_call.1} parent=11 // pred_fallthru
          _
        // Predicated region
        $region41: #{tpu_custom_call.1} parent=11 // pred_check
          %p428 = pneg %p224
        $region42: #{tpu_custom_call.1} parent=11 // pred_check_branch
          %430 = sbr.rel (%p428) target = $region44
        $region43: #{tpu_custom_call.1} parent=11 // pred_region
          %432 = vsyncadd [#allocation15], 0
          %s434 = sshll.u32 %s8, 4
          %s435 = int_to_ptr.hbm [resolvable:$true] %s434
          %s436 = sshll.u32 [#allocation14], 4
          %s437 = int_to_ptr.vmem [resolvable:$true] %s436
          %439 = dma.hbm_to_vmem [thread:$0]  %s435, 16, %s437, [#allocation15]
        $region44: #{tpu_custom_call.1} parent=11 // pred_fallthru
          _
        // Predicated region
        $region45: #{tpu_custom_call.1} parent=11 // pred_check
          %p440 = pneg %p245
        $region46: #{tpu_custom_call.1} parent=11 // pred_check_branch
          %442 = sbr.rel (%p440) target = $region48
        $region47: #{tpu_custom_call.1} parent=11 // pred_region
          %444 = vsyncadd [#allocation15], 0
          %s445 = sshll.u32 %s9, 4
          %s446 = int_to_ptr.hbm [resolvable:$true] %s445
          %s447 = sshll.u32 [#allocation16], 4
          %s448 = int_to_ptr.vmem [resolvable:$true] %s447
          %453 = dma.hbm_to_vmem [thread:$0]  %s446, 4096, %s448, [#allocation15], 256, 256, 16
        $region48: #{tpu_custom_call.1} parent=11 // pred_fallthru
          _
        // Predicated region
        $region49: #{tpu_custom_call.1} parent=11 // pred_check
          %p454 = pneg %p266
        $region50: #{tpu_custom_call.1} parent=11 // pred_check_branch
          %456 = sbr.rel (%p454) target = $region52
        $region51: #{tpu_custom_call.1} parent=11 // pred_region
          _
        $region52: #{tpu_custom_call.1} parent=11 // pred_fallthru
          _
        // Predicated region
        $region53: #{tpu_custom_call.1} parent=11 // pred_check
          %p457 = pneg %p287
        $region54: #{tpu_custom_call.1} parent=11 // pred_check_branch
          %459 = sbr.rel (%p457) target = $region56
        $region55: #{tpu_custom_call.1} parent=11 // pred_region
          %461 = vsyncadd [#allocation18], 0
          %s462 = sshll.u32 %s11, 4
          %s463 = int_to_ptr.hbm [resolvable:$true] %s462
          %s464 = sshll.u32 [#allocation17], 4
          %s465 = int_to_ptr.vmem [resolvable:$true] %s464
          %470 = dma.hbm_to_vmem [thread:$0]  %s463, 4096, %s465, [#allocation18], 64, 64, 4
        $region56: #{tpu_custom_call.1} parent=11 // pred_fallthru
          _
        // Predicated region
        $region57: #{tpu_custom_call.1} parent=11 // pred_check
          %p471 = pneg %p308
        $region58: #{tpu_custom_call.1} parent=11 // pred_check_branch
          %473 = sbr.rel (%p471) target = $region60
        $region59: #{tpu_custom_call.1} parent=11 // pred_region
          _
        $region60: #{tpu_custom_call.1} parent=11 // pred_fallthru
          _
      $region12: #{tpu_custom_call.1} parent=5 // pred_fallthru
        _
      %p474 = scmp.lt.s32.totalorder %s30, 2
      // Predicated region
      $region61: #{tpu_custom_call.1} parent=5 // pred_check
        %p475 = pneg %p474
      $region62: #{tpu_custom_call.1} parent=5 // pred_check_branch
        %477 = sbr.rel (%p475) target = $region64
      $region63: #{tpu_custom_call.1} parent=5 // pred_region
        // Predicated region
        $region65: #{tpu_custom_call.1} parent=63 // pred_check
          %p478 = pneg %p50
        $region66: #{tpu_custom_call.1} parent=63 // pred_check_branch
          %480 = sbr.rel (%p478) target = $region68
        $region67: #{tpu_custom_call.1} parent=63 // pred_region
          %s481 = sand.u32 %s40, 1
          %s482 = scalar_lea.sflag [#allocation3], %s481
          %s483 = sand.u32 %s40, 1
          %s484 = smul.addr %s483, 8
          %s485 = scalar_lea.vmem [#allocation2], %s484
          %487 = vsyncadd %s482, 0
          %s488 = smul.addr %s30, 8
          %s489 = scalar_lea.hbm %s0, %s488
          %s491 = sshll.u32 %s489, 4
          %s492 = int_to_ptr.hbm [resolvable:$true] %s491
          %s493 = sshll.u32 %s485, 4
          %s494 = int_to_ptr.vmem [resolvable:$true] %s493
          %496 = dma.hbm_to_vmem [thread:$0]  %s492, 128, %s494, %s482
        $region68: #{tpu_custom_call.1} parent=63 // pred_fallthru
          _
      $region64: #{tpu_custom_call.1} parent=5 // pred_fallthru
        _
      %p497 = scmp.le.s32.totalorder 1, %s30
      %p498 = scmp.lt.s32.totalorder %s30, 3
      %p499 = pnand %p497, %p498
      %p500 = pneg %p499
      // Predicated region
      $region69: #{tpu_custom_call.1} parent=5 // pred_check
        _
      $region70: #{tpu_custom_call.1} parent=5 // pred_check_branch
        %502 = sbr.rel (%p499) target = $region72
      $region71: #{tpu_custom_call.1} parent=5 // pred_region
        %s503 = ssub.s32 %s30, 1
        %s504 = sand.u32 %s43, 1
        %s505 = scalar_lea.sflag [#allocation3], %s504
        %s506 = sand.u32 %s43, 1
        %s507 = smul.addr %s506, 8
        %s508 = scalar_lea.vmem [#allocation2], %s507
        // Predicated region
        $region73: #{tpu_custom_call.1} parent=71 // pred_check
          %p509 = pneg %p56
        $region74: #{tpu_custom_call.1} parent=71 // pred_check_branch
          %511 = sbr.rel (%p509) target = $region76
        $region75: #{tpu_custom_call.1} parent=71 // pred_region
          %513 = dma.done %s505, 128
        $region76: #{tpu_custom_call.1} parent=71 // pred_fallthru
          _
        // Predicated region
        $region77: #{tpu_custom_call.1} parent=71 // pred_check
          %p514 = pneg %p77
        $region78: #{tpu_custom_call.1} parent=71 // pred_check_branch
          %516 = sbr.rel (%p514) target = $region80
        $region79: #{tpu_custom_call.1} parent=71 // pred_region
          %518 = dma.done [#allocation6], 16
        $region80: #{tpu_custom_call.1} parent=71 // pred_fallthru
          _
        // Predicated region
        $region81: #{tpu_custom_call.1} parent=71 // pred_check
          %p519 = pneg %p98
        $region82: #{tpu_custom_call.1} parent=71 // pred_check_branch
          %521 = sbr.rel (%p519) target = $region84
        $region83: #{tpu_custom_call.1} parent=71 // pred_region
          %523 = dma.done [#allocation6], 16
        $region84: #{tpu_custom_call.1} parent=71 // pred_fallthru
          _
        // Predicated region
        $region85: #{tpu_custom_call.1} parent=71 // pred_check
          %p524 = pneg %p119
        $region86: #{tpu_custom_call.1} parent=71 // pred_check_branch
          %526 = sbr.rel (%p524) target = $region88
        $region87: #{tpu_custom_call.1} parent=71 // pred_region
          %528 = dma.done [#allocation9], 3072
        $region88: #{tpu_custom_call.1} parent=71 // pred_fallthru
          _
        // Predicated region
        $region89: #{tpu_custom_call.1} parent=71 // pred_check
          %p529 = pneg %p161
        $region90: #{tpu_custom_call.1} parent=71 // pred_check_branch
          %531 = sbr.rel (%p529) target = $region92
        $region91: #{tpu_custom_call.1} parent=71 // pred_region
          %533 = dma.done [#allocation9], 1024
        $region92: #{tpu_custom_call.1} parent=71 // pred_fallthru
          _
        // Predicated region
        $region93: #{tpu_custom_call.1} parent=71 // pred_check
          %p534 = pneg %p182
        $region94: #{tpu_custom_call.1} parent=71 // pred_check_branch
          %536 = sbr.rel (%p534) target = $region96
        $region95: #{tpu_custom_call.1} parent=71 // pred_region
          %538 = dma.done [#allocation12], 16
        $region96: #{tpu_custom_call.1} parent=71 // pred_fallthru
          _
        // Predicated region
        $region97: #{tpu_custom_call.1} parent=71 // pred_check
          %p539 = pneg %p203
        $region98: #{tpu_custom_call.1} parent=71 // pred_check_branch
          %541 = sbr.rel (%p539) target = $region100
        $region99: #{tpu_custom_call.1} parent=71 // pred_region
          %543 = dma.done [#allocation12], 16
        $region100: #{tpu_custom_call.1} parent=71 // pred_fallthru
          _
        // Predicated region
        $region101: #{tpu_custom_call.1} parent=71 // pred_check
          %p544 = pneg %p224
        $region102: #{tpu_custom_call.1} parent=71 // pred_check_branch
          %546 = sbr.rel (%p544) target = $region104
        $region103: #{tpu_custom_call.1} parent=71 // pred_region
          %548 = dma.done [#allocation15], 16
        $region104: #{tpu_custom_call.1} parent=71 // pred_fallthru
          _
        // Predicated region
        $region105: #{tpu_custom_call.1} parent=71 // pred_check
          %p549 = pneg %p245
        $region106: #{tpu_custom_call.1} parent=71 // pred_check_branch
          %551 = sbr.rel (%p549) target = $region108
        $region107: #{tpu_custom_call.1} parent=71 // pred_region
          %553 = dma.done [#allocation15], 4096
        $region108: #{tpu_custom_call.1} parent=71 // pred_fallthru
          _
        // Predicated region
        $region109: #{tpu_custom_call.1} parent=71 // pred_check
          %p554 = pneg %p287
        $region110: #{tpu_custom_call.1} parent=71 // pred_check_branch
          %556 = sbr.rel (%p554) target = $region112
        $region111: #{tpu_custom_call.1} parent=71 // pred_region
          %558 = dma.done [#allocation18], 4096
        $region112: #{tpu_custom_call.1} parent=71 // pred_fallthru
          _
        %s559 = sand.u32 %s43, 1
        %s560 = scalar_lea.sflag [#allocation3], %s559
        %s561 = sand.u32 %s43, 1
        %s562 = smul.addr %s561, 8
        %s563 = scalar_lea.vmem [#allocation2], %s562
        %p564 = pneg %p56
        %p565 = pneg %p53
        %p566 = pneg %p77
        %p567 = pneg %p74
        %p568 = pneg %p98
        %p569 = pneg %p95
        %p570 = pneg %p119
        %p571 = pneg %p116
        %p572 = pneg %p140
        %p573 = pneg %p137
        %p574 = pneg %p161
        %p575 = pneg %p158
        %p576 = pneg %p182
        %p577 = pneg %p179
        %p578 = pneg %p203
        %p579 = pneg %p200
        %p580 = pneg %p224
        %p581 = pneg %p221
        %p582 = pneg %p245
        %p583 = pneg %p242
        %p584 = pneg %p266
        %p585 = pneg %p263
        %p586 = pneg %p287
        %p587 = pneg %p284
        %p588 = pneg %p308
        %p589 = pneg %p305
        %p590 = pneg %p334
        %p591 = pneg %p331
        %s592 = sand.u32 %s321, 1
        %s593 = scalar_lea.sflag [#allocation4], %s592
        %s594 = sand.u32 %s321, 1
        %s595 = smul.addr %s594, 8
        %s596 = scalar_lea.vmem [#allocation19], %s595
        %v598 = vld [vmem:[%s508] sm:$0xff]
        %v599 = vld [vmem:[#allocation5] sm:$0x1]
        %v600 = vld [vmem:[#allocation7] sm:$0x1]
        %601 = vadd.xlane.f32.xlu0 %v598
        %v602 = vpop.xlane.xlu0 %601
        %v603 = vrcp.pop 128.0
        %v604 = vmul.f32 128.0, %v603
        %v605 = vsub.f32 1.0, %v604
        %v606 = vmul.f32 %v603, %v605
        %v607 = vadd.f32 %v603, %v606
        %vm608 = vweird.f32 %v603
        %v609 = vsel %vm608, %v603, %v607
        %v610 = vmul.f32 %v602, %v609
        %v611 = vsub.f32 %v598, %v610
        %v612 = vmul.f32 %v611, %v611
        %613 = vadd.xlane.f32.xlu0 %v612
        %v614 = vpop.xlane.xlu0 %613
        %v615 = vmul.f32 %v614, %v609
        %v616 = vadd.f32 %v615, 1e-05
        %v617 = vrsqrt.pop %v616
        %v618 = vmul.f32 %v617, %v616
        %v619 = vmul.f32 %v618, %v617
        %v620 = vmul.f32 0.5, %v619
        %v621 = vsub.f32 1.5, %v620
        %v622 = vmul.f32 %v617, %v621
        %vm623 = vweird.f32 %v616
        %vm624 = vweird.f32 %v617
        %vm625 = vmor %vm623, %vm624
        %v626 = vsel %vm625, %v617, %v622
        %v627 = vmul.f32 %v611, %v626
        %v629 = vperm.slane %v599, 0
        %v631 = vmul.f32 %v627, %v629
        %v633 = vperm.slane %v600, 0
        %v635 = vadd.f32 %v631, %v633
        %v636 = vpack.c.bf16 %v635, %v635
        %v637 = vld [vmem:[#allocation8] sm:$0xff]
        %v638 = vld [vmem:[#allocation8 + $0x8] sm:$0xf]
        %v639 = vld [vmem:[#allocation8 + $0xc] sm:$0xff]
        %v640 = vld [vmem:[#allocation8 + $0x14] sm:$0xf]
        %v641 = vld [vmem:[#allocation8 + $0x18] sm:$0xff]
        %v642 = vld [vmem:[#allocation8 + $0x20] sm:$0xf]
        %v643 = vld [vmem:[#allocation8 + $0x24] sm:$0xff]
        %v644 = vld [vmem:[#allocation8 + $0x2c] sm:$0xf]
        %v645 = vld [vmem:[#allocation8 + $0x30] sm:$0xff]
        %v646 = vld [vmem:[#allocation8 + $0x38] sm:$0xf]
        %v647 = vld [vmem:[#allocation8 + $0x3c] sm:$0xff]
        %v648 = vld [vmem:[#allocation8 + $0x44] sm:$0xf]
        %v649 = vld [vmem:[#allocation8 + $0x48] sm:$0xff]
        %v650 = vld [vmem:[#allocation8 + $0x50] sm:$0xf]
        %v651 = vld [vmem:[#allocation8 + $0x54] sm:$0xff]
        %v652 = vld [vmem:[#allocation8 + $0x5c] sm:$0xf]
        %v653 = vld [vmem:[#allocation8 + $0x60] sm:$0xff]
        %v654 = vld [vmem:[#allocation8 + $0x68] sm:$0xf]
        %v655 = vld [vmem:[#allocation8 + $0x6c] sm:$0xff]
        %v656 = vld [vmem:[#allocation8 + $0x74] sm:$0xf]
        %v657 = vld [vmem:[#allocation8 + $0x78] sm:$0xff]
        %v658 = vld [vmem:[#allocation8 + $0x80] sm:$0xf]
        %v659 = vld [vmem:[#allocation8 + $0x84] sm:$0xff]
        %v660 = vld [vmem:[#allocation8 + $0x8c] sm:$0xf]
        %v661 = vld [vmem:[#allocation8 + $0x90] sm:$0xff]
        %v662 = vld [vmem:[#allocation8 + $0x98] sm:$0xf]
        %v663 = vld [vmem:[#allocation8 + $0x9c] sm:$0xff]
        %v664 = vld [vmem:[#allocation8 + $0xa4] sm:$0xf]
        %v665 = vld [vmem:[#allocation8 + $0xa8] sm:$0xff]
        %v666 = vld [vmem:[#allocation8 + $0xb0] sm:$0xf]
        %v667 = vld [vmem:[#allocation8 + $0xb4] sm:$0xff]
        %v668 = vld [vmem:[#allocation8 + $0xbc] sm:$0xf]
        %v669 = vld [vmem:[%s4] sm:$0x7]
        %v671 = vperm.slane %v669, 0
        %v672 = vperm.slane %v669, 1
        %v673 = vperm.slane %v669, 2
        %v709 = vunpack.c.l.b16 %v637
        %v710 = vunpack.c.h.b16 %v637
        %v711 = vunpack.c.l.b16 %v638
        %v712 = vunpack.c.l.b16 %v639
        %v713 = vunpack.c.h.b16 %v639
        %v714 = vunpack.c.l.b16 %v640
        %v715 = vunpack.c.l.b16 %v641
        %v716 = vunpack.c.h.b16 %v641
        %v717 = vunpack.c.l.b16 %v642
        %v718 = vunpack.c.l.b16 %v643
        %v719 = vunpack.c.h.b16 %v643
        %v720 = vunpack.c.l.b16 %v644
        %v721 = vunpack.c.l.b16 %v645
        %v722 = vunpack.c.h.b16 %v645
        %v723 = vunpack.c.l.b16 %v646
        %v724 = vunpack.c.l.b16 %v647
        %v725 = vunpack.c.h.b16 %v647
        %v726 = vunpack.c.l.b16 %v648
        %v727 = vunpack.c.l.b16 %v649
        %v728 = vunpack.c.h.b16 %v649
        %v729 = vunpack.c.l.b16 %v650
        %v730 = vunpack.c.l.b16 %v651
        %v731 = vunpack.c.h.b16 %v651
        %v732 = vunpack.c.l.b16 %v652
        %v733 = vunpack.c.l.b16 %v653
        %v734 = vunpack.c.h.b16 %v653
        %v735 = vunpack.c.l.b16 %v654
        %v736 = vunpack.c.l.b16 %v655
        %v737 = vunpack.c.h.b16 %v655
        %v738 = vunpack.c.l.b16 %v656
        %v739 = vunpack.c.l.b16 %v657
        %v740 = vunpack.c.h.b16 %v657
        %v741 = vunpack.c.l.b16 %v658
        %v742 = vunpack.c.l.b16 %v659
        %v743 = vunpack.c.h.b16 %v659
        %v744 = vunpack.c.l.b16 %v660
        %v745 = vunpack.c.l.b16 %v661
        %v746 = vunpack.c.h.b16 %v661
        %v747 = vunpack.c.l.b16 %v662
        %v748 = vunpack.c.l.b16 %v663
        %v749 = vunpack.c.h.b16 %v663
        %v750 = vunpack.c.l.b16 %v664
        %v751 = vunpack.c.l.b16 %v665
        %v752 = vunpack.c.h.b16 %v665
        %v753 = vunpack.c.l.b16 %v666
        %v754 = vunpack.c.l.b16 %v667
        %v755 = vunpack.c.h.b16 %v667
        %v756 = vunpack.c.l.b16 %v668
        %v757 = vpack.c.b16 %v712, %v709
        %v758 = vpack.c.b16 %v713, %v710
        %v759 = vpack.c.b16 %v714, %v711
        %v760 = vpack.c.b16 %v718, %v715
        %v761 = vpack.c.b16 %v719, %v716
        %v762 = vpack.c.b16 %v720, %v717
        %v763 = vpack.c.b16 %v724, %v721
        %v764 = vpack.c.b16 %v725, %v722
        %v765 = vpack.c.b16 %v726, %v723
        %v766 = vpack.c.b16 %v730, %v727
        %v767 = vpack.c.b16 %v731, %v728
        %v768 = vpack.c.b16 %v732, %v729
        %v769 = vpack.c.b16 %v736, %v733
        %v770 = vpack.c.b16 %v737, %v734
        %v771 = vpack.c.b16 %v738, %v735
        %v772 = vpack.c.b16 %v742, %v739
        %v773 = vpack.c.b16 %v743, %v740
        %v774 = vpack.c.b16 %v744, %v741
        %v775 = vpack.c.b16 %v748, %v745
        %v776 = vpack.c.b16 %v749, %v746
        %v777 = vpack.c.b16 %v750, %v747
        %v778 = vpack.c.b16 %v754, %v751
        %v779 = vpack.c.b16 %v755, %v752
        %v780 = vpack.c.b16 %v756, %v753
        %805 = vmatpush.bf16.msra.mxu0 %v778
        %806 = vmatpush.bf16.msra.mxu0 %v775
        %807 = vmatpush.bf16.msra.mxu0 %v772
        %808 = vmatpush.bf16.msra.mxu0 %v769
        %809 = vmatpush.bf16.msra.mxu0 %v766
        %810 = vmatpush.bf16.msra.mxu0 %v763
        %811 = vmatpush.bf16.msra.mxu0 %v760
        %812 = vmatpush.bf16.msra.mxu0 %v757
        %813 = vmatmul.bf16.gmra.mxu0 %v636
        %v814 = vpop.f32.mrf.mxu0
        %v815 = vadd.f32 %v671, %v814
        %v816 = vpop.f32.mrf.mxu0
        %817 = vdwg.mxu0
        %818 = vmatpush.bf16.msra.mxu0 %v779
        %819 = vmatpush.bf16.msra.mxu0 %v776
        %820 = vmatpush.bf16.msra.mxu0 %v773
        %821 = vmatpush.bf16.msra.mxu0 %v770
        %822 = vmatpush.bf16.msra.mxu0 %v767
        %823 = vmatpush.bf16.msra.mxu0 %v764
        %824 = vmatpush.bf16.msra.mxu0 %v761
        %825 = vmatpush.bf16.msra.mxu0 %v758
        %826 = vmatmul.bf16.gmra.mxu0 %v636
        %v827 = vpop.f32.mrf.mxu0
        %v828 = vadd.f32 %v672, %v827
        %v829 = vpop.f32.mrf.mxu0
        %830 = vdwg.mxu0
        %831 = vmatpush.bf16.msra.mxu0 %v780
        %832 = vmatpush.bf16.msra.mxu0 %v777
        %833 = vmatpush.bf16.msra.mxu0 %v774
        %834 = vmatpush.bf16.msra.mxu0 %v771
        %835 = vmatpush.bf16.msra.mxu0 %v768
        %836 = vmatpush.bf16.msra.mxu0 %v765
        %837 = vmatpush.bf16.msra.mxu0 %v762
        %838 = vmatpush.bf16.msra.mxu0 %v759
        %839 = vmatmul.bf16.gmra.mxu0 %v636
        %v840 = vpop.f32.mrf.mxu0
        %v841 = vadd.f32 %v673, %v840
        %v842 = vpop.f32.mrf.mxu0
        %843 = vdwg.mxu0
        %v844 = vpack.c.bf16 %v815, %v815
        %v845 = vpack.c.bf16 %v828, %v828
        %v846 = vpack.c.bf16 %v841, %v841
        %vm847 = vcmask 261120
        %v849 = vsel %vm847, %v844, 0
        %v852 = vsel %vm847, %v845, 0
        %854 = vmatpush.bf16.xpose.msra.mxu0 0
        %855 = vmatpush.bf16.xpose.msra.mxu0 0
        %856 = vmatpush.bf16.xpose.msra.mxu0 0
        %857 = vmatpush.bf16.xpose.msra.mxu0 0
        %858 = vmatpush.bf16.xpose.msra.mxu0 0
        %859 = vmatpush.bf16.xpose.msra.mxu0 0
        %860 = vmatpush.bf16.xpose.msra.mxu0 0
        %861 = vmatpush.bf16.xpose.msra.mxu0 %v852
        %862 = vmatmul.bf16.gmra.mxu0 %v849
        %v863 = vpop.f32.mrf.mxu0
        %v864 = vadd.f32 0.0, %v863
        %v865 = vpop.f32.mrf.mxu0
        %866 = vdwg.mxu0
        %vm867 = vcmask 64512
        %v868 = vsel %vm867, %v864, -inf
        %869 = vmax.xlane.f32.xlu0 %v868
        %v870 = vpop.xlane.xlu0 %869
        %v871 = vsub.f32 %v864, %v870
        %v872 = vmul.f32 %v871, 1.442695
        %v873 = vpow.pop %v872
        %v874 = vsel %vm867, %v873, 0.0
        %875 = vadd.xlane.f32.xlu0 %v874
        %v876 = vpop.xlane.xlu0 %875
        %v877 = vrcp.pop %v876
        %v878 = vmul.f32 %v876, %v877
        %v879 = vsub.f32 1.0, %v878
        %v880 = vmul.f32 %v877, %v879
        %v881 = vadd.f32 %v877, %v880
        %vm882 = vweird.f32 %v876
        %vm883 = vweird.f32 %v877
        %vm884 = vmor %vm882, %vm883
        %v885 = vsel %vm884, %v877, %v881
        %v886 = vand.u32 2147483647, %v876
        %vm887 = vcmp.eq.f32.partialorder %v886, 8.507059e+37
        %v888 = vand.u32 %v876, 2147483648
        %v889 = vor.u32 1.1754944e-38, %v888
        %v890 = vsel %vm887, %v889, %v885
        %v891 = vmul.f32 %v873, %v890
        %v892 = vpack.c.bf16 %v891, %v891
        %v894 = vsel %vm867, %v892, 0
        %vm896 = vcmask 1043456
        %v898 = vsel %vm896, %v846, 0
        %900 = vmatpush.bf16.msra.mxu0 0
        %901 = vmatpush.bf16.msra.mxu0 0
        %902 = vmatpush.bf16.msra.mxu0 0
        %903 = vmatpush.bf16.msra.mxu0 0
        %904 = vmatpush.bf16.msra.mxu0 0
        %905 = vmatpush.bf16.msra.mxu0 0
        %906 = vmatpush.bf16.msra.mxu0 0
        %907 = vmatpush.bf16.msra.mxu0 %v898
        %908 = vmatmul.bf16.gmra.mxu0 %v894
        %v909 = vpop.f32.mrf.mxu0
        %v910 = vadd.f32 0.0, %v909
        %v911 = vpop.f32.mrf.mxu0
        %912 = vdwg.mxu0
        %v914 = vunpack.c.l.b16 %v844
        %v915 = vpack.c.b16 %v914, %v914
        %916 = vrot.lane.b32.xlu0 %v915, 96
        %v917 = vpop.permute.xlu0 %916
        %v919 = vunpack.c.l.b16 %v845
        %v920 = vpack.c.b16 %v919, %v919
        %921 = vrot.lane.b32.xlu0 %v920, 96
        %v922 = vpop.permute.xlu0 %921
        %v924 = vsel %vm847, %v917, 0
        %v927 = vsel %vm847, %v922, 0
        %929 = vmatpush.bf16.xpose.msra.mxu0 0
        %930 = vmatpush.bf16.xpose.msra.mxu0 0
        %931 = vmatpush.bf16.xpose.msra.mxu0 0
        %932 = vmatpush.bf16.xpose.msra.mxu0 0
        %933 = vmatpush.bf16.xpose.msra.mxu0 0
        %934 = vmatpush.bf16.xpose.msra.mxu0 0
        %935 = vmatpush.bf16.xpose.msra.mxu0 0
        %936 = vmatpush.bf16.xpose.msra.mxu0 %v927
        %937 = vmatmul.bf16.gmra.mxu0 %v924
        %v938 = vpop.f32.mrf.mxu0
        %v939 = vadd.f32 0.0, %v938
        %v940 = vpop.f32.mrf.mxu0
        %941 = vdwg.mxu0
        %v942 = vsel %vm867, %v939, -inf
        %943 = vmax.xlane.f32.xlu0 %v942
        %v944 = vpop.xlane.xlu0 %943
        %v945 = vsub.f32 %v939, %v944
        %v946 = vmul.f32 %v945, 1.442695
        %v947 = vpow.pop %v946
        %v948 = vsel %vm867, %v947, 0.0
        %949 = vadd.xlane.f32.xlu0 %v948
        %v950 = vpop.xlane.xlu0 %949
        %v951 = vrcp.pop %v950
        %v952 = vmul.f32 %v950, %v951
        %v953 = vsub.f32 1.0, %v952
        %v954 = vmul.f32 %v951, %v953
        %v955 = vadd.f32 %v951, %v954
        %vm956 = vweird.f32 %v950
        %vm957 = vweird.f32 %v951
        %vm958 = vmor %vm956, %vm957
        %v959 = vsel %vm958, %v951, %v955
        %v960 = vand.u32 2147483647, %v950
        %vm961 = vcmp.eq.f32.partialorder %v960, 8.507059e+37
        %v962 = vand.u32 %v950, 2147483648
        %v963 = vor.u32 1.1754944e-38, %v962
        %v964 = vsel %vm961, %v963, %v959
        %v965 = vmul.f32 %v947, %v964
        %v966 = vpack.c.bf16 %v965, %v965
        %v968 = vunpack.c.l.b16 %v846
        %v969 = vpack.c.b16 %v968, %v968
        %970 = vrot.lane.b32.xlu0 %v969, 96
        %v971 = vpop.permute.xlu0 %970
        %v973 = vsel %vm867, %v966, 0
        %v976 = vsel %vm896, %v971, 0
        %978 = vmatpush.bf16.msra.mxu0 0
        %979 = vmatpush.bf16.msra.mxu0 0
        %980 = vmatpush.bf16.msra.mxu0 0
        %981 = vmatpush.bf16.msra.mxu0 0
        %982 = vmatpush.bf16.msra.mxu0 0
        %983 = vmatpush.bf16.msra.mxu0 0
        %984 = vmatpush.bf16.msra.mxu0 0
        %985 = vmatpush.bf16.msra.mxu0 %v976
        %986 = vmatmul.bf16.gmra.mxu0 %v973
        %v987 = vpop.f32.mrf.mxu0
        %v988 = vadd.f32 0.0, %v987
        %v989 = vpop.f32.mrf.mxu0
        %990 = vdwg.mxu0
        %991 = vrot.lane.b32.xlu0 %v915, 64
        %v992 = vpop.permute.xlu0 %991
        %993 = vrot.lane.b32.xlu0 %v920, 64
        %v994 = vpop.permute.xlu0 %993
        %v996 = vsel %vm847, %v992, 0
        %v999 = vsel %vm847, %v994, 0
        %1001 = vmatpush.bf16.xpose.msra.mxu0 0
        %1002 = vmatpush.bf16.xpose.msra.mxu0 0
        %1003 = vmatpush.bf16.xpose.msra.mxu0 0
        %1004 = vmatpush.bf16.xpose.msra.mxu0 0
        %1005 = vmatpush.bf16.xpose.msra.mxu0 0
        %1006 = vmatpush.bf16.xpose.msra.mxu0 0
        %1007 = vmatpush.bf16.xpose.msra.mxu0 0
        %1008 = vmatpush.bf16.xpose.msra.mxu0 %v999
        %1009 = vmatmul.bf16.gmra.mxu0 %v996
        %v1010 = vpop.f32.mrf.mxu0
        %v1011 = vadd.f32 0.0, %v1010
        %v1012 = vpop.f32.mrf.mxu0
        %1013 = vdwg.mxu0
        %v1014 = vsel %vm867, %v1011, -inf
        %1015 = vmax.xlane.f32.xlu0 %v1014
        %v1016 = vpop.xlane.xlu0 %1015
        %v1017 = vsub.f32 %v1011, %v1016
        %v1018 = vmul.f32 %v1017, 1.442695
        %v1019 = vpow.pop %v1018
        %v1020 = vsel %vm867, %v1019, 0.0
        %1021 = vadd.xlane.f32.xlu0 %v1020
        %v1022 = vpop.xlane.xlu0 %1021
        %v1023 = vrcp.pop %v1022
        %v1024 = vmul.f32 %v1022, %v1023
        %v1025 = vsub.f32 1.0, %v1024
        %v1026 = vmul.f32 %v1023, %v1025
        %v1027 = vadd.f32 %v1023, %v1026
        %vm1028 = vweird.f32 %v1022
        %vm1029 = vweird.f32 %v1023
        %vm1030 = vmor %vm1028, %vm1029
        %v1031 = vsel %vm1030, %v1023, %v1027
        %v1032 = vand.u32 2147483647, %v1022
        %vm1033 = vcmp.eq.f32.partialorder %v1032, 8.507059e+37
        %v1034 = vand.u32 %v1022, 2147483648
        %v1035 = vor.u32 1.1754944e-38, %v1034
        %v1036 = vsel %vm1033, %v1035, %v1031
        %v1037 = vmul.f32 %v1019, %v1036
        %v1038 = vpack.c.bf16 %v1037, %v1037
        %1039 = vrot.lane.b32.xlu0 %v969, 64
        %v1040 = vpop.permute.xlu0 %1039
        %v1042 = vsel %vm867, %v1038, 0
        %v1045 = vsel %vm896, %v1040, 0
        %1047 = vmatpush.bf16.msra.mxu0 0
        %1048 = vmatpush.bf16.msra.mxu0 0
        %1049 = vmatpush.bf16.msra.mxu0 0
        %1050 = vmatpush.bf16.msra.mxu0 0
        %1051 = vmatpush.bf16.msra.mxu0 0
        %1052 = vmatpush.bf16.msra.mxu0 0
        %1053 = vmatpush.bf16.msra.mxu0 0
        %1054 = vmatpush.bf16.msra.mxu0 %v1045
        %1055 = vmatmul.bf16.gmra.mxu0 %v1042
        %v1056 = vpop.f32.mrf.mxu0
        %v1057 = vadd.f32 0.0, %v1056
        %v1058 = vpop.f32.mrf.mxu0
        %1059 = vdwg.mxu0
        %1060 = vrot.lane.b32.xlu0 %v915, 32
        %v1061 = vpop.permute.xlu0 %1060
        %1062 = vrot.lane.b32.xlu0 %v920, 32
        %v1063 = vpop.permute.xlu0 %1062
        %v1065 = vsel %vm847, %v1061, 0
        %v1068 = vsel %vm847, %v1063, 0
        %1070 = vmatpush.bf16.xpose.msra.mxu0 0
        %1071 = vmatpush.bf16.xpose.msra.mxu0 0
        %1072 = vmatpush.bf16.xpose.msra.mxu0 0
        %1073 = vmatpush.bf16.xpose.msra.mxu0 0
        %1074 = vmatpush.bf16.xpose.msra.mxu0 0
        %1075 = vmatpush.bf16.xpose.msra.mxu0 0
        %1076 = vmatpush.bf16.xpose.msra.mxu0 0
        %1077 = vmatpush.bf16.xpose.msra.mxu0 %v1068
        %1078 = vmatmul.bf16.gmra.mxu0 %v1065
        %v1079 = vpop.f32.mrf.mxu0
        %v1080 = vadd.f32 0.0, %v1079
        %v1081 = vpop.f32.mrf.mxu0
        %1082 = vdwg.mxu0
        %v1083 = vsel %vm867, %v1080, -inf
        %1084 = vmax.xlane.f32.xlu0 %v1083
        %v1085 = vpop.xlane.xlu0 %1084
        %v1086 = vsub.f32 %v1080, %v1085
        %v1087 = vmul.f32 %v1086, 1.442695
        %v1088 = vpow.pop %v1087
        %v1089 = vsel %vm867, %v1088, 0.0
        %1090 = vadd.xlane.f32.xlu0 %v1089
        %v1091 = vpop.xlane.xlu0 %1090
        %v1092 = vrcp.pop %v1091
        %v1093 = vmul.f32 %v1091, %v1092
        %v1094 = vsub.f32 1.0, %v1093
        %v1095 = vmul.f32 %v1092, %v1094
        %v1096 = vadd.f32 %v1092, %v1095
        %vm1097 = vweird.f32 %v1091
        %vm1098 = vweird.f32 %v1092
        %vm1099 = vmor %vm1097, %vm1098
        %v1100 = vsel %vm1099, %v1092, %v1096
        %v1101 = vand.u32 2147483647, %v1091
        %vm1102 = vcmp.eq.f32.partialorder %v1101, 8.507059e+37
        %v1103 = vand.u32 %v1091, 2147483648
        %v1104 = vor.u32 1.1754944e-38, %v1103
        %v1105 = vsel %vm1102, %v1104, %v1100
        %v1106 = vmul.f32 %v1088, %v1105
        %v1107 = vpack.c.bf16 %v1106, %v1106
        %1108 = vrot.lane.b32.xlu0 %v969, 32
        %v1109 = vpop.permute.xlu0 %1108
        %v1111 = vsel %vm867, %v1107, 0
        %v1114 = vsel %vm896, %v1109, 0
        %1116 = vmatpush.bf16.msra.mxu0 0
        %1117 = vmatpush.bf16.msra.mxu0 0
        %1118 = vmatpush.bf16.msra.mxu0 0
        %1119 = vmatpush.bf16.msra.mxu0 0
        %1120 = vmatpush.bf16.msra.mxu0 0
        %1121 = vmatpush.bf16.msra.mxu0 0
        %1122 = vmatpush.bf16.msra.mxu0 0
        %1123 = vmatpush.bf16.msra.mxu0 %v1114
        %1124 = vmatmul.bf16.gmra.mxu0 %v1111
        %v1125 = vpop.f32.mrf.mxu0
        %v1126 = vadd.f32 0.0, %v1125
        %v1127 = vpop.f32.mrf.mxu0
        %1128 = vdwg.mxu0
        %1130 = vrot.lane.b32.xlu0 %v988, 32
        %v1131 = vpop.permute.xlu0 %1130
        %1134 = vrot.lane.b32.xlu0 %v1057, 64
        %v1135 = vpop.permute.xlu0 %1134
        %1138 = vrot.lane.b32.xlu0 %v1126, 96
        %v1139 = vpop.permute.xlu0 %1138
        %v1141 = vsel %vm847, %v910, %v1131
        %vm1142 = vcmask 523264
        %v1143 = vsel %vm1142, %v1141, %v1135
        %vm1144 = vcmask 785408
        %v1145 = vsel %vm1144, %v1143, %v1139
        %v1146 = vpack.c.bf16 %v1145, %v1145
        %v1147 = vld [vmem:[#allocation10] sm:$0xf]
        %v1148 = vld [vmem:[#allocation10 + $0x4] sm:$0xf]
        %v1149 = vld [vmem:[#allocation10 + $0x8] sm:$0xf]
        %v1150 = vld [vmem:[#allocation10 + $0xc] sm:$0xf]
        %v1151 = vld [vmem:[#allocation10 + $0x10] sm:$0xf]
        %v1152 = vld [vmem:[#allocation10 + $0x14] sm:$0xf]
        %v1153 = vld [vmem:[#allocation10 + $0x18] sm:$0xf]
        %v1154 = vld [vmem:[#allocation10 + $0x1c] sm:$0xf]
        %v1155 = vld [vmem:[#allocation10 + $0x20] sm:$0xf]
        %v1156 = vld [vmem:[#allocation10 + $0x24] sm:$0xf]
        %v1157 = vld [vmem:[#allocation10 + $0x28] sm:$0xf]
        %v1158 = vld [vmem:[#allocation10 + $0x2c] sm:$0xf]
        %v1159 = vld [vmem:[#allocation10 + $0x30] sm:$0xf]
        %v1160 = vld [vmem:[#allocation10 + $0x34] sm:$0xf]
        %v1161 = vld [vmem:[#allocation10 + $0x38] sm:$0xf]
        %v1162 = vld [vmem:[#allocation10 + $0x3c] sm:$0xf]
        %v1163 = vld [vmem:[#allocation11] sm:$0x1]
        %v1165 = vperm.slane %v1163, 0
        %v1183 = vunpack.c.l.b16 %v1147
        %v1184 = vunpack.c.l.b16 %v1148
        %v1185 = vunpack.c.l.b16 %v1149
        %v1186 = vunpack.c.l.b16 %v1150
        %v1187 = vunpack.c.l.b16 %v1151
        %v1188 = vunpack.c.l.b16 %v1152
        %v1189 = vunpack.c.l.b16 %v1153
        %v1190 = vunpack.c.l.b16 %v1154
        %v1191 = vunpack.c.l.b16 %v1155
        %v1192 = vunpack.c.l.b16 %v1156
        %v1193 = vunpack.c.l.b16 %v1157
        %v1194 = vunpack.c.l.b16 %v1158
        %v1195 = vunpack.c.l.b16 %v1159
        %v1196 = vunpack.c.l.b16 %v1160
        %v1197 = vunpack.c.l.b16 %v1161
        %v1198 = vunpack.c.l.b16 %v1162
        %v1199 = vpack.c.b16 %v1184, %v1183
        %v1200 = vpack.c.b16 %v1186, %v1185
        %v1201 = vpack.c.b16 %v1188, %v1187
        %v1202 = vpack.c.b16 %v1190, %v1189
        %v1203 = vpack.c.b16 %v1192, %v1191
        %v1204 = vpack.c.b16 %v1194, %v1193
        %v1205 = vpack.c.b16 %v1196, %v1195
        %v1206 = vpack.c.b16 %v1198, %v1197
        %1215 = vmatpush.bf16.msra.mxu0 %v1206
        %1216 = vmatpush.bf16.msra.mxu0 %v1205
        %1217 = vmatpush.bf16.msra.mxu0 %v1204
        %1218 = vmatpush.bf16.msra.mxu0 %v1203
        %1219 = vmatpush.bf16.msra.mxu0 %v1202
        %1220 = vmatpush.bf16.msra.mxu0 %v1201
        %1221 = vmatpush.bf16.msra.mxu0 %v1200
        %1222 = vmatpush.bf16.msra.mxu0 %v1199
        %1223 = vmatmul.bf16.gmra.mxu0 %v1146
        %v1224 = vpop.f32.mrf.mxu0
        %v1225 = vadd.f32 %v1165, %v1224
        %v1226 = vpop.f32.mrf.mxu0
        %1227 = vdwg.mxu0
        %v1228 = vadd.f32 %v598, %v1225
        %v1229 = vld [vmem:[#allocation13] sm:$0x1]
        %v1230 = vld [vmem:[#allocation14] sm:$0x1]
        %1231 = vadd.xlane.f32.xlu0 %v1228
        %v1232 = vpop.xlane.xlu0 %1231
        %v1233 = vmul.f32 %v1232, %v609
        %v1234 = vsub.f32 %v1228, %v1233
        %v1235 = vmul.f32 %v1234, %v1234
        %1236 = vadd.xlane.f32.xlu0 %v1235
        %v1237 = vpop.xlane.xlu0 %1236
        %v1238 = vmul.f32 %v1237, %v609
        %v1239 = vadd.f32 %v1238, 1e-05
        %v1240 = vrsqrt.pop %v1239
        %v1241 = vmul.f32 %v1240, %v1239
        %v1242 = vmul.f32 %v1241, %v1240
        %v1243 = vmul.f32 0.5, %v1242
        %v1244 = vsub.f32 1.5, %v1243
        %v1245 = vmul.f32 %v1240, %v1244
        %vm1246 = vweird.f32 %v1239
        %vm1247 = vweird.f32 %v1240
        %vm1248 = vmor %vm1246, %vm1247
        %v1249 = vsel %vm1248, %v1240, %v1245
        %v1250 = vmul.f32 %v1234, %v1249
        %v1252 = vperm.slane %v1229, 0
        %v1254 = vmul.f32 %v1250, %v1252
        %v1256 = vperm.slane %v1230, 0
        %v1258 = vadd.f32 %v1254, %v1256
        %v1259 = vpack.c.bf16 %v1258, %v1258
        %v1260 = vld [vmem:[#allocation16] sm:$0xff]
        %v1261 = vld [vmem:[#allocation16 + $0x8] sm:$0xff]
        %v1262 = vld [vmem:[#allocation16 + $0x10] sm:$0xff]
        %v1263 = vld [vmem:[#allocation16 + $0x18] sm:$0xff]
        %v1264 = vld [vmem:[#allocation16 + $0x20] sm:$0xff]
        %v1265 = vld [vmem:[#allocation16 + $0x28] sm:$0xff]
        %v1266 = vld [vmem:[#allocation16 + $0x30] sm:$0xff]
        %v1267 = vld [vmem:[#allocation16 + $0x38] sm:$0xff]
        %v1268 = vld [vmem:[#allocation16 + $0x40] sm:$0xff]
        %v1269 = vld [vmem:[#allocation16 + $0x48] sm:$0xff]
        %v1270 = vld [vmem:[#allocation16 + $0x50] sm:$0xff]
        %v1271 = vld [vmem:[#allocation16 + $0x58] sm:$0xff]
        %v1272 = vld [vmem:[#allocation16 + $0x60] sm:$0xff]
        %v1273 = vld [vmem:[#allocation16 + $0x68] sm:$0xff]
        %v1274 = vld [vmem:[#allocation16 + $0x70] sm:$0xff]
        %v1275 = vld [vmem:[#allocation16 + $0x78] sm:$0xff]
        %v1276 = vld [vmem:[#allocation16 + $0x80] sm:$0xff]
        %v1277 = vld [vmem:[#allocation16 + $0x88] sm:$0xff]
        %v1278 = vld [vmem:[#allocation16 + $0x90] sm:$0xff]
        %v1279 = vld [vmem:[#allocation16 + $0x98] sm:$0xff]
        %v1280 = vld [vmem:[#allocation16 + $0xa0] sm:$0xff]
        %v1281 = vld [vmem:[#allocation16 + $0xa8] sm:$0xff]
        %v1282 = vld [vmem:[#allocation16 + $0xb0] sm:$0xff]
        %v1283 = vld [vmem:[#allocation16 + $0xb8] sm:$0xff]
        %v1284 = vld [vmem:[#allocation16 + $0xc0] sm:$0xff]
        %v1285 = vld [vmem:[#allocation16 + $0xc8] sm:$0xff]
        %v1286 = vld [vmem:[#allocation16 + $0xd0] sm:$0xff]
        %v1287 = vld [vmem:[#allocation16 + $0xd8] sm:$0xff]
        %v1288 = vld [vmem:[#allocation16 + $0xe0] sm:$0xff]
        %v1289 = vld [vmem:[#allocation16 + $0xe8] sm:$0xff]
        %v1290 = vld [vmem:[#allocation16 + $0xf0] sm:$0xff]
        %v1291 = vld [vmem:[#allocation16 + $0xf8] sm:$0xff]
        %v1292 = vld [vmem:[%s10] sm:$0xf]
        %v1294 = vperm.slane %v1292, 0
        %v1295 = vperm.slane %v1292, 1
        %v1296 = vperm.slane %v1292, 2
        %v1297 = vperm.slane %v1292, 3
        %v1334 = vunpack.c.l.b16 %v1260
        %v1335 = vunpack.c.h.b16 %v1260
        %v1336 = vunpack.c.l.b16 %v1261
        %v1337 = vunpack.c.h.b16 %v1261
        %v1338 = vunpack.c.l.b16 %v1262
        %v1339 = vunpack.c.h.b16 %v1262
        %v1340 = vunpack.c.l.b16 %v1263
        %v1341 = vunpack.c.h.b16 %v1263
        %v1342 = vunpack.c.l.b16 %v1264
        %v1343 = vunpack.c.h.b16 %v1264
        %v1344 = vunpack.c.l.b16 %v1265
        %v1345 = vunpack.c.h.b16 %v1265
        %v1346 = vunpack.c.l.b16 %v1266
        %v1347 = vunpack.c.h.b16 %v1266
        %v1348 = vunpack.c.l.b16 %v1267
        %v1349 = vunpack.c.h.b16 %v1267
        %v1350 = vunpack.c.l.b16 %v1268
        %v1351 = vunpack.c.h.b16 %v1268
        %v1352 = vunpack.c.l.b16 %v1269
        %v1353 = vunpack.c.h.b16 %v1269
        %v1354 = vunpack.c.l.b16 %v1270
        %v1355 = vunpack.c.h.b16 %v1270
        %v1356 = vunpack.c.l.b16 %v1271
        %v1357 = vunpack.c.h.b16 %v1271
        %v1358 = vunpack.c.l.b16 %v1272
        %v1359 = vunpack.c.h.b16 %v1272
        %v1360 = vunpack.c.l.b16 %v1273
        %v1361 = vunpack.c.h.b16 %v1273
        %v1362 = vunpack.c.l.b16 %v1274
        %v1363 = vunpack.c.h.b16 %v1274
        %v1364 = vunpack.c.l.b16 %v1275
        %v1365 = vunpack.c.h.b16 %v1275
        %v1366 = vunpack.c.l.b16 %v1276
        %v1367 = vunpack.c.h.b16 %v1276
        %v1368 = vunpack.c.l.b16 %v1277
        %v1369 = vunpack.c.h.b16 %v1277
        %v1370 = vunpack.c.l.b16 %v1278
        %v1371 = vunpack.c.h.b16 %v1278
        %v1372 = vunpack.c.l.b16 %v1279
        %v1373 = vunpack.c.h.b16 %v1279
        %v1374 = vunpack.c.l.b16 %v1280
        %v1375 = vunpack.c.h.b16 %v1280
        %v1376 = vunpack.c.l.b16 %v1281
        %v1377 = vunpack.c.h.b16 %v1281
        %v1378 = vunpack.c.l.b16 %v1282
        %v1379 = vunpack.c.h.b16 %v1282
        %v1380 = vunpack.c.l.b16 %v1283
        %v1381 = vunpack.c.h.b16 %v1283
        %v1382 = vunpack.c.l.b16 %v1284
        %v1383 = vunpack.c.h.b16 %v1284
        %v1384 = vunpack.c.l.b16 %v1285
        %v1385 = vunpack.c.h.b16 %v1285
        %v1386 = vunpack.c.l.b16 %v1286
        %v1387 = vunpack.c.h.b16 %v1286
        %v1388 = vunpack.c.l.b16 %v1287
        %v1389 = vunpack.c.h.b16 %v1287
        %v1390 = vunpack.c.l.b16 %v1288
        %v1391 = vunpack.c.h.b16 %v1288
        %v1392 = vunpack.c.l.b16 %v1289
        %v1393 = vunpack.c.h.b16 %v1289
        %v1394 = vunpack.c.l.b16 %v1290
        %v1395 = vunpack.c.h.b16 %v1290
        %v1396 = vunpack.c.l.b16 %v1291
        %v1397 = vunpack.c.h.b16 %v1291
        %v1398 = vpack.c.b16 %v1338, %v1334
        %v1399 = vpack.c.b16 %v1339, %v1335
        %v1400 = vpack.c.b16 %v1340, %v1336
        %v1401 = vpack.c.b16 %v1341, %v1337
        %v1402 = vpack.c.b16 %v1346, %v1342
        %v1403 = vpack.c.b16 %v1347, %v1343
        %v1404 = vpack.c.b16 %v1348, %v1344
        %v1405 = vpack.c.b16 %v1349, %v1345
        %v1406 = vpack.c.b16 %v1354, %v1350
        %v1407 = vpack.c.b16 %v1355, %v1351
        %v1408 = vpack.c.b16 %v1356, %v1352
        %v1409 = vpack.c.b16 %v1357, %v1353
        %v1410 = vpack.c.b16 %v1362, %v1358
        %v1411 = vpack.c.b16 %v1363, %v1359
        %v1412 = vpack.c.b16 %v1364, %v1360
        %v1413 = vpack.c.b16 %v1365, %v1361
        %v1414 = vpack.c.b16 %v1370, %v1366
        %v1415 = vpack.c.b16 %v1371, %v1367
        %v1416 = vpack.c.b16 %v1372, %v1368
        %v1417 = vpack.c.b16 %v1373, %v1369
        %v1418 = vpack.c.b16 %v1378, %v1374
        %v1419 = vpack.c.b16 %v1379, %v1375
        %v1420 = vpack.c.b16 %v1380, %v1376
        %v1421 = vpack.c.b16 %v1381, %v1377
        %v1422 = vpack.c.b16 %v1386, %v1382
        %v1423 = vpack.c.b16 %v1387, %v1383
        %v1424 = vpack.c.b16 %v1388, %v1384
        %v1425 = vpack.c.b16 %v1389, %v1385
        %v1426 = vpack.c.b16 %v1394, %v1390
        %v1427 = vpack.c.b16 %v1395, %v1391
        %v1428 = vpack.c.b16 %v1396, %v1392
        %v1429 = vpack.c.b16 %v1397, %v1393
        %1462 = vmatpush.bf16.msra.mxu0 %v1426
        %1463 = vmatpush.bf16.msra.mxu0 %v1422
        %1464 = vmatpush.bf16.msra.mxu0 %v1418
        %1465 = vmatpush.bf16.msra.mxu0 %v1414
        %1466 = vmatpush.bf16.msra.mxu0 %v1410
        %1467 = vmatpush.bf16.msra.mxu0 %v1406
        %1468 = vmatpush.bf16.msra.mxu0 %v1402
        %1469 = vmatpush.bf16.msra.mxu0 %v1398
        %1470 = vmatmul.bf16.gmra.mxu0 %v1259
        %v1471 = vpop.f32.mrf.mxu0
        %v1472 = vadd.f32 %v1294, %v1471
        %v1473 = vpop.f32.mrf.mxu0
        %1474 = vdwg.mxu0
        %1475 = vmatpush.bf16.msra.mxu0 %v1427
        %1476 = vmatpush.bf16.msra.mxu0 %v1423
        %1477 = vmatpush.bf16.msra.mxu0 %v1419
        %1478 = vmatpush.bf16.msra.mxu0 %v1415
        %1479 = vmatpush.bf16.msra.mxu0 %v1411
        %1480 = vmatpush.bf16.msra.mxu0 %v1407
        %1481 = vmatpush.bf16.msra.mxu0 %v1403
        %1482 = vmatpush.bf16.msra.mxu0 %v1399
        %1483 = vmatmul.bf16.gmra.mxu0 %v1259
        %v1484 = vpop.f32.mrf.mxu0
        %v1485 = vadd.f32 %v1295, %v1484
        %v1486 = vpop.f32.mrf.mxu0
        %1487 = vdwg.mxu0
        %1488 = vmatpush.bf16.msra.mxu0 %v1428
        %1489 = vmatpush.bf16.msra.mxu0 %v1424
        %1490 = vmatpush.bf16.msra.mxu0 %v1420
        %1491 = vmatpush.bf16.msra.mxu0 %v1416
        %1492 = vmatpush.bf16.msra.mxu0 %v1412
        %1493 = vmatpush.bf16.msra.mxu0 %v1408
        %1494 = vmatpush.bf16.msra.mxu0 %v1404
        %1495 = vmatpush.bf16.msra.mxu0 %v1400
        %1496 = vmatmul.bf16.gmra.mxu0 %v1259
        %v1497 = vpop.f32.mrf.mxu0
        %v1498 = vadd.f32 %v1296, %v1497
        %v1499 = vpop.f32.mrf.mxu0
        %1500 = vdwg.mxu0
        %1501 = vmatpush.bf16.msra.mxu0 %v1429
        %1502 = vmatpush.bf16.msra.mxu0 %v1425
        %1503 = vmatpush.bf16.msra.mxu0 %v1421
        %1504 = vmatpush.bf16.msra.mxu0 %v1417
        %1505 = vmatpush.bf16.msra.mxu0 %v1413
        %1506 = vmatpush.bf16.msra.mxu0 %v1409
        %1507 = vmatpush.bf16.msra.mxu0 %v1405
        %1508 = vmatpush.bf16.msra.mxu0 %v1401
        %1509 = vmatmul.bf16.gmra.mxu0 %v1259
        %v1510 = vpop.f32.mrf.mxu0
        %v1511 = vadd.f32 %v1297, %v1510
        %v1512 = vpop.f32.mrf.mxu0
        %1513 = vdwg.mxu0
        %v1514 = vmax.f32 %v1472, 0.0
        %v1515 = vmax.f32 %v1485, 0.0
        %v1516 = vmax.f32 %v1498, 0.0
        %v1517 = vmax.f32 %v1511, 0.0
        %v1518 = vpack.c.bf16 %v1514, %v1514
        %v1519 = vpack.c.bf16 %v1515, %v1515
        %v1520 = vpack.c.bf16 %v1516, %v1516
        %v1521 = vpack.c.bf16 %v1517, %v1517
        %v1522 = vld [vmem:[#allocation17] sm:$0xf]
        %v1523 = vld [vmem:[#allocation17 + $0x4] sm:$0xf]
        %v1524 = vld [vmem:[#allocation17 + $0x8] sm:$0xf]
        %v1525 = vld [vmem:[#allocation17 + $0xc] sm:$0xf]
        %v1526 = vld [vmem:[#allocation17 + $0x10] sm:$0xf]
        %v1527 = vld [vmem:[#allocation17 + $0x14] sm:$0xf]
        %v1528 = vld [vmem:[#allocation17 + $0x18] sm:$0xf]
        %v1529 = vld [vmem:[#allocation17 + $0x1c] sm:$0xf]
        %v1530 = vld [vmem:[#allocation17 + $0x20] sm:$0xf]
        %v1531 = vld [vmem:[#allocation17 + $0x24] sm:$0xf]
        %v1532 = vld [vmem:[#allocation17 + $0x28] sm:$0xf]
        %v1533 = vld [vmem:[#allocation17 + $0x2c] sm:$0xf]
        %v1534 = vld [vmem:[#allocation17 + $0x30] sm:$0xf]
        %v1535 = vld [vmem:[#allocation17 + $0x34] sm:$0xf]
        %v1536 = vld [vmem:[#allocation17 + $0x38] sm:$0xf]
        %v1537 = vld [vmem:[#allocation17 + $0x3c] sm:$0xf]
        %v1538 = vld [vmem:[#allocation17 + $0x40] sm:$0xf]
        %v1539 = vld [vmem:[#allocation17 + $0x44] sm:$0xf]
        %v1540 = vld [vmem:[#allocation17 + $0x48] sm:$0xf]
        %v1541 = vld [vmem:[#allocation17 + $0x4c] sm:$0xf]
        %v1542 = vld [vmem:[#allocation17 + $0x50] sm:$0xf]
        %v1543 = vld [vmem:[#allocation17 + $0x54] sm:$0xf]
        %v1544 = vld [vmem:[#allocation17 + $0x58] sm:$0xf]
        %v1545 = vld [vmem:[#allocation17 + $0x5c] sm:$0xf]
        %v1546 = vld [vmem:[#allocation17 + $0x60] sm:$0xf]
        %v1547 = vld [vmem:[#allocation17 + $0x64] sm:$0xf]
        %v1548 = vld [vmem:[#allocation17 + $0x68] sm:$0xf]
        %v1549 = vld [vmem:[#allocation17 + $0x6c] sm:$0xf]
        %v1550 = vld [vmem:[#allocation17 + $0x70] sm:$0xf]
        %v1551 = vld [vmem:[#allocation17 + $0x74] sm:$0xf]
        %v1552 = vld [vmem:[#allocation17 + $0x78] sm:$0xf]
        %v1553 = vld [vmem:[#allocation17 + $0x7c] sm:$0xf]
        %v1554 = vld [vmem:[#allocation17 + $0x80] sm:$0xf]
        %v1555 = vld [vmem:[#allocation17 + $0x84] sm:$0xf]
        %v1556 = vld [vmem:[#allocation17 + $0x88] sm:$0xf]
        %v1557 = vld [vmem:[#allocation17 + $0x8c] sm:$0xf]
        %v1558 = vld [vmem:[#allocation17 + $0x90] sm:$0xf]
        %v1559 = vld [vmem:[#allocation17 + $0x94] sm:$0xf]
        %v1560 = vld [vmem:[#allocation17 + $0x98] sm:$0xf]
        %v1561 = vld [vmem:[#allocation17 + $0x9c] sm:$0xf]
        %v1562 = vld [vmem:[#allocation17 + $0xa0] sm:$0xf]
        %v1563 = vld [vmem:[#allocation17 + $0xa4] sm:$0xf]
        %v1564 = vld [vmem:[#allocation17 + $0xa8] sm:$0xf]
        %v1565 = vld [vmem:[#allocation17 + $0xac] sm:$0xf]
        %v1566 = vld [vmem:[#allocation17 + $0xb0] sm:$0xf]
        %v1567 = vld [vmem:[#allocation17 + $0xb4] sm:$0xf]
        %v1568 = vld [vmem:[#allocation17 + $0xb8] sm:$0xf]
        %v1569 = vld [vmem:[#allocation17 + $0xbc] sm:$0xf]
        %v1570 = vld [vmem:[#allocation17 + $0xc0] sm:$0xf]
        %v1571 = vld [vmem:[#allocation17 + $0xc4] sm:$0xf]
        %v1572 = vld [vmem:[#allocation17 + $0xc8] sm:$0xf]
        %v1573 = vld [vmem:[#allocation17 + $0xcc] sm:$0xf]
        %v1574 = vld [vmem:[#allocation17 + $0xd0] sm:$0xf]
        %v1575 = vld [vmem:[#allocation17 + $0xd4] sm:$0xf]
        %v1576 = vld [vmem:[#allocation17 + $0xd8] sm:$0xf]
        %v1577 = vld [vmem:[#allocation17 + $0xdc] sm:$0xf]
        %v1578 = vld [vmem:[#allocation17 + $0xe0] sm:$0xf]
        %v1579 = vld [vmem:[#allocation17 + $0xe4] sm:$0xf]
        %v1580 = vld [vmem:[#allocation17 + $0xe8] sm:$0xf]
        %v1581 = vld [vmem:[#allocation17 + $0xec] sm:$0xf]
        %v1582 = vld [vmem:[#allocation17 + $0xf0] sm:$0xf]
        %v1583 = vld [vmem:[#allocation17 + $0xf4] sm:$0xf]
        %v1584 = vld [vmem:[#allocation17 + $0xf8] sm:$0xf]
        %v1585 = vld [vmem:[#allocation17 + $0xfc] sm:$0xf]
        %v1586 = vld [vmem:[%s12] sm:$0x1]
        %v1588 = vperm.slane %v1586, 0
        %v1654 = vunpack.c.l.b16 %v1522
        %v1655 = vunpack.c.l.b16 %v1523
        %v1656 = vunpack.c.l.b16 %v1524
        %v1657 = vunpack.c.l.b16 %v1525
        %v1658 = vunpack.c.l.b16 %v1526
        %v1659 = vunpack.c.l.b16 %v1527
        %v1660 = vunpack.c.l.b16 %v1528
        %v1661 = vunpack.c.l.b16 %v1529
        %v1662 = vunpack.c.l.b16 %v1530
        %v1663 = vunpack.c.l.b16 %v1531
        %v1664 = vunpack.c.l.b16 %v1532
        %v1665 = vunpack.c.l.b16 %v1533
        %v1666 = vunpack.c.l.b16 %v1534
        %v1667 = vunpack.c.l.b16 %v1535
        %v1668 = vunpack.c.l.b16 %v1536
        %v1669 = vunpack.c.l.b16 %v1537
        %v1670 = vunpack.c.l.b16 %v1538
        %v1671 = vunpack.c.l.b16 %v1539
        %v1672 = vunpack.c.l.b16 %v1540
        %v1673 = vunpack.c.l.b16 %v1541
        %v1674 = vunpack.c.l.b16 %v1542
        %v1675 = vunpack.c.l.b16 %v1543
        %v1676 = vunpack.c.l.b16 %v1544
        %v1677 = vunpack.c.l.b16 %v1545
        %v1678 = vunpack.c.l.b16 %v1546
        %v1679 = vunpack.c.l.b16 %v1547
        %v1680 = vunpack.c.l.b16 %v1548
        %v1681 = vunpack.c.l.b16 %v1549
        %v1682 = vunpack.c.l.b16 %v1550
        %v1683 = vunpack.c.l.b16 %v1551
        %v1684 = vunpack.c.l.b16 %v1552
        %v1685 = vunpack.c.l.b16 %v1553
        %v1686 = vunpack.c.l.b16 %v1554
        %v1687 = vunpack.c.l.b16 %v1555
        %v1688 = vunpack.c.l.b16 %v1556
        %v1689 = vunpack.c.l.b16 %v1557
        %v1690 = vunpack.c.l.b16 %v1558
        %v1691 = vunpack.c.l.b16 %v1559
        %v1692 = vunpack.c.l.b16 %v1560
        %v1693 = vunpack.c.l.b16 %v1561
        %v1694 = vunpack.c.l.b16 %v1562
        %v1695 = vunpack.c.l.b16 %v1563
        %v1696 = vunpack.c.l.b16 %v1564
        %v1697 = vunpack.c.l.b16 %v1565
        %v1698 = vunpack.c.l.b16 %v1566
        %v1699 = vunpack.c.l.b16 %v1567
        %v1700 = vunpack.c.l.b16 %v1568
        %v1701 = vunpack.c.l.b16 %v1569
        %v1702 = vunpack.c.l.b16 %v1570
        %v1703 = vunpack.c.l.b16 %v1571
        %v1704 = vunpack.c.l.b16 %v1572
        %v1705 = vunpack.c.l.b16 %v1573
        %v1706 = vunpack.c.l.b16 %v1574
        %v1707 = vunpack.c.l.b16 %v1575
        %v1708 = vunpack.c.l.b16 %v1576
        %v1709 = vunpack.c.l.b16 %v1577
        %v1710 = vunpack.c.l.b16 %v1578
        %v1711 = vunpack.c.l.b16 %v1579
        %v1712 = vunpack.c.l.b16 %v1580
        %v1713 = vunpack.c.l.b16 %v1581
        %v1714 = vunpack.c.l.b16 %v1582
        %v1715 = vunpack.c.l.b16 %v1583
        %v1716 = vunpack.c.l.b16 %v1584
        %v1717 = vunpack.c.l.b16 %v1585
        %v1718 = vpack.c.b16 %v1655, %v1654
        %v1719 = vpack.c.b16 %v1657, %v1656
        %v1720 = vpack.c.b16 %v1659, %v1658
        %v1721 = vpack.c.b16 %v1661, %v1660
        %v1722 = vpack.c.b16 %v1663, %v1662
        %v1723 = vpack.c.b16 %v1665, %v1664
        %v1724 = vpack.c.b16 %v1667, %v1666
        %v1725 = vpack.c.b16 %v1669, %v1668
        %v1726 = vpack.c.b16 %v1671, %v1670
        %v1727 = vpack.c.b16 %v1673, %v1672
        %v1728 = vpack.c.b16 %v1675, %v1674
        %v1729 = vpack.c.b16 %v1677, %v1676
        %v1730 = vpack.c.b16 %v1679, %v1678
        %v1731 = vpack.c.b16 %v1681, %v1680
        %v1732 = vpack.c.b16 %v1683, %v1682
        %v1733 = vpack.c.b16 %v1685, %v1684
        %v1734 = vpack.c.b16 %v1687, %v1686
        %v1735 = vpack.c.b16 %v1689, %v1688
        %v1736 = vpack.c.b16 %v1691, %v1690
        %v1737 = vpack.c.b16 %v1693, %v1692
        %v1738 = vpack.c.b16 %v1695, %v1694
        %v1739 = vpack.c.b16 %v1697, %v1696
        %v1740 = vpack.c.b16 %v1699, %v1698
        %v1741 = vpack.c.b16 %v1701, %v1700
        %v1742 = vpack.c.b16 %v1703, %v1702
        %v1743 = vpack.c.b16 %v1705, %v1704
        %v1744 = vpack.c.b16 %v1707, %v1706
        %v1745 = vpack.c.b16 %v1709, %v1708
        %v1746 = vpack.c.b16 %v1711, %v1710
        %v1747 = vpack.c.b16 %v1713, %v1712
        %v1748 = vpack.c.b16 %v1715, %v1714
        %v1749 = vpack.c.b16 %v1717, %v1716
        %1782 = vmatpush.bf16.msra.mxu0 %v1725
        %1783 = vmatpush.bf16.msra.mxu0 %v1724
        %1784 = vmatpush.bf16.msra.mxu0 %v1723
        %1785 = vmatpush.bf16.msra.mxu0 %v1722
        %1786 = vmatpush.bf16.msra.mxu0 %v1721
        %1787 = vmatpush.bf16.msra.mxu0 %v1720
        %1788 = vmatpush.bf16.msra.mxu0 %v1719
        %1789 = vmatpush.bf16.msra.mxu0 %v1718
        %1790 = vmatmul.bf16.gmra.mxu0 %v1518
        %v1791 = vpop.f32.mrf.mxu0
        %v1792 = vadd.f32 %v1588, %v1791
        %v1793 = vpop.f32.mrf.mxu0
        %1794 = vdwg.mxu0
        %1795 = vmatpush.bf16.msra.mxu0 %v1733
        %1796 = vmatpush.bf16.msra.mxu0 %v1732
        %1797 = vmatpush.bf16.msra.mxu0 %v1731
        %1798 = vmatpush.bf16.msra.mxu0 %v1730
        %1799 = vmatpush.bf16.msra.mxu0 %v1729
        %1800 = vmatpush.bf16.msra.mxu0 %v1728
        %1801 = vmatpush.bf16.msra.mxu0 %v1727
        %1802 = vmatpush.bf16.msra.mxu0 %v1726
        %1803 = vmatmul.bf16.gmra.mxu0 %v1519
        %v1804 = vpop.f32.mrf.mxu0
        %v1805 = vadd.f32 %v1792, %v1804
        %v1806 = vpop.f32.mrf.mxu0
        %1807 = vdwg.mxu0
        %1808 = vmatpush.bf16.msra.mxu0 %v1741
        %1809 = vmatpush.bf16.msra.mxu0 %v1740
        %1810 = vmatpush.bf16.msra.mxu0 %v1739
        %1811 = vmatpush.bf16.msra.mxu0 %v1738
        %1812 = vmatpush.bf16.msra.mxu0 %v1737
        %1813 = vmatpush.bf16.msra.mxu0 %v1736
        %1814 = vmatpush.bf16.msra.mxu0 %v1735
        %1815 = vmatpush.bf16.msra.mxu0 %v1734
        %1816 = vmatmul.bf16.gmra.mxu0 %v1520
        %v1817 = vpop.f32.mrf.mxu0
        %v1818 = vadd.f32 %v1805, %v1817
        %v1819 = vpop.f32.mrf.mxu0
        %1820 = vdwg.mxu0
        %1821 = vmatpush.bf16.msra.mxu0 %v1749
        %1822 = vmatpush.bf16.msra.mxu0 %v1748
        %1823 = vmatpush.bf16.msra.mxu0 %v1747
        %1824 = vmatpush.bf16.msra.mxu0 %v1746
        %1825 = vmatpush.bf16.msra.mxu0 %v1745
        %1826 = vmatpush.bf16.msra.mxu0 %v1744
        %1827 = vmatpush.bf16.msra.mxu0 %v1743
        %1828 = vmatpush.bf16.msra.mxu0 %v1742
        %1829 = vmatmul.bf16.gmra.mxu0 %v1521
        %v1830 = vpop.f32.mrf.mxu0
        %v1831 = vadd.f32 %v1818, %v1830
        %v1832 = vpop.f32.mrf.mxu0
        %1833 = vdwg.mxu0
        %v1834 = vadd.f32 %v1228, %v1831
        %1835 = vst [vmem:[%s596] sm:$0xff] %v1834
        %s1836 = sand.u32 %s321, 1
        %s1837 = scalar_lea.sflag [#allocation4], %s1836
        %s1838 = sand.u32 %s321, 1
        %s1839 = smul.addr %s1838, 8
        %s1840 = scalar_lea.vmem [#allocation19], %s1839
        // Predicated region
        $region113: #{tpu_custom_call.1} parent=71 // pred_check
          %p1841 = pneg %p331
        $region114: #{tpu_custom_call.1} parent=71 // pred_check_branch
          %1843 = sbr.rel (%p1841) target = $region116
        $region115: #{tpu_custom_call.1} parent=71 // pred_region
          %1845 = vsyncadd %s1837, 0
          %s1846 = smul.addr %s35, 8
          %s1847 = scalar_lea.hbm %s13, %s1846
          %s1849 = sshll.u32 %s1840, 4
          %s1850 = int_to_ptr.vmem [resolvable:$true] %s1849
          %s1851 = sshll.u32 %s1847, 4
          %s1852 = int_to_ptr.hbm [resolvable:$true] %s1851
          %1854 = dma.vmem_to_hbm [thread:$0]  %s1850, 128, %s1852, %s1837
        $region116: #{tpu_custom_call.1} parent=71 // pred_fallthru
          _
      $region72: #{tpu_custom_call.1} parent=5 // pred_fallthru
        _
      %p1855 = scmp.le.s32.totalorder 2, %s30
      // Predicated region
      $region117: #{tpu_custom_call.1} parent=5 // pred_check
        %p1856 = pneg %p1855
      $region118: #{tpu_custom_call.1} parent=5 // pred_check_branch
        %1858 = sbr.rel (%p1856) target = $region120
      $region119: #{tpu_custom_call.1} parent=5 // pred_region
        %s1859 = ssub.s32 %s30, 2
        // Predicated region
        $region121: #{tpu_custom_call.1} parent=119 // pred_check
          %p1860 = pneg %p337
        $region122: #{tpu_custom_call.1} parent=119 // pred_check_branch
          %1862 = sbr.rel (%p1860) target = $region124
        $region123: #{tpu_custom_call.1} parent=119 // pred_region
          %s1863 = sand.u32 %s322, 1
          %s1864 = scalar_lea.sflag [#allocation4], %s1863
          %s1865 = sand.u32 %s322, 1
          %s1866 = smul.addr %s1865, 8
          %s1867 = scalar_lea.vmem [#allocation19], %s1866
          %1869 = dma.done %s1864, 128
        $region124: #{tpu_custom_call.1} parent=119 // pred_fallthru
          _
      $region120: #{tpu_custom_call.1} parent=5 // pred_fallthru
        _
    $region6: #{tpu_custom_call.1} parent=1 // loop_footer
      %s34 = sadd.s32 1, %s30
    $region7: #{tpu_custom_call.1} parent=1 // loop_footer_branch
      %29 = sbr.rel target = $region3
    $region8: #{tpu_custom_call.1} parent=1 // loop_exit
      _
    %1870 = vsyncpa [#allocation3], 1
    %s1871 = scalar_lea.sflag [#allocation3], 1
    %1872 = vsyncpa %s1871, 1
    %1873 = vsyncpa [#allocation6], 1
    %1874 = vsyncpa [#allocation9], 1
    %1875 = vsyncpa [#allocation12], 1
    %1876 = vsyncpa [#allocation15], 1
    %1877 = vsyncpa [#allocation18], 1
    %1878 = vsyncpa [#allocation4], 1
    %s1879 = scalar_lea.sflag [#allocation4], 1
    %1880 = vsyncpa %s1879, 1

// kernel: tpu_custom_call.1
$region0: #{tpu_custom_call.1}
  #allocation0 [shape = 'u32[]', space=smem, size = 0x4, offset = 0x4, fixed_abs, tag = 'smem constant byte address 0x4 - core index']
  #allocation1 [shape = 'u32[72,128]{1,0:T(1,128)}', space=vmem, size = 0x9000, scoped, tag = 'internal scratch']
  %s0 = inlined_call_operand.hbm [shape: f32[2,8,128], index: 0, kind: input, shape index: {}]
  %s1 = inlined_call_operand.hbm [shape: f32[1,128], index: 1, kind: input, shape index: {}]
  %s2 = inlined_call_operand.hbm [shape: f32[1,128], index: 2, kind: input, shape index: {}]
  %s3 = inlined_call_operand.hbm [shape: bf16[128,384], index: 3, kind: input, shape index: {}]
  %s4 = inlined_call_operand.vmem [shape: f32[1,384], index: 4, kind: input, shape index: {}]
  %s5 = inlined_call_operand.hbm [shape: bf16[128,128], index: 5, kind: input, shape index: {}]
  %s6 = inlined_call_operand.hbm [shape: f32[1,128], index: 6, kind: input, shape index: {}]
  %s7 = inlined_call_operand.hbm [shape: f32[1,128], index: 7, kind: input, shape index: {}]
  %s8 = inlined_call_operand.hbm [shape: f32[1,128], index: 8, kind: input, shape index: {}]
  %s9 = inlined_call_operand.hbm [shape: bf16[128,512], index: 9, kind: input, shape index: {}]
  %s10 = inlined_call_operand.vmem [shape: f32[1,512], index: 10, kind: input, shape index: {}]
  %s11 = inlined_call_operand.hbm [shape: bf16[512,128], index: 11, kind: input, shape index: {}]
  %s12 = inlined_call_operand.vmem [shape: f32[1,128], index: 12, kind: input, shape index: {}]
  %s13 = inlined_call_operand.hbm [shape: f32[2,8,128], index: 13, kind: output, shape index: {}]
  %s14 = sld [smem:[#allocation0]]
  $region125: #{tpu_custom_call.1} parent=0
    _
  %s16 = ssub.s32 1, %s14
  %s17 = scalar_select 0, %s16, %s14
  $region1: #{tpu_custom_call.1} parent=0
    #allocation2 [shape = 'u8[8192]{0}', space=vmem, size = 0x2000, scoped, tag = 'input window, operand 0']
    #allocation3 [shape = 's32[2]{0}', space=sflag, size = 0x8, scoped, tag = 'scoped memory for tpu_custom_call.1']
    #allocation4 [shape = 's32[2]{0}', space=sflag, size = 0x8, scoped, tag = 'scoped memory for tpu_custom_call.1']
    #allocation5 [shape = 'u8[512]{0}', space=vmem, size = 0x400, scoped, tag = 'input window, operand 1, single buffered']
    #allocation6 [shape = 's32[1]{0}', space=sflag, size = 0x4, scoped, tag = 'scoped memory for tpu_custom_call.1']
    #allocation7 [shape = 'u8[512]{0}', space=vmem, size = 0x400, scoped, tag = 'input window, operand 2, single buffered']
    #allocation8 [shape = 'u8[98304]{0}', space=vmem, size = 0x18000, scoped, tag = 'input window, operand 3, single buffered']
    #allocation9 [shape = 's32[1]{0}', space=sflag, size = 0x4, scoped, tag = 'scoped memory for tpu_custom_call.1']
    #allocation10 [shape = 'u8[32768]{0}', space=vmem, size = 0x8000, scoped, tag = 'input window, operand 5, single buffered']
    #allocation11 [shape = 'u8[512]{0}', space=vmem, size = 0x400, scoped, tag = 'input window, operand 6, single buffered']
    #allocation12 [shape = 's32[1]{0}', space=sflag, size = 0x4, scoped, tag = 'scoped memory for tpu_custom_call.1']
    #allocation13 [shape = 'u8[512]{0}', space=vmem, size = 0x400, scoped, tag = 'input window, operand 7, single buffered']
    #allocation14 [shape = 'u8[512]{0}', space=vmem, size = 0x400, scoped, tag = 'input window, operand 8, single buffered']
    #allocation15 [shape = 's32[1]{0}', space=sflag, size = 0x4, scoped, tag = 'scoped memory for tpu_custom_call.1']
    #allocation16 [shape = 'u8[131072]{0}', space=vmem, size = 0x20000, scoped, tag = 'input window, operand 9, single buffered']
    #allocation17 [shape = 'u8[131072]{0}', space=vmem, size = 0x20000, scoped, tag = 'input window, operand 11, single buffered']
    #allocation18 [shape = 's32[1]{0}', space=sflag, size = 0x4, scoped, tag = 'scoped memory for tpu_custom_call.1']
    #allocation19 [shape = 'u8[8192]{0}', space=vmem, size = 0x2000, scoped, tag = 'output window, operand 0']
    %18 = vsyncpa [#allocation3], 0
    %s19 = scalar_lea.sflag [#allocation3], 1
    %20 = vsyncpa %s19, 0
    %21 = vsyncpa [#allocation6], 0
    %22 = vsyncpa [#allocation9], 0
    %23 = vsyncpa [#allocation12], 0
    %24 = vsyncpa [#allocation15], 0
    %25 = vsyncpa [#allocation18], 0
    %26 = vsyncpa [#allocation4], 0
    %s27 = scalar_lea.sflag [#allocation4], 1
    %28 = vsyncpa %s27, 0
    loop: start=0, step=1, limit=4
    $region2: #{tpu_custom_call.1} parent=1 // loop_pre_header
      _
    $region3: #{tpu_custom_call.1} parent=1 // loop_header
      %s30 = sphi 0, %s34
      %p31 = scmp.ge.s32.totalorder %s30, 4
      %s40 = sphi 0, %s42
      %s43 = sphi 0, %s40
      %s44 = sphi 0, %s43
      %s60 = sphi 0, %s44
      %s64 = sphi 0, %s64
      %s66 = sphi 0, %s64
      %s67 = sphi 0, %s66
      %s81 = sphi 0, %s67
      %s85 = sphi 0, %s85
      %s87 = sphi 0, %s85
      %s88 = sphi 0, %s87
      %s102 = sphi 0, %s88
      %s106 = sphi 0, %s106
      %s108 = sphi 0, %s106
      %s109 = sphi 0, %s108
      %s123 = sphi 0, %s109
      %s127 = sphi 0, %s127
      %s129 = sphi 0, %s127
      %s130 = sphi 0, %s129
      %s144 = sphi 0, %s130
      %s148 = sphi 0, %s148
      %s150 = sphi 0, %s148
      %s151 = sphi 0, %s150
      %s165 = sphi 0, %s151
      %s169 = sphi 0, %s169
      %s171 = sphi 0, %s169
      %s172 = sphi 0, %s171
      %s186 = sphi 0, %s172
      %s190 = sphi 0, %s190
      %s192 = sphi 0, %s190
      %s193 = sphi 0, %s192
      %s207 = sphi 0, %s193
      %s211 = sphi 0, %s211
      %s213 = sphi 0, %s211
      %s214 = sphi 0, %s213
      %s228 = sphi 0, %s214
      %s232 = sphi 0, %s232
      %s234 = sphi 0, %s232
      %s235 = sphi 0, %s234
      %s249 = sphi 0, %s235
      %s253 = sphi 0, %s253
      %s255 = sphi 0, %s253
      %s256 = sphi 0, %s255
      %s270 = sphi 0, %s256
      %s274 = sphi 0, %s274
      %s276 = sphi 0, %s274
      %s277 = sphi 0, %s276
      %s291 = sphi 0, %s277
      %s295 = sphi 0, %s295
      %s297 = sphi 0, %s295
      %s298 = sphi 0, %s297
      %s312 = sphi 0, %s298
      %s318 = sphi 0, %s320
      %s321 = sphi 0, %s318
      %s322 = sphi 0, %s321
      %s338 = sphi 0, %s322
    $region4: #{tpu_custom_call.1} parent=1 // loop_header_branch
      %33 = sbr.rel (%p31) target = $region8
    $region5: #{tpu_custom_call.1} parent=1 // loop_body
      %s35 = ssub.s32 %s30, 1
      %s36 = ssub.s32 %s30, 2
      %s37 = sadd.s32 %s30, 1
      %s38 = ssub.s32 %s30, %s37
      %p39 = scmp.eq.s32.totalorder %s38, 0
      %s41 = sadd.s32 %s40, 1
      %s42 = scalar_select %p39, %s40, %s41
      %p45 = pneg %p39
      %p46 = scmp.eq.s32.totalorder %s30, 1
      %p47 = por %p45, %p46
      %p48 = scmp.ne.s32.totalorder %s40, %s43
      %p49 = scmp.eq.s32.totalorder %s30, 0
      %p50 = por %p48, %p49
      %p51 = scmp.ne.s32.totalorder %s40, %s43
      %p52 = scmp.eq.s32.totalorder %s35, 1
      %p53 = por %p51, %p52
      %p54 = scmp.ne.s32.totalorder %s43, %s44
      %p55 = scmp.eq.s32.totalorder %s35, 0
      %p56 = por %p54, %p55
      %p57 = scmp.ne.s32.totalorder %s43, %s44
      %p58 = scmp.eq.s32.totalorder %s36, 1
      %p59 = por %p57, %p58
      %p61 = scmp.ne.s32.totalorder %s44, %s60
      %p62 = scmp.eq.s32.totalorder %s36, 0
      %p63 = por %p61, %p62
      %s65 = sadd.s32 %s64, 1
      %p68 = scmp.eq.s32.totalorder %s30, 1
      %p69 = scmp.ne.s32.totalorder %s64, %s66
      %p70 = scmp.eq.s32.totalorder %s30, 0
      %p71 = por %p69, %p70
      %p72 = scmp.ne.s32.totalorder %s64, %s66
      %p73 = scmp.eq.s32.totalorder %s35, 1
      %p74 = por %p72, %p73
      %p75 = scmp.ne.s32.totalorder %s66, %s67
      %p76 = scmp.eq.s32.totalorder %s35, 0
      %p77 = por %p75, %p76
      %p78 = scmp.ne.s32.totalorder %s66, %s67
      %p79 = scmp.eq.s32.totalorder %s36, 1
      %p80 = por %p78, %p79
      %p82 = scmp.ne.s32.totalorder %s67, %s81
      %p83 = scmp.eq.s32.totalorder %s36, 0
      %p84 = por %p82, %p83
      %s86 = sadd.s32 %s85, 1
      %p89 = scmp.eq.s32.totalorder %s30, 1
      %p90 = scmp.ne.s32.totalorder %s85, %s87
      %p91 = scmp.eq.s32.totalorder %s30, 0
      %p92 = por %p90, %p91
      %p93 = scmp.ne.s32.totalorder %s85, %s87
      %p94 = scmp.eq.s32.totalorder %s35, 1
      %p95 = por %p93, %p94
      %p96 = scmp.ne.s32.totalorder %s87, %s88
      %p97 = scmp.eq.s32.totalorder %s35, 0
      %p98 = por %p96, %p97
      %p99 = scmp.ne.s32.totalorder %s87, %s88
      %p100 = scmp.eq.s32.totalorder %s36, 1
      %p101 = por %p99, %p100
      %p103 = scmp.ne.s32.totalorder %s88, %s102
      %p104 = scmp.eq.s32.totalorder %s36, 0
      %p105 = por %p103, %p104
      %s107 = sadd.s32 %s106, 1
      %p110 = scmp.eq.s32.totalorder %s30, 1
      %p111 = scmp.ne.s32.totalorder %s106, %s108
      %p112 = scmp.eq.s32.totalorder %s30, 0
      %p113 = por %p111, %p112
      %p114 = scmp.ne.s32.totalorder %s106, %s108
      %p115 = scmp.eq.s32.totalorder %s35, 1
      %p116 = por %p114, %p115
      %p117 = scmp.ne.s32.totalorder %s108, %s109
      %p118 = scmp.eq.s32.totalorder %s35, 0
      %p119 = por %p117, %p118
      %p120 = scmp.ne.s32.totalorder %s108, %s109
      %p121 = scmp.eq.s32.totalorder %s36, 1
      %p122 = por %p120, %p121
      %p124 = scmp.ne.s32.totalorder %s109, %s123
      %p125 = scmp.eq.s32.totalorder %s36, 0
      %p126 = por %p124, %p125
      %s128 = sadd.s32 %s127, 1
      %p131 = scmp.eq.s32.totalorder %s30, 1
      %p132 = scmp.ne.s32.totalorder %s127, %s129
      %p133 = scmp.eq.s32.totalorder %s30, 0
      %p134 = por %p132, %p133
      %p135 = scmp.ne.s32.totalorder %s127, %s129
      %p136 = scmp.eq.s32.totalorder %s35, 1
      %p137 = por %p135, %p136
      %p138 = scmp.ne.s32.totalorder %s129, %s130
      %p139 = scmp.eq.s32.totalorder %s35, 0
      %p140 = por %p138, %p139
      %p141 = scmp.ne.s32.totalorder %s129, %s130
      %p142 = scmp.eq.s32.totalorder %s36, 1
      %p143 = por %p141, %p142
      %p145 = scmp.ne.s32.totalorder %s130, %s144
      %p146 = scmp.eq.s32.totalorder %s36, 0
      %p147 = por %p145, %p146
      %s149 = sadd.s32 %s148, 1
      %p152 = scmp.eq.s32.totalorder %s30, 1
      %p153 = scmp.ne.s32.totalorder %s148, %s150
      %p154 = scmp.eq.s32.totalorder %s30, 0
      %p155 = por %p153, %p154
      %p156 = scmp.ne.s32.totalorder %s148, %s150
      %p157 = scmp.eq.s32.totalorder %s35, 1
      %p158 = por %p156, %p157
      %p159 = scmp.ne.s32.totalorder %s150, %s151
      %p160 = scmp.eq.s32.totalorder %s35, 0
      %p161 = por %p159, %p160
      %p162 = scmp.ne.s32.totalorder %s150, %s151
      %p163 = scmp.eq.s32.totalorder %s36, 1
      %p164 = por %p162, %p163
      %p166 = scmp.ne.s32.totalorder %s151, %s165
      %p167 = scmp.eq.s32.totalorder %s36, 0
      %p168 = por %p166, %p167
      %s170 = sadd.s32 %s169, 1
      %p173 = scmp.eq.s32.totalorder %s30, 1
      %p174 = scmp.ne.s32.totalorder %s169, %s171
      %p175 = scmp.eq.s32.totalorder %s30, 0
      %p176 = por %p174, %p175
      %p177 = scmp.ne.s32.totalorder %s169, %s171
      %p178 = scmp.eq.s32.totalorder %s35, 1
      %p179 = por %p177, %p178
      %p180 = scmp.ne.s32.totalorder %s171, %s172
      %p181 = scmp.eq.s32.totalorder %s35, 0
      %p182 = por %p180, %p181
      %p183 = scmp.ne.s32.totalorder %s171, %s172
      %p184 = scmp.eq.s32.totalorder %s36, 1
      %p185 = por %p183, %p184
      %p187 = scmp.ne.s32.totalorder %s172, %s186
      %p188 = scmp.eq.s32.totalorder %s36, 0
      %p189 = por %p187, %p188
      %s191 = sadd.s32 %s190, 1
      %p194 = scmp.eq.s32.totalorder %s30, 1
      %p195 = scmp.ne.s32.totalorder %s190, %s192
      %p196 = scmp.eq.s32.totalorder %s30, 0
      %p197 = por %p195, %p196
      %p198 = scmp.ne.s32.totalorder %s190, %s192
      %p199 = scmp.eq.s32.totalorder %s35, 1
      %p200 = por %p198, %p199
      %p201 = scmp.ne.s32.totalorder %s192, %s193
      %p202 = scmp.eq.s32.totalorder %s35, 0
      %p203 = por %p201, %p202
      %p204 = scmp.ne.s32.totalorder %s192, %s193
      %p205 = scmp.eq.s32.totalorder %s36, 1
      %p206 = por %p204, %p205
      %p208 = scmp.ne.s32.totalorder %s193, %s207
      %p209 = scmp.eq.s32.totalorder %s36, 0
      %p210 = por %p208, %p209
      %s212 = sadd.s32 %s211, 1
      %p215 = scmp.eq.s32.totalorder %s30, 1
      %p216 = scmp.ne.s32.totalorder %s211, %s213
      %p217 = scmp.eq.s32.totalorder %s30, 0
      %p218 = por %p216, %p217
      %p219 = scmp.ne.s32.totalorder %s211, %s213
      %p220 = scmp.eq.s32.totalorder %s35, 1
      %p221 = por %p219, %p220
      %p222 = scmp.ne.s32.totalorder %s213, %s214
      %p223 = scmp.eq.s32.totalorder %s35, 0
      %p224 = por %p222, %p223
      %p225 = scmp.ne.s32.totalorder %s213, %s214
      %p226 = scmp.eq.s32.totalorder %s36, 1
      %p227 = por %p225, %p226
      %p229 = scmp.ne.s32.totalorder %s214, %s228
      %p230 = scmp.eq.s32.totalorder %s36, 0
      %p231 = por %p229, %p230
      %s233 = sadd.s32 %s232, 1
      %p236 = scmp.eq.s32.totalorder %s30, 1
      %p237 = scmp.ne.s32.totalorder %s232, %s234
      %p238 = scmp.eq.s32.totalorder %s30, 0
      %p239 = por %p237, %p238
      %p240 = scmp.ne.s32.totalorder %s232, %s234
      %p241 = scmp.eq.s32.totalorder %s35, 1
      %p242 = por %p240, %p241
      %p243 = scmp.ne.s32.totalorder %s234, %s235
      %p244 = scmp.eq.s32.totalorder %s35, 0
      %p245 = por %p243, %p244
      %p246 = scmp.ne.s32.totalorder %s234, %s235
      %p247 = scmp.eq.s32.totalorder %s36, 1
      %p248 = por %p246, %p247
      %p250 = scmp.ne.s32.totalorder %s235, %s249
      %p251 = scmp.eq.s32.totalorder %s36, 0
      %p252 = por %p250, %p251
      %s254 = sadd.s32 %s253, 1
      %p257 = scmp.eq.s32.totalorder %s30, 1
      %p258 = scmp.ne.s32.totalorder %s253, %s255
      %p259 = scmp.eq.s32.totalorder %s30, 0
      %p260 = por %p258, %p259
      %p261 = scmp.ne.s32.totalorder %s253, %s255
      %p262 = scmp.eq.s32.totalorder %s35, 1
      %p263 = por %p261, %p262
      %p264 = scmp.ne.s32.totalorder %s255, %s256
      %p265 = scmp.eq.s32.totalorder %s35, 0
      %p266 = por %p264, %p265
      %p267 = scmp.ne.s32.totalorder %s255, %s256
      %p268 = scmp.eq.s32.totalorder %s36, 1
      %p269 = por %p267, %p268
      %p271 = scmp.ne.s32.totalorder %s256, %s270
      %p272 = scmp.eq.s32.totalorder %s36, 0
      %p273 = por %p271, %p272
      %s275 = sadd.s32 %s274, 1
      %p278 = scmp.eq.s32.totalorder %s30, 1
      %p279 = scmp.ne.s32.totalorder %s274, %s276
      %p280 = scmp.eq.s32.totalorder %s30, 0
      %p281 = por %p279, %p280
      %p282 = scmp.ne.s32.totalorder %s274, %s276
      %p283 = scmp.eq.s32.totalorder %s35, 1
      %p284 = por %p282, %p283
      %p285 = scmp.ne.s32.totalorder %s276, %s277
      %p286 = scmp.eq.s32.totalorder %s35, 0
      %p287 = por %p285, %p286
      %p288 = scmp.ne.s32.totalorder %s276, %s277
      %p289 = scmp.eq.s32.totalorder %s36, 1
      %p290 = por %p288, %p289
      %p292 = scmp.ne.s32.totalorder %s277, %s291
      %p293 = scmp.eq.s32.totalorder %s36, 0
      %p294 = por %p292, %p293
      %s296 = sadd.s32 %s295, 1
      %p299 = scmp.eq.s32.totalorder %s30, 1
      %p300 = scmp.ne.s32.totalorder %s295, %s297
      %p301 = scmp.eq.s32.totalorder %s30, 0
      %p302 = por %p300, %p301
      %p303 = scmp.ne.s32.totalorder %s295, %s297
      %p304 = scmp.eq.s32.totalorder %s35, 1
      %p305 = por %p303, %p304
      %p306 = scmp.ne.s32.totalorder %s297, %s298
      %p307 = scmp.eq.s32.totalorder %s35, 0
      %p308 = por %p306, %p307
      %p309 = scmp.ne.s32.totalorder %s297, %s298
      %p310 = scmp.eq.s32.totalorder %s36, 1
      %p311 = por %p309, %p310
      %p313 = scmp.ne.s32.totalorder %s298, %s312
      %p314 = scmp.eq.s32.totalorder %s36, 0
      %p315 = por %p313, %p314
      %s316 = ssub.s32 %s30, %s37
      %p317 = scmp.eq.s32.totalorder %s316, 0
      %s319 = sadd.s32 %s318, 1
      %s320 = scalar_select %p317, %s318, %s319
      %p323 = pneg %p317
      %p324 = scmp.eq.s32.totalorder %s30, 1
      %p325 = por %p323, %p324
      %p326 = scmp.ne.s32.totalorder %s318, %s321
      %p327 = scmp.eq.s32.totalorder %s30, 0
      %p328 = por %p326, %p327
      %p329 = scmp.ne.s32.totalorder %s318, %s321
      %p330 = scmp.eq.s32.totalorder %s35, 1
      %p331 = por %p329, %p330
      %p332 = scmp.ne.s32.totalorder %s321, %s322
      %p333 = scmp.eq.s32.totalorder %s35, 0
      %p334 = por %p332, %p333
      %p335 = scmp.ne.s32.totalorder %s321, %s322
      %p336 = scmp.eq.s32.totalorder %s36, 1
      %p337 = por %p335, %p336
      %p339 = scmp.ne.s32.totalorder %s322, %s338
      %p340 = scmp.eq.s32.totalorder %s36, 0
      %p341 = por %p339, %p340
      %p342 = scmp.le.s32.totalorder 1, %s30
      %p343 = scmp.lt.s32.totalorder %s30, 3
      %p344 = pnand %p342, %p343
      %p345 = pneg %p344
      // Predicated region
      $region9: #{tpu_custom_call.1} parent=5 // pred_check
        _
      $region10: #{tpu_custom_call.1} parent=5 // pred_check_branch
        %347 = sbr.rel (%p344) target = $region12
      $region11: #{tpu_custom_call.1} parent=5 // pred_region
        %s348 = ssub.s32 %s30, 1
        // Predicated region
        $region13: #{tpu_custom_call.1} parent=11 // pred_check
          %p349 = pneg %p77
        $region14: #{tpu_custom_call.1} parent=11 // pred_check_branch
          %351 = sbr.rel (%p349) target = $region16
        $region15: #{tpu_custom_call.1} parent=11 // pred_region
          %353 = vsyncadd [#allocation6], 0
          %s355 = sshll.u32 %s1, 4
          %s356 = int_to_ptr.hbm [resolvable:$true] %s355
          %s357 = sshll.u32 [#allocation5], 4
          %s358 = int_to_ptr.vmem [resolvable:$true] %s357
          %360 = dma.hbm_to_vmem [thread:$0]  %s356, 16, %s358, [#allocation6]
        $region16: #{tpu_custom_call.1} parent=11 // pred_fallthru
          _
        // Predicated region
        $region17: #{tpu_custom_call.1} parent=11 // pred_check
          %p361 = pneg %p98
        $region18: #{tpu_custom_call.1} parent=11 // pred_check_branch
          %363 = sbr.rel (%p361) target = $region20
        $region19: #{tpu_custom_call.1} parent=11 // pred_region
          %365 = vsyncadd [#allocation6], 0
          %s367 = sshll.u32 %s2, 4
          %s368 = int_to_ptr.hbm [resolvable:$true] %s367
          %s369 = sshll.u32 [#allocation7], 4
          %s370 = int_to_ptr.vmem [resolvable:$true] %s369
          %372 = dma.hbm_to_vmem [thread:$0]  %s368, 16, %s370, [#allocation6]
        $region20: #{tpu_custom_call.1} parent=11 // pred_fallthru
          _
        // Predicated region
        $region21: #{tpu_custom_call.1} parent=11 // pred_check
          %p373 = pneg %p119
        $region22: #{tpu_custom_call.1} parent=11 // pred_check_branch
          %375 = sbr.rel (%p373) target = $region24
        $region23: #{tpu_custom_call.1} parent=11 // pred_region
          %377 = vsyncadd [#allocation9], 0
          %s378 = sshll.u32 %s3, 4
          %s379 = int_to_ptr.hbm [resolvable:$true] %s378
          %s380 = sshll.u32 [#allocation8], 4
          %s381 = int_to_ptr.vmem [resolvable:$true] %s380
          %386 = dma.hbm_to_vmem [thread:$0]  %s379, 3072, %s381, [#allocation9], 192, 192, 12
        $region24: #{tpu_custom_call.1} parent=11 // pred_fallthru
          _
        // Predicated region
        $region25: #{tpu_custom_call.1} parent=11 // pred_check
          %p387 = pneg %p140
        $region26: #{tpu_custom_call.1} parent=11 // pred_check_branch
          %389 = sbr.rel (%p387) target = $region28
        $region27: #{tpu_custom_call.1} parent=11 // pred_region
          _
        $region28: #{tpu_custom_call.1} parent=11 // pred_fallthru
          _
        // Predicated region
        $region29: #{tpu_custom_call.1} parent=11 // pred_check
          %p390 = pneg %p161
        $region30: #{tpu_custom_call.1} parent=11 // pred_check_branch
          %392 = sbr.rel (%p390) target = $region32
        $region31: #{tpu_custom_call.1} parent=11 // pred_region
          %394 = vsyncadd [#allocation9], 0
          %s395 = sshll.u32 %s5, 4
          %s396 = int_to_ptr.hbm [resolvable:$true] %s395
          %s397 = sshll.u32 [#allocation10], 4
          %s398 = int_to_ptr.vmem [resolvable:$true] %s397
          %403 = dma.hbm_to_vmem [thread:$0]  %s396, 1024, %s398, [#allocation9], 64, 64, 4
        $region32: #{tpu_custom_call.1} parent=11 // pred_fallthru
          _
        // Predicated region
        $region33: #{tpu_custom_call.1} parent=11 // pred_check
          %p404 = pneg %p182
        $region34: #{tpu_custom_call.1} parent=11 // pred_check_branch
          %406 = sbr.rel (%p404) target = $region36
        $region35: #{tpu_custom_call.1} parent=11 // pred_region
          %408 = vsyncadd [#allocation12], 0
          %s410 = sshll.u32 %s6, 4
          %s411 = int_to_ptr.hbm [resolvable:$true] %s410
          %s412 = sshll.u32 [#allocation11], 4
          %s413 = int_to_ptr.vmem [resolvable:$true] %s412
          %415 = dma.hbm_to_vmem [thread:$0]  %s411, 16, %s413, [#allocation12]
        $region36: #{tpu_custom_call.1} parent=11 // pred_fallthru
          _
        // Predicated region
        $region37: #{tpu_custom_call.1} parent=11 // pred_check
          %p416 = pneg %p203
        $region38: #{tpu_custom_call.1} parent=11 // pred_check_branch
          %418 = sbr.rel (%p416) target = $region40
        $region39: #{tpu_custom_call.1} parent=11 // pred_region
          %420 = vsyncadd [#allocation12], 0
          %s422 = sshll.u32 %s7, 4
          %s423 = int_to_ptr.hbm [resolvable:$true] %s422
          %s424 = sshll.u32 [#allocation13], 4
          %s425 = int_to_ptr.vmem [resolvable:$true] %s424
          %427 = dma.hbm_to_vmem [thread:$0]  %s423, 16, %s425, [#allocation12]
        $region40: #{tpu_custom_call.1} parent=11 // pred_fallthru
          _
        // Predicated region
        $region41: #{tpu_custom_call.1} parent=11 // pred_check
          %p428 = pneg %p224
        $region42: #{tpu_custom_call.1} parent=11 // pred_check_branch
          %430 = sbr.rel (%p428) target = $region44
        $region43: #{tpu_custom_call.1} parent=11 // pred_region
          %432 = vsyncadd [#allocation15], 0
          %s434 = sshll.u32 %s8, 4
          %s435 = int_to_ptr.hbm [resolvable:$true] %s434
          %s436 = sshll.u32 [#allocation14], 4
          %s437 = int_to_ptr.vmem [resolvable:$true] %s436
          %439 = dma.hbm_to_vmem [thread:$0]  %s435, 16, %s437, [#allocation15]
        $region44: #{tpu_custom_call.1} parent=11 // pred_fallthru
          _
        // Predicated region
        $region45: #{tpu_custom_call.1} parent=11 // pred_check
          %p440 = pneg %p245
        $region46: #{tpu_custom_call.1} parent=11 // pred_check_branch
          %442 = sbr.rel (%p440) target = $region48
        $region47: #{tpu_custom_call.1} parent=11 // pred_region
          %444 = vsyncadd [#allocation15], 0
          %s445 = sshll.u32 %s9, 4
          %s446 = int_to_ptr.hbm [resolvable:$true] %s445
          %s447 = sshll.u32 [#allocation16], 4
          %s448 = int_to_ptr.vmem [resolvable:$true] %s447
          %453 = dma.hbm_to_vmem [thread:$0]  %s446, 4096, %s448, [#allocation15], 256, 256, 16
        $region48: #{tpu_custom_call.1} parent=11 // pred_fallthru
          _
        // Predicated region
        $region49: #{tpu_custom_call.1} parent=11 // pred_check
          %p454 = pneg %p266
        $region50: #{tpu_custom_call.1} parent=11 // pred_check_branch
          %456 = sbr.rel (%p454) target = $region52
        $region51: #{tpu_custom_call.1} parent=11 // pred_region
          _
        $region52: #{tpu_custom_call.1} parent=11 // pred_fallthru
          _
        // Predicated region
        $region53: #{tpu_custom_call.1} parent=11 // pred_check
          %p457 = pneg %p287
        $region54: #{tpu_custom_call.1} parent=11 // pred_check_branch
          %459 = sbr.rel (%p457) target = $region56
        $region55: #{tpu_custom_call.1} parent=11 // pred_region
          %461 = vsyncadd [#allocation18], 0
          %s462 = sshll.u32 %s11, 4
          %s463 = int_to_ptr.hbm [resolvable:$true] %s462
          %s464 = sshll.u32 [#allocation17], 4
          %s465 = int_to_ptr.vmem [resolvable:$true] %s464
          %470 = dma.hbm_to_vmem [thread:$0]  %s463, 4096, %s465, [#allocation18], 64, 64, 4
        $region56: #{tpu_custom_call.1} parent=11 // pred_fallthru
          _
        // Predicated region
        $region57: #{tpu_custom_call.1} parent=11 // pred_check
          %p471 = pneg %p308
        $region58: #{tpu_custom_call.1} parent=11 // pred_check_branch
          %473 = sbr.rel (%p471) target = $region60
        $region59: #{tpu_custom_call.1} parent=11 // pred_region
          _
        $region60: #{tpu_custom_call.1} parent=11 // pred_fallthru
          _
      $region12: #{tpu_custom_call.1} parent=5 // pred_fallthru
        _
      %p474 = scmp.lt.s32.totalorder %s30, 2
      // Predicated region
      $region61: #{tpu_custom_call.1} parent=5 // pred_check
        %p475 = pneg %p474
      $region62: #{tpu_custom_call.1} parent=5 // pred_check_branch
        %477 = sbr.rel (%p475) target = $region64
      $region63: #{tpu_custom_call.1} parent=5 // pred_region
        // Predicated region
        $region65: #{tpu_custom_call.1} parent=63 // pred_check
          %p478 = pneg %p50
        $region66: #{tpu_custom_call.1} parent=63 // pred_check_branch
          %480 = sbr.rel (%p478) target = $region68
        $region67: #{tpu_custom_call.1} parent=63 // pred_region
          %s481 = sand.u32 %s40, 1
          %s482 = scalar_lea.sflag [#allocation3], %s481
          %s483 = sand.u32 %s40, 1
          %s484 = smul.addr %s483, 8
          %s485 = scalar_lea.vmem [#allocation2], %s484
          %487 = vsyncadd %s482, 0
          %s488 = smul.addr %s30, 8
          %s489 = scalar_lea.hbm %s0, %s488
          %s491 = sshll.u32 %s489, 4
          %s492 = int_to_ptr.hbm [resolvable:$true] %s491
          %s493 = sshll.u32 %s485, 4
          %s494 = int_to_ptr.vmem [resolvable:$true] %s493
          %496 = dma.hbm_to_vmem [thread:$0]  %s492, 128, %s494, %s482
        $region68: #{tpu_custom_call.1} parent=63 // pred_fallthru
          _
      $region64: #{tpu_custom_call.1} parent=5 // pred_fallthru
        _
      %p497 = scmp.le.s32.totalorder 1, %s30
      %p498 = scmp.lt.s32.totalorder %s30, 3
      %p499 = pnand %p497, %p498
      %p500 = pneg %p499
      // Predicated region
      $region69: #{tpu_custom_call.1} parent=5 // pred_check
        _
      $region70: #{tpu_custom_call.1} parent=5 // pred_check_branch
        %502 = sbr.rel (%p499) target = $region72
      $region71: #{tpu_custom_call.1} parent=5 // pred_region
        %s503 = ssub.s32 %s30, 1
        %s504 = sand.u32 %s43, 1
        %s505 = scalar_lea.sflag [#allocation3], %s504
        %s506 = sand.u32 %s43, 1
        %s507 = smul.addr %s506, 8
        %s508 = scalar_lea.vmem [#allocation2], %s507
        // Predicated region
        $region73: #{tpu_custom_call.1} parent=71 // pred_check
          %p509 = pneg %p56
        $region74: #{tpu_custom_call.1} parent=71 // pred_check_branch
          %511 = sbr.rel (%p509) target = $region76
        $region75: #{tpu_custom_call.1} parent=71 // pred_region
          %513 = dma.done %s505, 128
        $region76: #{tpu_custom_call.1} parent=71 // pred_fallthru
          _
        // Predicated region
        $region77: #{tpu_custom_call.1} parent=71 // pred_check
          %p514 = pneg %p77
        $region78: #{tpu_custom_call.1} parent=71 // pred_check_branch
          %516 = sbr.rel (%p514) target = $region80
        $region79: #{tpu_custom_call.1} parent=71 // pred_region
          %518 = dma.done [#allocation6], 16
        $region80: #{tpu_custom_call.1} parent=71 // pred_fallthru
          _
        // Predicated region
        $region81: #{tpu_custom_call.1} parent=71 // pred_check
          %p519 = pneg %p98
        $region82: #{tpu_custom_call.1} parent=71 // pred_check_branch
          %521 = sbr.rel (%p519) target = $region84
        $region83: #{tpu_custom_call.1} parent=71 // pred_region
          %523 = dma.done [#allocation6], 16
        $region84: #{tpu_custom_call.1} parent=71 // pred_fallthru
          _
        // Predicated region
        $region85: #{tpu_custom_call.1} parent=71 // pred_check
          %p524 = pneg %p119
        $region86: #{tpu_custom_call.1} parent=71 // pred_check_branch
          %526 = sbr.rel (%p524) target = $region88
        $region87: #{tpu_custom_call.1} parent=71 // pred_region
          %528 = dma.done [#allocation9], 3072
        $region88: #{tpu_custom_call.1} parent=71 // pred_fallthru
          _
        // Predicated region
        $region89: #{tpu_custom_call.1} parent=71 // pred_check
          %p529 = pneg %p161
        $region90: #{tpu_custom_call.1} parent=71 // pred_check_branch
          %531 = sbr.rel (%p529) target = $region92
        $region91: #{tpu_custom_call.1} parent=71 // pred_region
          %533 = dma.done [#allocation9], 1024
        $region92: #{tpu_custom_call.1} parent=71 // pred_fallthru
          _
        // Predicated region
        $region93: #{tpu_custom_call.1} parent=71 // pred_check
          %p534 = pneg %p182
        $region94: #{tpu_custom_call.1} parent=71 // pred_check_branch
          %536 = sbr.rel (%p534) target = $region96
        $region95: #{tpu_custom_call.1} parent=71 // pred_region
          %538 = dma.done [#allocation12], 16
        $region96: #{tpu_custom_call.1} parent=71 // pred_fallthru
          _
        // Predicated region
        $region97: #{tpu_custom_call.1} parent=71 // pred_check
          %p539 = pneg %p203
        $region98: #{tpu_custom_call.1} parent=71 // pred_check_branch
          %541 = sbr.rel (%p539) target = $region100
        $region99: #{tpu_custom_call.1} parent=71 // pred_region
          %543 = dma.done [#allocation12], 16
        $region100: #{tpu_custom_call.1} parent=71 // pred_fallthru
          _
        // Predicated region
        $region101: #{tpu_custom_call.1} parent=71 // pred_check
          %p544 = pneg %p224
        $region102: #{tpu_custom_call.1} parent=71 // pred_check_branch
          %546 = sbr.rel (%p544) target = $region104
        $region103: #{tpu_custom_call.1} parent=71 // pred_region
          %548 = dma.done [#allocation15], 16
        $region104: #{tpu_custom_call.1} parent=71 // pred_fallthru
          _
        // Predicated region
        $region105: #{tpu_custom_call.1} parent=71 // pred_check
          %p549 = pneg %p245
        $region106: #{tpu_custom_call.1} parent=71 // pred_check_branch
          %551 = sbr.rel (%p549) target = $region108
        $region107: #{tpu_custom_call.1} parent=71 // pred_region
          %553 = dma.done [#allocation15], 4096
        $region108: #{tpu_custom_call.1} parent=71 // pred_fallthru
          _
        // Predicated region
        $region109: #{tpu_custom_call.1} parent=71 // pred_check
          %p554 = pneg %p287
        $region110: #{tpu_custom_call.1} parent=71 // pred_check_branch
          %556 = sbr.rel (%p554) target = $region112
        $region111: #{tpu_custom_call.1} parent=71 // pred_region
          %558 = dma.done [#allocation18], 4096
        $region112: #{tpu_custom_call.1} parent=71 // pred_fallthru
          _
        %s559 = sand.u32 %s43, 1
        %s560 = scalar_lea.sflag [#allocation3], %s559
        %s561 = sand.u32 %s43, 1
        %s562 = smul.addr %s561, 8
        %s563 = scalar_lea.vmem [#allocation2], %s562
        %p564 = pneg %p56
        %p565 = pneg %p53
        %p566 = pneg %p77
        %p567 = pneg %p74
        %p568 = pneg %p98
        %p569 = pneg %p95
        %p570 = pneg %p119
        %p571 = pneg %p116
        %p572 = pneg %p140
        %p573 = pneg %p137
        %p574 = pneg %p161
        %p575 = pneg %p158
        %p576 = pneg %p182
        %p577 = pneg %p179
        %p578 = pneg %p203
        %p579 = pneg %p200
        %p580 = pneg %p224
        %p581 = pneg %p221
        %p582 = pneg %p245
        %p583 = pneg %p242
        %p584 = pneg %p266
        %p585 = pneg %p263
        %p586 = pneg %p287
        %p587 = pneg %p284
        %p588 = pneg %p308
        %p589 = pneg %p305
        %p590 = pneg %p334
        %p591 = pneg %p331
        %s592 = sand.u32 %s321, 1
        %s593 = scalar_lea.sflag [#allocation4], %s592
        %s594 = sand.u32 %s321, 1
        %s595 = smul.addr %s594, 8
        %s596 = scalar_lea.vmem [#allocation19], %s595
        %v598 = vld [vmem:[%s508] sm:$0xff]
        %v599 = vld [vmem:[#allocation5] sm:$0x1]
        %v600 = vld [vmem:[#allocation7] sm:$0x1]
        %601 = vadd.xlane.f32.xlu0 %v598
        %v602 = vpop.xlane.xlu0 %601
        %v603 = vrcp.pop 128.0
        %v604 = vmul.f32 128.0, %v603
        %v605 = vsub.f32 1.0, %v604
        %v606 = vmul.f32 %v603, %v605
        %v607 = vadd.f32 %v603, %v606
        %vm608 = vweird.f32 %v603
        %v609 = vsel %vm608, %v603, %v607
        %v610 = vmul.f32 %v602, %v609
        %v611 = vsub.f32 %v598, %v610
        %v612 = vmul.f32 %v611, %v611
        %613 = vadd.xlane.f32.xlu0 %v612
        %v614 = vpop.xlane.xlu0 %613
        %v615 = vmul.f32 %v614, %v609
        %v616 = vadd.f32 %v615, 1e-05
        %v617 = vrsqrt.pop %v616
        %v618 = vmul.f32 %v617, %v616
        %v619 = vmul.f32 %v618, %v617
        %v620 = vmul.f32 0.5, %v619
        %v621 = vsub.f32 1.5, %v620
        %v622 = vmul.f32 %v617, %v621
        %vm623 = vweird.f32 %v616
        %vm624 = vweird.f32 %v617
        %vm625 = vmor %vm623, %vm624
        %v626 = vsel %vm625, %v617, %v622
        %v627 = vmul.f32 %v611, %v626
        %v629 = vperm.slane %v599, 0
        %v631 = vmul.f32 %v627, %v629
        %v633 = vperm.slane %v600, 0
        %v635 = vadd.f32 %v631, %v633
        %v636 = vpack.c.bf16 %v635, %v635
        %v637 = vld [vmem:[#allocation8] sm:$0xff]
        %v638 = vld [vmem:[#allocation8 + $0x8] sm:$0xf]
        %v639 = vld [vmem:[#allocation8 + $0xc] sm:$0xff]
        %v640 = vld [vmem:[#allocation8 + $0x14] sm:$0xf]
        %v641 = vld [vmem:[#allocation8 + $0x18] sm:$0xff]
        %v642 = vld [vmem:[#allocation8 + $0x20] sm:$0xf]
        %v643 = vld [vmem:[#allocation8 + $0x24] sm:$0xff]
        %v644 = vld [vmem:[#allocation8 + $0x2c] sm:$0xf]
        %v645 = vld [vmem:[#allocation8 + $0x30] sm:$0xff]
        %v646 = vld [vmem:[#allocation8 + $0x38] sm:$0xf]
        %v647 = vld [vmem:[#allocation8 + $0x3c] sm:$0xff]
        %v648 = vld [vmem:[#allocation8 + $0x44] sm:$0xf]
        %v649 = vld [vmem:[#allocation8 + $0x48] sm:$0xff]
        %v650 = vld [vmem:[#allocation8 + $0x50] sm:$0xf]
        %v651 = vld [vmem:[#allocation8 + $0x54] sm:$0xff]
        %v652 = vld [vmem:[#allocation8 + $0x5c] sm:$0xf]
        %v653 = vld [vmem:[#allocation8 + $0x60] sm:$0xff]
        %v654 = vld [vmem:[#allocation8 + $0x68] sm:$0xf]
        %v655 = vld [vmem:[#allocation8 + $0x6c] sm:$0xff]
        %v656 = vld [vmem:[#allocation8 + $0x74] sm:$0xf]
        %v657 = vld [vmem:[#allocation8 + $0x78] sm:$0xff]
        %v658 = vld [vmem:[#allocation8 + $0x80] sm:$0xf]
        %v659 = vld [vmem:[#allocation8 + $0x84] sm:$0xff]
        %v660 = vld [vmem:[#allocation8 + $0x8c] sm:$0xf]
        %v661 = vld [vmem:[#allocation8 + $0x90] sm:$0xff]
        %v662 = vld [vmem:[#allocation8 + $0x98] sm:$0xf]
        %v663 = vld [vmem:[#allocation8 + $0x9c] sm:$0xff]
        %v664 = vld [vmem:[#allocation8 + $0xa4] sm:$0xf]
        %v665 = vld [vmem:[#allocation8 + $0xa8] sm:$0xff]
        %v666 = vld [vmem:[#allocation8 + $0xb0] sm:$0xf]
        %v667 = vld [vmem:[#allocation8 + $0xb4] sm:$0xff]
        %v668 = vld [vmem:[#allocation8 + $0xbc] sm:$0xf]
        %v669 = vld [vmem:[%s4] sm:$0x7]
        %v671 = vperm.slane %v669, 0
        %v672 = vperm.slane %v669, 1
        %v673 = vperm.slane %v669, 2
        %v709 = vunpack.c.l.b16 %v637
        %v710 = vunpack.c.h.b16 %v637
        %v711 = vunpack.c.l.b16 %v638
        %v712 = vunpack.c.l.b16 %v639
        %v713 = vunpack.c.h.b16 %v639
        %v714 = vunpack.c.l.b16 %v640
        %v715 = vunpack.c.l.b16 %v641
        %v716 = vunpack.c.h.b16 %v641
        %v717 = vunpack.c.l.b16 %v642
        %v718 = vunpack.c.l.b16 %v643
        %v719 = vunpack.c.h.b16 %v643
        %v720 = vunpack.c.l.b16 %v644
        %v721 = vunpack.c.l.b16 %v645
        %v722 = vunpack.c.h.b16 %v645
        %v723 = vunpack.c.l.b16 %v646
        %v724 = vunpack.c.l.b16 %v647
        %v725 = vunpack.c.h.b16 %v647
        %v726 = vunpack.c.l.b16 %v648
        %v727 = vunpack.c.l.b16 %v649
        %v728 = vunpack.c.h.b16 %v649
        %v729 = vunpack.c.l.b16 %v650
        %v730 = vunpack.c.l.b16 %v651
        %v731 = vunpack.c.h.b16 %v651
        %v732 = vunpack.c.l.b16 %v652
        %v733 = vunpack.c.l.b16 %v653
        %v734 = vunpack.c.h.b16 %v653
        %v735 = vunpack.c.l.b16 %v654
        %v736 = vunpack.c.l.b16 %v655
        %v737 = vunpack.c.h.b16 %v655
        %v738 = vunpack.c.l.b16 %v656
        %v739 = vunpack.c.l.b16 %v657
        %v740 = vunpack.c.h.b16 %v657
        %v741 = vunpack.c.l.b16 %v658
        %v742 = vunpack.c.l.b16 %v659
        %v743 = vunpack.c.h.b16 %v659
        %v744 = vunpack.c.l.b16 %v660
        %v745 = vunpack.c.l.b16 %v661
        %v746 = vunpack.c.h.b16 %v661
        %v747 = vunpack.c.l.b16 %v662
        %v748 = vunpack.c.l.b16 %v663
        %v749 = vunpack.c.h.b16 %v663
        %v750 = vunpack.c.l.b16 %v664
        %v751 = vunpack.c.l.b16 %v665
        %v752 = vunpack.c.h.b16 %v665
        %v753 = vunpack.c.l.b16 %v666
        %v754 = vunpack.c.l.b16 %v667
        %v755 = vunpack.c.h.b16 %v667
        %v756 = vunpack.c.l.b16 %v668
        %v757 = vpack.c.b16 %v712, %v709
        %v758 = vpack.c.b16 %v713, %v710
        %v759 = vpack.c.b16 %v714, %v711
        %v760 = vpack.c.b16 %v718, %v715
        %v761 = vpack.c.b16 %v719, %v716
        %v762 = vpack.c.b16 %v720, %v717
        %v763 = vpack.c.b16 %v724, %v721
        %v764 = vpack.c.b16 %v725, %v722
        %v765 = vpack.c.b16 %v726, %v723
        %v766 = vpack.c.b16 %v730, %v727
        %v767 = vpack.c.b16 %v731, %v728
        %v768 = vpack.c.b16 %v732, %v729
        %v769 = vpack.c.b16 %v736, %v733
        %v770 = vpack.c.b16 %v737, %v734
        %v771 = vpack.c.b16 %v738, %v735
        %v772 = vpack.c.b16 %v742, %v739
        %v773 = vpack.c.b16 %v743, %v740
        %v774 = vpack.c.b16 %v744, %v741
        %v775 = vpack.c.b16 %v748, %v745
        %v776 = vpack.c.b16 %v749, %v746
        %v777 = vpack.c.b16 %v750, %v747
        %v778 = vpack.c.b16 %v754, %v751
        %v779 = vpack.c.b16 %v755, %v752
        %v780 = vpack.c.b16 %v756, %v753
        %805 = vmatpush.bf16.msra.mxu0 %v778
        %806 = vmatpush.bf16.msra.mxu0 %v775
        %807 = vmatpush.bf16.msra.mxu0 %v772
        %808 = vmatpush.bf16.msra.mxu0 %v769
        %809 = vmatpush.bf16.msra.mxu0 %v766
        %810 = vmatpush.bf16.msra.mxu0 %v763
        %811 = vmatpush.bf16.msra.mxu0 %v760
        %812 = vmatpush.bf16.msra.mxu0 %v757
        %813 = vmatmul.bf16.gmra.mxu0 %v636
        %v814 = vpop.f32.mrf.mxu0
        %v815 = vadd.f32 %v671, %v814
        %v816 = vpop.f32.mrf.mxu0
        %817 = vdwg.mxu0
        %818 = vmatpush.bf16.msra.mxu0 %v779
        %819 = vmatpush.bf16.msra.mxu0 %v776
        %820 = vmatpush.bf16.msra.mxu0 %v773
        %821 = vmatpush.bf16.msra.mxu0 %v770
        %822 = vmatpush.bf16.msra.mxu0 %v767
        %823 = vmatpush.bf16.msra.mxu0 %v764
        %824 = vmatpush.bf16.msra.mxu0 %v761
        %825 = vmatpush.bf16.msra.mxu0 %v758
        %826 = vmatmul.bf16.gmra.mxu0 %v636
        %v827 = vpop.f32.mrf.mxu0
        %v828 = vadd.f32 %v672, %v827
        %v829 = vpop.f32.mrf.mxu0
        %830 = vdwg.mxu0
        %831 = vmatpush.bf16.msra.mxu0 %v780
        %832 = vmatpush.bf16.msra.mxu0 %v777
        %833 = vmatpush.bf16.msra.mxu0 %v774
        %834 = vmatpush.bf16.msra.mxu0 %v771
        %835 = vmatpush.bf16.msra.mxu0 %v768
        %836 = vmatpush.bf16.msra.mxu0 %v765
        %837 = vmatpush.bf16.msra.mxu0 %v762
        %838 = vmatpush.bf16.msra.mxu0 %v759
        %839 = vmatmul.bf16.gmra.mxu0 %v636
        %v840 = vpop.f32.mrf.mxu0
        %v841 = vadd.f32 %v673, %v840
        %v842 = vpop.f32.mrf.mxu0
        %843 = vdwg.mxu0
        %v844 = vpack.c.bf16 %v815, %v815
        %v845 = vpack.c.bf16 %v828, %v828
        %v846 = vpack.c.bf16 %v841, %v841
        %vm847 = vcmask 261120
        %v849 = vsel %vm847, %v844, 0
        %v852 = vsel %vm847, %v845, 0
        %854 = vmatpush.bf16.xpose.msra.mxu0 0
        %855 = vmatpush.bf16.xpose.msra.mxu0 0
        %856 = vmatpush.bf16.xpose.msra.mxu0 0
        %857 = vmatpush.bf16.xpose.msra.mxu0 0
        %858 = vmatpush.bf16.xpose.msra.mxu0 0
        %859 = vmatpush.bf16.xpose.msra.mxu0 0
        %860 = vmatpush.bf16.xpose.msra.mxu0 0
        %861 = vmatpush.bf16.xpose.msra.mxu0 %v852
        %862 = vmatmul.bf16.gmra.mxu0 %v849
        %v863 = vpop.f32.mrf.mxu0
        %v864 = vadd.f32 0.0, %v863
        %v865 = vpop.f32.mrf.mxu0
        %866 = vdwg.mxu0
        %vm867 = vcmask 64512
        %v868 = vsel %vm867, %v864, -inf
        %869 = vmax.xlane.f32.xlu0 %v868
        %v870 = vpop.xlane.xlu0 %869
        %v871 = vsub.f32 %v864, %v870
        %v872 = vmul.f32 %v871, 1.442695
        %v873 = vpow.pop %v872
        %v874 = vsel %vm867, %v873, 0.0
        %875 = vadd.xlane.f32.xlu0 %v874
        %v876 = vpop.xlane.xlu0 %875
        %v877 = vrcp.pop %v876
        %v878 = vmul.f32 %v876, %v877
        %v879 = vsub.f32 1.0, %v878
        %v880 = vmul.f32 %v877, %v879
        %v881 = vadd.f32 %v877, %v880
        %vm882 = vweird.f32 %v876
        %vm883 = vweird.f32 %v877
        %vm884 = vmor %vm882, %vm883
        %v885 = vsel %vm884, %v877, %v881
        %v886 = vand.u32 2147483647, %v876
        %vm887 = vcmp.eq.f32.partialorder %v886, 8.507059e+37
        %v888 = vand.u32 %v876, 2147483648
        %v889 = vor.u32 1.1754944e-38, %v888
        %v890 = vsel %vm887, %v889, %v885
        %v891 = vmul.f32 %v873, %v890
        %v892 = vpack.c.bf16 %v891, %v891
        %v894 = vsel %vm867, %v892, 0
        %vm896 = vcmask 1043456
        %v898 = vsel %vm896, %v846, 0
        %900 = vmatpush.bf16.msra.mxu0 0
        %901 = vmatpush.bf16.msra.mxu0 0
        %902 = vmatpush.bf16.msra.mxu0 0
        %903 = vmatpush.bf16.msra.mxu0 0
        %904 = vmatpush.bf16.msra.mxu0 0
        %905 = vmatpush.bf16.msra.mxu0 0
        %906 = vmatpush.bf16.msra.mxu0 0
        %907 = vmatpush.bf16.msra.mxu0 %v898
        %908 = vmatmul.bf16.gmra.mxu0 %v894
        %v909 = vpop.f32.mrf.mxu0
        %v910 = vadd.f32 0.0, %v909
        %v911 = vpop.f32.mrf.mxu0
        %912 = vdwg.mxu0
        %v914 = vunpack.c.l.b16 %v844
        %v915 = vpack.c.b16 %v914, %v914
        %916 = vrot.lane.b32.xlu0 %v915, 96
        %v917 = vpop.permute.xlu0 %916
        %v919 = vunpack.c.l.b16 %v845
        %v920 = vpack.c.b16 %v919, %v919
        %921 = vrot.lane.b32.xlu0 %v920, 96
        %v922 = vpop.permute.xlu0 %921
        %v924 = vsel %vm847, %v917, 0
        %v927 = vsel %vm847, %v922, 0
        %929 = vmatpush.bf16.xpose.msra.mxu0 0
        %930 = vmatpush.bf16.xpose.msra.mxu0 0
        %931 = vmatpush.bf16.xpose.msra.mxu0 0
        %932 = vmatpush.bf16.xpose.msra.mxu0 0
        %933 = vmatpush.bf16.xpose.msra.mxu0 0
        %934 = vmatpush.bf16.xpose.msra.mxu0 0
        %935 = vmatpush.bf16.xpose.msra.mxu0 0
        %936 = vmatpush.bf16.xpose.msra.mxu0 %v927
        %937 = vmatmul.bf16.gmra.mxu0 %v924
        %v938 = vpop.f32.mrf.mxu0
        %v939 = vadd.f32 0.0, %v938
        %v940 = vpop.f32.mrf.mxu0
        %941 = vdwg.mxu0
        %v942 = vsel %vm867, %v939, -inf
        %943 = vmax.xlane.f32.xlu0 %v942
        %v944 = vpop.xlane.xlu0 %943
        %v945 = vsub.f32 %v939, %v944
        %v946 = vmul.f32 %v945, 1.442695
        %v947 = vpow.pop %v946
        %v948 = vsel %vm867, %v947, 0.0
        %949 = vadd.xlane.f32.xlu0 %v948
        %v950 = vpop.xlane.xlu0 %949
        %v951 = vrcp.pop %v950
        %v952 = vmul.f32 %v950, %v951
        %v953 = vsub.f32 1.0, %v952
        %v954 = vmul.f32 %v951, %v953
        %v955 = vadd.f32 %v951, %v954
        %vm956 = vweird.f32 %v950
        %vm957 = vweird.f32 %v951
        %vm958 = vmor %vm956, %vm957
        %v959 = vsel %vm958, %v951, %v955
        %v960 = vand.u32 2147483647, %v950
        %vm961 = vcmp.eq.f32.partialorder %v960, 8.507059e+37
        %v962 = vand.u32 %v950, 2147483648
        %v963 = vor.u32 1.1754944e-38, %v962
        %v964 = vsel %vm961, %v963, %v959
        %v965 = vmul.f32 %v947, %v964
        %v966 = vpack.c.bf16 %v965, %v965
        %v968 = vunpack.c.l.b16 %v846
        %v969 = vpack.c.b16 %v968, %v968
        %970 = vrot.lane.b32.xlu0 %v969, 96
        %v971 = vpop.permute.xlu0 %970
        %v973 = vsel %vm867, %v966, 0
        %v976 = vsel %vm896, %v971, 0
        %978 = vmatpush.bf16.msra.mxu0 0
        %979 = vmatpush.bf16.msra.mxu0 0
        %980 = vmatpush.bf16.msra.mxu0 0
        %981 = vmatpush.bf16.msra.mxu0 0
        %982 = vmatpush.bf16.msra.mxu0 0
        %983 = vmatpush.bf16.msra.mxu0 0
        %984 = vmatpush.bf16.msra.mxu0 0
        %985 = vmatpush.bf16.msra.mxu0 %v976
        %986 = vmatmul.bf16.gmra.mxu0 %v973
        %v987 = vpop.f32.mrf.mxu0
        %v988 = vadd.f32 0.0, %v987
        %v989 = vpop.f32.mrf.mxu0
        %990 = vdwg.mxu0
        %991 = vrot.lane.b32.xlu0 %v915, 64
        %v992 = vpop.permute.xlu0 %991
        %993 = vrot.lane.b32.xlu0 %v920, 64
        %v994 = vpop.permute.xlu0 %993
        %v996 = vsel %vm847, %v992, 0
        %v999 = vsel %vm847, %v994, 0
        %1001 = vmatpush.bf16.xpose.msra.mxu0 0
        %1002 = vmatpush.bf16.xpose.msra.mxu0 0
        %1003 = vmatpush.bf16.xpose.msra.mxu0 0
        %1004 = vmatpush.bf16.xpose.msra.mxu0 0
        %1005 = vmatpush.bf16.xpose.msra.mxu0 0
        %1006 = vmatpush.bf16.xpose.msra.mxu0 0
        %1007 = vmatpush.bf16.xpose.msra.mxu0 0
        %1008 = vmatpush.bf16.xpose.msra.mxu0 %v999
        %1009 = vmatmul.bf16.gmra.mxu0 %v996
        %v1010 = vpop.f32.mrf.mxu0
        %v1011 = vadd.f32 0.0, %v1010
        %v1012 = vpop.f32.mrf.mxu0
        %1013 = vdwg.mxu0
        %v1014 = vsel %vm867, %v1011, -inf
        %1015 = vmax.xlane.f32.xlu0 %v1014
        %v1016 = vpop.xlane.xlu0 %1015
        %v1017 = vsub.f32 %v1011, %v1016
        %v1018 = vmul.f32 %v1017, 1.442695
        %v1019 = vpow.pop %v1018
        %v1020 = vsel %vm867, %v1019, 0.0
        %1021 = vadd.xlane.f32.xlu0 %v1020
        %v1022 = vpop.xlane.xlu0 %1021
        %v1023 = vrcp.pop %v1022
        %v1024 = vmul.f32 %v1022, %v1023
        %v1025 = vsub.f32 1.0, %v1024
        %v1026 = vmul.f32 %v1023, %v1025
        %v1027 = vadd.f32 %v1023, %v1026
        %vm1028 = vweird.f32 %v1022
        %vm1029 = vweird.f32 %v1023
        %vm1030 = vmor %vm1028, %vm1029
        %v1031 = vsel %vm1030, %v1023, %v1027
        %v1032 = vand.u32 2147483647, %v1022
        %vm1033 = vcmp.eq.f32.partialorder %v1032, 8.507059e+37
        %v1034 = vand.u32 %v1022, 2147483648
        %v1035 = vor.u32 1.1754944e-38, %v1034
        %v1036 = vsel %vm1033, %v1035, %v1031
        %v1037 = vmul.f32 %v1019, %v1036
        %v1038 = vpack.c.bf16 %v1037, %v1037
        %1039 = vrot.lane.b32.xlu0 %v969, 64
        %v1040 = vpop.permute.xlu0 %1039
        %v1042 = vsel %vm867, %v1038, 0
        %v1045 = vsel %vm896, %v1040, 0
        %1047 = vmatpush.bf16.msra.mxu0 0
        %1048 = vmatpush.bf16.msra.mxu0 0
        %1049 = vmatpush.bf16.msra.mxu0 0
        %1050 = vmatpush.bf16.msra.mxu0 0
        %1051 = vmatpush.bf16.msra.mxu0 0
        %1052 = vmatpush.bf16.msra.mxu0 0
        %1053 = vmatpush.bf16.msra.mxu0 0
        %1054 = vmatpush.bf16.msra.mxu0 %v1045
        %1055 = vmatmul.bf16.gmra.mxu0 %v1042
        %v1056 = vpop.f32.mrf.mxu0
        %v1057 = vadd.f32 0.0, %v1056
        %v1058 = vpop.f32.mrf.mxu0
        %1059 = vdwg.mxu0
        %1060 = vrot.lane.b32.xlu0 %v915, 32
        %v1061 = vpop.permute.xlu0 %1060
        %1062 = vrot.lane.b32.xlu0 %v920, 32
        %v1063 = vpop.permute.xlu0 %1062
        %v1065 = vsel %vm847, %v1061, 0
        %v1068 = vsel %vm847, %v1063, 0
        %1070 = vmatpush.bf16.xpose.msra.mxu0 0
        %1071 = vmatpush.bf16.xpose.msra.mxu0 0
        %1072 = vmatpush.bf16.xpose.msra.mxu0 0
        %1073 = vmatpush.bf16.xpose.msra.mxu0 0
        %1074 = vmatpush.bf16.xpose.msra.mxu0 0
        %1075 = vmatpush.bf16.xpose.msra.mxu0 0
        %1076 = vmatpush.bf16.xpose.msra.mxu0 0
        %1077 = vmatpush.bf16.xpose.msra.mxu0 %v1068
        %1078 = vmatmul.bf16.gmra.mxu0 %v1065
        %v1079 = vpop.f32.mrf.mxu0
        %v1080 = vadd.f32 0.0, %v1079
        %v1081 = vpop.f32.mrf.mxu0
        %1082 = vdwg.mxu0
        %v1083 = vsel %vm867, %v1080, -inf
        %1084 = vmax.xlane.f32.xlu0 %v1083
        %v1085 = vpop.xlane.xlu0 %1084
        %v1086 = vsub.f32 %v1080, %v1085
        %v1087 = vmul.f32 %v1086, 1.442695
        %v1088 = vpow.pop %v1087
        %v1089 = vsel %vm867, %v1088, 0.0
        %1090 = vadd.xlane.f32.xlu0 %v1089
        %v1091 = vpop.xlane.xlu0 %1090
        %v1092 = vrcp.pop %v1091
        %v1093 = vmul.f32 %v1091, %v1092
        %v1094 = vsub.f32 1.0, %v1093
        %v1095 = vmul.f32 %v1092, %v1094
        %v1096 = vadd.f32 %v1092, %v1095
        %vm1097 = vweird.f32 %v1091
        %vm1098 = vweird.f32 %v1092
        %vm1099 = vmor %vm1097, %vm1098
        %v1100 = vsel %vm1099, %v1092, %v1096
        %v1101 = vand.u32 2147483647, %v1091
        %vm1102 = vcmp.eq.f32.partialorder %v1101, 8.507059e+37
        %v1103 = vand.u32 %v1091, 2147483648
        %v1104 = vor.u32 1.1754944e-38, %v1103
        %v1105 = vsel %vm1102, %v1104, %v1100
        %v1106 = vmul.f32 %v1088, %v1105
        %v1107 = vpack.c.bf16 %v1106, %v1106
        %1108 = vrot.lane.b32.xlu0 %v969, 32
        %v1109 = vpop.permute.xlu0 %1108
        %v1111 = vsel %vm867, %v1107, 0
        %v1114 = vsel %vm896, %v1109, 0
        %1116 = vmatpush.bf16.msra.mxu0 0
        %1117 = vmatpush.bf16.msra.mxu0 0
        %1118 = vmatpush.bf16.msra.mxu0 0
        %1119 = vmatpush.bf16.msra.mxu0 0
        %1120 = vmatpush.bf16.msra.mxu0 0
        %1121 = vmatpush.bf16.msra.mxu0 0
        %1122 = vmatpush.bf16.msra.mxu0 0
        %1123 = vmatpush.bf16.msra.mxu0 %v1114
        %1124 = vmatmul.bf16.gmra.mxu0 %v1111
        %v1125 = vpop.f32.mrf.mxu0
        %v1126 = vadd.f32 0.0, %v1125
        %v1127 = vpop.f32.mrf.mxu0
        %1128 = vdwg.mxu0
        %1130 = vrot.lane.b32.xlu0 %v988, 32
        %v1131 = vpop.permute.xlu0 %1130
        %1134 = vrot.lane.b32.xlu0 %v1057, 64
        %v1135 = vpop.permute.xlu0 %1134
        %1138 = vrot.lane.b32.xlu0 %v1126, 96
        %v1139 = vpop.permute.xlu0 %1138
        %v1141 = vsel %vm847, %v910, %v1131
        %vm1142 = vcmask 523264
        %v1143 = vsel %vm1142, %v1141, %v1135
        %vm1144 = vcmask 785408
        %v1145 = vsel %vm1144, %v1143, %v1139
        %v1146 = vpack.c.bf16 %v1145, %v1145
        %v1147 = vld [vmem:[#allocation10] sm:$0xf]
        %v1148 = vld [vmem:[#allocation10 + $0x4] sm:$0xf]
        %v1149 = vld [vmem:[#allocation10 + $0x8] sm:$0xf]
        %v1150 = vld [vmem:[#allocation10 + $0xc] sm:$0xf]
        %v1151 = vld [vmem:[#allocation10 + $0x10] sm:$0xf]
        %v1152 = vld [vmem:[#allocation10 + $0x14] sm:$0xf]
        %v1153 = vld [vmem:[#allocation10 + $0x18] sm:$0xf]
        %v1154 = vld [vmem:[#allocation10 + $0x1c] sm:$0xf]
        %v1155 = vld [vmem:[#allocation10 + $0x20] sm:$0xf]
        %v1156 = vld [vmem:[#allocation10 + $0x24] sm:$0xf]
        %v1157 = vld [vmem:[#allocation10 + $0x28] sm:$0xf]
        %v1158 = vld [vmem:[#allocation10 + $0x2c] sm:$0xf]
        %v1159 = vld [vmem:[#allocation10 + $0x30] sm:$0xf]
        %v1160 = vld [vmem:[#allocation10 + $0x34] sm:$0xf]
        %v1161 = vld [vmem:[#allocation10 + $0x38] sm:$0xf]
        %v1162 = vld [vmem:[#allocation10 + $0x3c] sm:$0xf]
        %v1163 = vld [vmem:[#allocation11] sm:$0x1]
        %v1165 = vperm.slane %v1163, 0
        %v1183 = vunpack.c.l.b16 %v1147
        %v1184 = vunpack.c.l.b16 %v1148
        %v1185 = vunpack.c.l.b16 %v1149
        %v1186 = vunpack.c.l.b16 %v1150
        %v1187 = vunpack.c.l.b16 %v1151
        %v1188 = vunpack.c.l.b16 %v1152
        %v1189 = vunpack.c.l.b16 %v1153
        %v1190 = vunpack.c.l.b16 %v1154
        %v1191 = vunpack.c.l.b16 %v1155
        %v1192 = vunpack.c.l.b16 %v1156
        %v1193 = vunpack.c.l.b16 %v1157
        %v1194 = vunpack.c.l.b16 %v1158
        %v1195 = vunpack.c.l.b16 %v1159
        %v1196 = vunpack.c.l.b16 %v1160
        %v1197 = vunpack.c.l.b16 %v1161
        %v1198 = vunpack.c.l.b16 %v1162
        %v1199 = vpack.c.b16 %v1184, %v1183
        %v1200 = vpack.c.b16 %v1186, %v1185
        %v1201 = vpack.c.b16 %v1188, %v1187
        %v1202 = vpack.c.b16 %v1190, %v1189
        %v1203 = vpack.c.b16 %v1192, %v1191
        %v1204 = vpack.c.b16 %v1194, %v1193
        %v1205 = vpack.c.b16 %v1196, %v1195
        %v1206 = vpack.c.b16 %v1198, %v1197
        %1215 = vmatpush.bf16.msra.mxu0 %v1206
        %1216 = vmatpush.bf16.msra.mxu0 %v1205
        %1217 = vmatpush.bf16.msra.mxu0 %v1204
        %1218 = vmatpush.bf16.msra.mxu0 %v1203
        %1219 = vmatpush.bf16.msra.mxu0 %v1202
        %1220 = vmatpush.bf16.msra.mxu0 %v1201
        %1221 = vmatpush.bf16.msra.mxu0 %v1200
        %1222 = vmatpush.bf16.msra.mxu0 %v1199
        %1223 = vmatmul.bf16.gmra.mxu0 %v1146
        %v1224 = vpop.f32.mrf.mxu0
        %v1225 = vadd.f32 %v1165, %v1224
        %v1226 = vpop.f32.mrf.mxu0
        %1227 = vdwg.mxu0
        %v1228 = vadd.f32 %v598, %v1225
        %v1229 = vld [vmem:[#allocation13] sm:$0x1]
        %v1230 = vld [vmem:[#allocation14] sm:$0x1]
        %1231 = vadd.xlane.f32.xlu0 %v1228
        %v1232 = vpop.xlane.xlu0 %1231
        %v1233 = vmul.f32 %v1232, %v609
        %v1234 = vsub.f32 %v1228, %v1233
        %v1235 = vmul.f32 %v1234, %v1234
        %1236 = vadd.xlane.f32.xlu0 %v1235
        %v1237 = vpop.xlane.xlu0 %1236
        %v1238 = vmul.f32 %v1237, %v609
        %v1239 = vadd.f32 %v1238, 1e-05
        %v1240 = vrsqrt.pop %v1239
        %v1241 = vmul.f32 %v1240, %v1239
        %v1242 = vmul.f32 %v1241, %v1240
        %v1243 = vmul.f32 0.5, %v1242
        %v1244 = vsub.f32 1.5, %v1243
        %v1245 = vmul.f32 %v1240, %v1244
        %vm1246 = vweird.f32 %v1239
        %vm1247 = vweird.f32 %v1240
        %vm1248 = vmor %vm1246, %vm1247
        %v1249 = vsel %vm1248, %v1240, %v1245
        %v1250 = vmul.f32 %v1234, %v1249
        %v1252 = vperm.slane %v1229, 0
        %v1254 = vmul.f32 %v1250, %v1252
        %v1256 = vperm.slane %v1230, 0
        %v1258 = vadd.f32 %v1254, %v1256
        %v1259 = vpack.c.bf16 %v1258, %v1258
        %v1260 = vld [vmem:[#allocation16] sm:$0xff]
        %v1261 = vld [vmem:[#allocation16 + $0x8] sm:$0xff]
        %v1262 = vld [vmem:[#allocation16 + $0x10] sm:$0xff]
        %v1263 = vld [vmem:[#allocation16 + $0x18] sm:$0xff]
        %v1264 = vld [vmem:[#allocation16 + $0x20] sm:$0xff]
        %v1265 = vld [vmem:[#allocation16 + $0x28] sm:$0xff]
        %v1266 = vld [vmem:[#allocation16 + $0x30] sm:$0xff]
        %v1267 = vld [vmem:[#allocation16 + $0x38] sm:$0xff]
        %v1268 = vld [vmem:[#allocation16 + $0x40] sm:$0xff]
        %v1269 = vld [vmem:[#allocation16 + $0x48] sm:$0xff]
        %v1270 = vld [vmem:[#allocation16 + $0x50] sm:$0xff]
        %v1271 = vld [vmem:[#allocation16 + $0x58] sm:$0xff]
        %v1272 = vld [vmem:[#allocation16 + $0x60] sm:$0xff]
        %v1273 = vld [vmem:[#allocation16 + $0x68] sm:$0xff]
        %v1274 = vld [vmem:[#allocation16 + $0x70] sm:$0xff]
        %v1275 = vld [vmem:[#allocation16 + $0x78] sm:$0xff]
        %v1276 = vld [vmem:[#allocation16 + $0x80] sm:$0xff]
        %v1277 = vld [vmem:[#allocation16 + $0x88] sm:$0xff]
        %v1278 = vld [vmem:[#allocation16 + $0x90] sm:$0xff]
        %v1279 = vld [vmem:[#allocation16 + $0x98] sm:$0xff]
        %v1280 = vld [vmem:[#allocation16 + $0xa0] sm:$0xff]
        %v1281 = vld [vmem:[#allocation16 + $0xa8] sm:$0xff]
        %v1282 = vld [vmem:[#allocation16 + $0xb0] sm:$0xff]
        %v1283 = vld [vmem:[#allocation16 + $0xb8] sm:$0xff]
        %v1284 = vld [vmem:[#allocation16 + $0xc0] sm:$0xff]
        %v1285 = vld [vmem:[#allocation16 + $0xc8] sm:$0xff]
        %v1286 = vld [vmem:[#allocation16 + $0xd0] sm:$0xff]
        %v1287 = vld [vmem:[#allocation16 + $0xd8] sm:$0xff]
        %v1288 = vld [vmem:[#allocation16 + $0xe0] sm:$0xff]
        %v1289 = vld [vmem:[#allocation16 + $0xe8] sm:$0xff]
        %v1290 = vld [vmem:[#allocation16 + $0xf0] sm:$0xff]
        %v1291 = vld [vmem:[#allocation16 + $0xf8] sm:$0xff]
        %v1292 = vld [vmem:[%s10] sm:$0xf]
        %v1294 = vperm.slane %v1292, 0
        %v1295 = vperm.slane %v1292, 1
        %v1296 = vperm.slane %v1292, 2
        %v1297 = vperm.slane %v1292, 3
        %v1334 = vunpack.c.l.b16 %v1260
        %v1335 = vunpack.c.h.b16 %v1260
        %v1336 = vunpack.c.l.b16 %v1261
        %v1337 = vunpack.c.h.b16 %v1261
        %v1338 = vunpack.c.l.b16 %v1262
        %v1339 = vunpack.c.h.b16 %v1262
        %v1340 = vunpack.c.l.b16 %v1263
        %v1341 = vunpack.c.h.b16 %v1263
        %v1342 = vunpack.c.l.b16 %v1264
        %v1343 = vunpack.c.h.b16 %v1264
        %v1344 = vunpack.c.l.b16 %v1265
        %v1345 = vunpack.c.h.b16 %v1265
        %v1346 = vunpack.c.l.b16 %v1266
        %v1347 = vunpack.c.h.b16 %v1266
        %v1348 = vunpack.c.l.b16 %v1267
        %v1349 = vunpack.c.h.b16 %v1267
        %v1350 = vunpack.c.l.b16 %v1268
        %v1351 = vunpack.c.h.b16 %v1268
        %v1352 = vunpack.c.l.b16 %v1269
        %v1353 = vunpack.c.h.b16 %v1269
        %v1354 = vunpack.c.l.b16 %v1270
        %v1355 = vunpack.c.h.b16 %v1270
        %v1356 = vunpack.c.l.b16 %v1271
        %v1357 = vunpack.c.h.b16 %v1271
        %v1358 = vunpack.c.l.b16 %v1272
        %v1359 = vunpack.c.h.b16 %v1272
        %v1360 = vunpack.c.l.b16 %v1273
        %v1361 = vunpack.c.h.b16 %v1273
        %v1362 = vunpack.c.l.b16 %v1274
        %v1363 = vunpack.c.h.b16 %v1274
        %v1364 = vunpack.c.l.b16 %v1275
        %v1365 = vunpack.c.h.b16 %v1275
        %v1366 = vunpack.c.l.b16 %v1276
        %v1367 = vunpack.c.h.b16 %v1276
        %v1368 = vunpack.c.l.b16 %v1277
        %v1369 = vunpack.c.h.b16 %v1277
        %v1370 = vunpack.c.l.b16 %v1278
        %v1371 = vunpack.c.h.b16 %v1278
        %v1372 = vunpack.c.l.b16 %v1279
        %v1373 = vunpack.c.h.b16 %v1279
        %v1374 = vunpack.c.l.b16 %v1280
        %v1375 = vunpack.c.h.b16 %v1280
        %v1376 = vunpack.c.l.b16 %v1281
        %v1377 = vunpack.c.h.b16 %v1281
        %v1378 = vunpack.c.l.b16 %v1282
        %v1379 = vunpack.c.h.b16 %v1282
        %v1380 = vunpack.c.l.b16 %v1283
        %v1381 = vunpack.c.h.b16 %v1283
        %v1382 = vunpack.c.l.b16 %v1284
        %v1383 = vunpack.c.h.b16 %v1284
        %v1384 = vunpack.c.l.b16 %v1285
        %v1385 = vunpack.c.h.b16 %v1285
        %v1386 = vunpack.c.l.b16 %v1286
        %v1387 = vunpack.c.h.b16 %v1286
        %v1388 = vunpack.c.l.b16 %v1287
        %v1389 = vunpack.c.h.b16 %v1287
        %v1390 = vunpack.c.l.b16 %v1288
        %v1391 = vunpack.c.h.b16 %v1288
        %v1392 = vunpack.c.l.b16 %v1289
        %v1393 = vunpack.c.h.b16 %v1289
        %v1394 = vunpack.c.l.b16 %v1290
        %v1395 = vunpack.c.h.b16 %v1290
        %v1396 = vunpack.c.l.b16 %v1291
        %v1397 = vunpack.c.h.b16 %v1291
        %v1398 = vpack.c.b16 %v1338, %v1334
        %v1399 = vpack.c.b16 %v1339, %v1335
        %v1400 = vpack.c.b16 %v1340, %v1336
        %v1401 = vpack.c.b16 %v1341, %v1337
        %v1402 = vpack.c.b16 %v1346, %v1342
        %v1403 = vpack.c.b16 %v1347, %v1343
        %v1404 = vpack.c.b16 %v1348, %v1344
        %v1405 = vpack.c.b16 %v1349, %v1345
        %v1406 = vpack.c.b16 %v1354, %v1350
        %v1407 = vpack.c.b16 %v1355, %v1351
        %v1408 = vpack.c.b16 %v1356, %v1352
        %v1409 = vpack.c.b16 %v1357, %v1353
        %v1410 = vpack.c.b16 %v1362, %v1358
        %v1411 = vpack.c.b16 %v1363, %v1359
        %v1412 = vpack.c.b16 %v1364, %v1360
        %v1413 = vpack.c.b16 %v1365, %v1361
        %v1414 = vpack.c.b16 %v1370, %v1366
        %v1415 = vpack.c.b16 %v1371, %v1367
        %v1416 = vpack.c.b16 %v1372, %v1368
        %v1417 = vpack.c.b16 %v1373, %v1369
        %v1418 = vpack.c.b16 %v1378, %v1374
        %v1419 = vpack.c.b16 %v1379, %v1375
        %v1420 = vpack.c.b16 %v1380, %v1376
        %v1421 = vpack.c.b16 %v1381, %v1377
        %v1422 = vpack.c.b16 %v1386, %v1382
        %v1423 = vpack.c.b16 %v1387, %v1383
        %v1424 = vpack.c.b16 %v1388, %v1384
        %v1425 = vpack.c.b16 %v1389, %v1385
        %v1426 = vpack.c.b16 %v1394, %v1390
        %v1427 = vpack.c.b16 %v1395, %v1391
        %v1428 = vpack.c.b16 %v1396, %v1392
        %v1429 = vpack.c.b16 %v1397, %v1393
        %1462 = vmatpush.bf16.msra.mxu0 %v1426
        %1463 = vmatpush.bf16.msra.mxu0 %v1422
        %1464 = vmatpush.bf16.msra.mxu0 %v1418
        %1465 = vmatpush.bf16.msra.mxu0 %v1414
        %1466 = vmatpush.bf16.msra.mxu0 %v1410
        %1467 = vmatpush.bf16.msra.mxu0 %v1406
        %1468 = vmatpush.bf16.msra.mxu0 %v1402
        %1469 = vmatpush.bf16.msra.mxu0 %v1398
        %1470 = vmatmul.bf16.gmra.mxu0 %v1259
        %v1471 = vpop.f32.mrf.mxu0
        %v1472 = vadd.f32 %v1294, %v1471
        %v1473 = vpop.f32.mrf.mxu0
        %1474 = vdwg.mxu0
        %1475 = vmatpush.bf16.msra.mxu0 %v1427
        %1476 = vmatpush.bf16.msra.mxu0 %v1423
        %1477 = vmatpush.bf16.msra.mxu0 %v1419
        %1478 = vmatpush.bf16.msra.mxu0 %v1415
        %1479 = vmatpush.bf16.msra.mxu0 %v1411
        %1480 = vmatpush.bf16.msra.mxu0 %v1407
        %1481 = vmatpush.bf16.msra.mxu0 %v1403
        %1482 = vmatpush.bf16.msra.mxu0 %v1399
        %1483 = vmatmul.bf16.gmra.mxu0 %v1259
        %v1484 = vpop.f32.mrf.mxu0
        %v1485 = vadd.f32 %v1295, %v1484
        %v1486 = vpop.f32.mrf.mxu0
        %1487 = vdwg.mxu0
        %1488 = vmatpush.bf16.msra.mxu0 %v1428
        %1489 = vmatpush.bf16.msra.mxu0 %v1424
        %1490 = vmatpush.bf16.msra.mxu0 %v1420
        %1491 = vmatpush.bf16.msra.mxu0 %v1416
        %1492 = vmatpush.bf16.msra.mxu0 %v1412
        %1493 = vmatpush.bf16.msra.mxu0 %v1408
        %1494 = vmatpush.bf16.msra.mxu0 %v1404
        %1495 = vmatpush.bf16.msra.mxu0 %v1400
        %1496 = vmatmul.bf16.gmra.mxu0 %v1259
        %v1497 = vpop.f32.mrf.mxu0
        %v1498 = vadd.f32 %v1296, %v1497
        %v1499 = vpop.f32.mrf.mxu0
        %1500 = vdwg.mxu0
        %1501 = vmatpush.bf16.msra.mxu0 %v1429
        %1502 = vmatpush.bf16.msra.mxu0 %v1425
        %1503 = vmatpush.bf16.msra.mxu0 %v1421
        %1504 = vmatpush.bf16.msra.mxu0 %v1417
        %1505 = vmatpush.bf16.msra.mxu0 %v1413
        %1506 = vmatpush.bf16.msra.mxu0 %v1409
        %1507 = vmatpush.bf16.msra.mxu0 %v1405
        %1508 = vmatpush.bf16.msra.mxu0 %v1401
        %1509 = vmatmul.bf16.gmra.mxu0 %v1259
        %v1510 = vpop.f32.mrf.mxu0
        %v1511 = vadd.f32 %v1297, %v1510
        %v1512 = vpop.f32.mrf.mxu0
        %1513 = vdwg.mxu0
        %v1514 = vmax.f32 %v1472, 0.0
        %v1515 = vmax.f32 %v1485, 0.0
        %v1516 = vmax.f32 %v1498, 0.0
        %v1517 = vmax.f32 %v1511, 0.0
        %v1518 = vpack.c.bf16 %v1514, %v1514
        %v1519 = vpack.c.bf16 %v1515, %v1515
        %v1520 = vpack.c.bf16 %v1516, %v1516
        %v1521 = vpack.c.bf16 %v1517, %v1517
        %v1522 = vld [vmem:[#allocation17] sm:$0xf]
        %v1523 = vld [vmem:[#allocation17 + $0x4] sm:$0xf]
        %v1524 = vld [vmem:[#allocation17 + $0x8] sm:$0xf]
        %v1525 = vld [vmem:[#allocation17 + $0xc] sm:$0xf]
        %v1526 = vld [vmem:[#allocation17 + $0x10] sm:$0xf]
        %v1527 = vld [vmem:[#allocation17 + $0x14] sm:$0xf]
        %v1528 = vld [vmem:[#allocation17 + $0x18] sm:$0xf]
        %v1529 = vld [vmem:[#allocation17 + $0x1c] sm:$0xf]
        %v1530 = vld [vmem:[#allocation17 + $0x20] sm:$0xf]
        %v1531 = vld [vmem:[#allocation17 + $0x24] sm:$0xf]
        %v1532 = vld [vmem:[#allocation17 + $0x28] sm:$0xf]
        %v1533 = vld [vmem:[#allocation17 + $0x2c] sm:$0xf]
        %v1534 = vld [vmem:[#allocation17 + $0x30] sm:$0xf]
        %v1535 = vld [vmem:[#allocation17 + $0x34] sm:$0xf]
        %v1536 = vld [vmem:[#allocation17 + $0x38] sm:$0xf]
        %v1537 = vld [vmem:[#allocation17 + $0x3c] sm:$0xf]
        %v1538 = vld [vmem:[#allocation17 + $0x40] sm:$0xf]
        %v1539 = vld [vmem:[#allocation17 + $0x44] sm:$0xf]
        %v1540 = vld [vmem:[#allocation17 + $0x48] sm:$0xf]
        %v1541 = vld [vmem:[#allocation17 + $0x4c] sm:$0xf]
        %v1542 = vld [vmem:[#allocation17 + $0x50] sm:$0xf]
        %v1543 = vld [vmem:[#allocation17 + $0x54] sm:$0xf]
        %v1544 = vld [vmem:[#allocation17 + $0x58] sm:$0xf]
        %v1545 = vld [vmem:[#allocation17 + $0x5c] sm:$0xf]
        %v1546 = vld [vmem:[#allocation17 + $0x60] sm:$0xf]
        %v1547 = vld [vmem:[#allocation17 + $0x64] sm:$0xf]
        %v1548 = vld [vmem:[#allocation17 + $0x68] sm:$0xf]
        %v1549 = vld [vmem:[#allocation17 + $0x6c] sm:$0xf]
        %v1550 = vld [vmem:[#allocation17 + $0x70] sm:$0xf]
        %v1551 = vld [vmem:[#allocation17 + $0x74] sm:$0xf]
        %v1552 = vld [vmem:[#allocation17 + $0x78] sm:$0xf]
        %v1553 = vld [vmem:[#allocation17 + $0x7c] sm:$0xf]
        %v1554 = vld [vmem:[#allocation17 + $0x80] sm:$0xf]
        %v1555 = vld [vmem:[#allocation17 + $0x84] sm:$0xf]
        %v1556 = vld [vmem:[#allocation17 + $0x88] sm:$0xf]
        %v1557 = vld [vmem:[#allocation17 + $0x8c] sm:$0xf]
        %v1558 = vld [vmem:[#allocation17 + $0x90] sm:$0xf]
        %v1559 = vld [vmem:[#allocation17 + $0x94] sm:$0xf]
        %v1560 = vld [vmem:[#allocation17 + $0x98] sm:$0xf]
        %v1561 = vld [vmem:[#allocation17 + $0x9c] sm:$0xf]
        %v1562 = vld [vmem:[#allocation17 + $0xa0] sm:$0xf]
        %v1563 = vld [vmem:[#allocation17 + $0xa4] sm:$0xf]
        %v1564 = vld [vmem:[#allocation17 + $0xa8] sm:$0xf]
        %v1565 = vld [vmem:[#allocation17 + $0xac] sm:$0xf]
        %v1566 = vld [vmem:[#allocation17 + $0xb0] sm:$0xf]
        %v1567 = vld [vmem:[#allocation17 + $0xb4] sm:$0xf]
        %v1568 = vld [vmem:[#allocation17 + $0xb8] sm:$0xf]
        %v1569 = vld [vmem:[#allocation17 + $0xbc] sm:$0xf]
        %v1570 = vld [vmem:[#allocation17 + $0xc0] sm:$0xf]
        %v1571 = vld [vmem:[#allocation17 + $0xc4] sm:$0xf]
        %v1572 = vld [vmem:[#allocation17 + $0xc8] sm:$0xf]
        %v1573 = vld [vmem:[#allocation17 + $0xcc] sm:$0xf]
        %v1574 = vld [vmem:[#allocation17 + $0xd0] sm:$0xf]
        %v1575 = vld [vmem:[#allocation17 + $0xd4] sm:$0xf]
        %v1576 = vld [vmem:[#allocation17 + $0xd8] sm:$0xf]
        %v1577 = vld [vmem:[#allocation17 + $0xdc] sm:$0xf]
        %v1578 = vld [vmem:[#allocation17 + $0xe0] sm:$0xf]
        %v1579 = vld [vmem:[#allocation17 + $0xe4] sm:$0xf]
        %v1580 = vld [vmem:[#allocation17 + $0xe8] sm:$0xf]
        %v1581 = vld [vmem:[#allocation17 + $0xec] sm:$0xf]
        %v1582 = vld [vmem:[#allocation17 + $0xf0] sm:$0xf]
        %v1583 = vld [vmem:[#allocation17 + $0xf4] sm:$0xf]
        %v1584 = vld [vmem:[#allocation17 + $0xf8] sm:$0xf]
        %v1585 = vld [vmem:[#allocation17 + $0xfc] sm:$0xf]
        %v1586 = vld [vmem:[%s12] sm:$0x1]
        %v1588 = vperm.slane %v1586, 0
        %v1654 = vunpack.c.l.b16 %v1522
        %v1655 = vunpack.c.l.b16 %v1523
        %v1656 = vunpack.c.l.b16 %v1524
        %v1657 = vunpack.c.l.b16 %v1525
        %v1658 = vunpack.c.l.b16 %v1526
        %v1659 = vunpack.c.l.b16 %v1527
        %v1660 = vunpack.c.l.b16 %v1528
        %v1661 = vunpack.c.l.b16 %v1529
        %v1662 = vunpack.c.l.b16 %v1530
        %v1663 = vunpack.c.l.b16 %v1531
        %v1664 = vunpack.c.l.b16 %v1532
        %v1665 = vunpack.c.l.b16 %v1533
        %v1666 = vunpack.c.l.b16 %v1534
        %v1667 = vunpack.c.l.b16 %v1535
        %v1668 = vunpack.c.l.b16 %v1536
        %v1669 = vunpack.c.l.b16 %v1537
        %v1670 = vunpack.c.l.b16 %v1538
        %v1671 = vunpack.c.l.b16 %v1539
        %v1672 = vunpack.c.l.b16 %v1540
        %v1673 = vunpack.c.l.b16 %v1541
        %v1674 = vunpack.c.l.b16 %v1542
        %v1675 = vunpack.c.l.b16 %v1543
        %v1676 = vunpack.c.l.b16 %v1544
        %v1677 = vunpack.c.l.b16 %v1545
        %v1678 = vunpack.c.l.b16 %v1546
        %v1679 = vunpack.c.l.b16 %v1547
        %v1680 = vunpack.c.l.b16 %v1548
        %v1681 = vunpack.c.l.b16 %v1549
        %v1682 = vunpack.c.l.b16 %v1550
        %v1683 = vunpack.c.l.b16 %v1551
        %v1684 = vunpack.c.l.b16 %v1552
        %v1685 = vunpack.c.l.b16 %v1553
        %v1686 = vunpack.c.l.b16 %v1554
        %v1687 = vunpack.c.l.b16 %v1555
        %v1688 = vunpack.c.l.b16 %v1556
        %v1689 = vunpack.c.l.b16 %v1557
        %v1690 = vunpack.c.l.b16 %v1558
        %v1691 = vunpack.c.l.b16 %v1559
        %v1692 = vunpack.c.l.b16 %v1560
        %v1693 = vunpack.c.l.b16 %v1561
        %v1694 = vunpack.c.l.b16 %v1562
        %v1695 = vunpack.c.l.b16 %v1563
        %v1696 = vunpack.c.l.b16 %v1564
        %v1697 = vunpack.c.l.b16 %v1565
        %v1698 = vunpack.c.l.b16 %v1566
        %v1699 = vunpack.c.l.b16 %v1567
        %v1700 = vunpack.c.l.b16 %v1568
        %v1701 = vunpack.c.l.b16 %v1569
        %v1702 = vunpack.c.l.b16 %v1570
        %v1703 = vunpack.c.l.b16 %v1571
        %v1704 = vunpack.c.l.b16 %v1572
        %v1705 = vunpack.c.l.b16 %v1573
        %v1706 = vunpack.c.l.b16 %v1574
        %v1707 = vunpack.c.l.b16 %v1575
        %v1708 = vunpack.c.l.b16 %v1576
        %v1709 = vunpack.c.l.b16 %v1577
        %v1710 = vunpack.c.l.b16 %v1578
        %v1711 = vunpack.c.l.b16 %v1579
        %v1712 = vunpack.c.l.b16 %v1580
        %v1713 = vunpack.c.l.b16 %v1581
        %v1714 = vunpack.c.l.b16 %v1582
        %v1715 = vunpack.c.l.b16 %v1583
        %v1716 = vunpack.c.l.b16 %v1584
        %v1717 = vunpack.c.l.b16 %v1585
        %v1718 = vpack.c.b16 %v1655, %v1654
        %v1719 = vpack.c.b16 %v1657, %v1656
        %v1720 = vpack.c.b16 %v1659, %v1658
        %v1721 = vpack.c.b16 %v1661, %v1660
        %v1722 = vpack.c.b16 %v1663, %v1662
        %v1723 = vpack.c.b16 %v1665, %v1664
        %v1724 = vpack.c.b16 %v1667, %v1666
        %v1725 = vpack.c.b16 %v1669, %v1668
        %v1726 = vpack.c.b16 %v1671, %v1670
        %v1727 = vpack.c.b16 %v1673, %v1672
        %v1728 = vpack.c.b16 %v1675, %v1674
        %v1729 = vpack.c.b16 %v1677, %v1676
        %v1730 = vpack.c.b16 %v1679, %v1678
        %v1731 = vpack.c.b16 %v1681, %v1680
        %v1732 = vpack.c.b16 %v1683, %v1682
        %v1733 = vpack.c.b16 %v1685, %v1684
        %v1734 = vpack.c.b16 %v1687, %v1686
        %v1735 = vpack.c.b16 %v1689, %v1688
        %v1736 = vpack.c.b16 %v1691, %v1690
        %v1737 = vpack.c.b16 %v1693, %v1692
        %v1738 = vpack.c.b16 %v1695, %v1694
        %v1739 = vpack.c.b16 %v1697, %v1696
        %v1740 = vpack.c.b16 %v1699, %v1698
        %v1741 = vpack.c.b16 %v1701, %v1700
        %v1742 = vpack.c.b16 %v1703, %v1702
        %v1743 = vpack.c.b16 %v1705, %v1704
        %v1744 = vpack.c.b16 %v1707, %v1706
        %v1745 = vpack.c.b16 %v1709, %v1708
        %v1746 = vpack.c.b16 %v1711, %v1710
        %v1747 = vpack.c.b16 %v1713, %v1712
        %v1748 = vpack.c.b16 %v1715, %v1714
        %v1749 = vpack.c.b16 %v1717, %v1716
        %1782 = vmatpush.bf16.msra.mxu0 %v1725
        %1783 = vmatpush.bf16.msra.mxu0 %v1724
        %1784 = vmatpush.bf16.msra.mxu0 %v1723
        %1785 = vmatpush.bf16.msra.mxu0 %v1722
        %1786 = vmatpush.bf16.msra.mxu0 %v1721
        %1787 = vmatpush.bf16.msra.mxu0 %v1720
        %1788 = vmatpush.bf16.msra.mxu0 %v1719
        %1789 = vmatpush.bf16.msra.mxu0 %v1718
        %1790 = vmatmul.bf16.gmra.mxu0 %v1518
        %v1791 = vpop.f32.mrf.mxu0
        %v1792 = vadd.f32 %v1588, %v1791
        %v1793 = vpop.f32.mrf.mxu0
        %1794 = vdwg.mxu0
        %1795 = vmatpush.bf16.msra.mxu0 %v1733
        %1796 = vmatpush.bf16.msra.mxu0 %v1732
        %1797 = vmatpush.bf16.msra.mxu0 %v1731
        %1798 = vmatpush.bf16.msra.mxu0 %v1730
        %1799 = vmatpush.bf16.msra.mxu0 %v1729
        %1800 = vmatpush.bf16.msra.mxu0 %v1728
        %1801 = vmatpush.bf16.msra.mxu0 %v1727
        %1802 = vmatpush.bf16.msra.mxu0 %v1726
        %1803 = vmatmul.bf16.gmra.mxu0 %v1519
        %v1804 = vpop.f32.mrf.mxu0
        %v1805 = vadd.f32 %v1792, %v1804
        %v1806 = vpop.f32.mrf.mxu0
        %1807 = vdwg.mxu0
        %1808 = vmatpush.bf16.msra.mxu0 %v1741
        %1809 = vmatpush.bf16.msra.mxu0 %v1740
        %1810 = vmatpush.bf16.msra.mxu0 %v1739
        %1811 = vmatpush.bf16.msra.mxu0 %v1738
        %1812 = vmatpush.bf16.msra.mxu0 %v1737
        %1813 = vmatpush.bf16.msra.mxu0 %v1736
        %1814 = vmatpush.bf16.msra.mxu0 %v1735
        %1815 = vmatpush.bf16.msra.mxu0 %v1734
        %1816 = vmatmul.bf16.gmra.mxu0 %v1520
        %v1817 = vpop.f32.mrf.mxu0
        %v1818 = vadd.f32 %v1805, %v1817
        %v1819 = vpop.f32.mrf.mxu0
        %1820 = vdwg.mxu0
        %1821 = vmatpush.bf16.msra.mxu0 %v1749
        %1822 = vmatpush.bf16.msra.mxu0 %v1748
        %1823 = vmatpush.bf16.msra.mxu0 %v1747
        %1824 = vmatpush.bf16.msra.mxu0 %v1746
        %1825 = vmatpush.bf16.msra.mxu0 %v1745
        %1826 = vmatpush.bf16.msra.mxu0 %v1744
        %1827 = vmatpush.bf16.msra.mxu0 %v1743
        %1828 = vmatpush.bf16.msra.mxu0 %v1742
        %1829 = vmatmul.bf16.gmra.mxu0 %v1521
        %v1830 = vpop.f32.mrf.mxu0
        %v1831 = vadd.f32 %v1818, %v1830
        %v1832 = vpop.f32.mrf.mxu0
        %1833 = vdwg.mxu0
        %v1834 = vadd.f32 %v1228, %v1831
        %1835 = vst [vmem:[%s596] sm:$0xff] %v1834
        %s1836 = sand.u32 %s321, 1
        %s1837 = scalar_lea.sflag [#allocation4], %s1836
        %s1838 = sand.u32 %s321, 1
        %s1839 = smul.addr %s1838, 8
        %s1840 = scalar_lea.vmem [#allocation19], %s1839
        // Predicated region
        $region113: #{tpu_custom_call.1} parent=71 // pred_check
          %p1841 = pneg %p331
        $region114: #{tpu_custom_call.1} parent=71 // pred_check_branch
          %1843 = sbr.rel (%p1841) target = $region116
        $region115: #{tpu_custom_call.1} parent=71 // pred_region
          %1845 = vsyncadd %s1837, 0
          %s1846 = smul.addr %s35, 8
          %s1847 = scalar_lea.hbm %s13, %s1846
          %s1849 = sshll.u32 %s1840, 4
          %s1850 = int_to_ptr.vmem [resolvable:$true] %s1849
          %s1851 = sshll.u32 %s1847, 4
          %s1852 = int_to_ptr.hbm [resolvable:$true] %s1851
          %1854 = dma.vmem_to_hbm [thread:$0]  %s1850, 128, %s1852, %s1837
        $region116: #{tpu_custom_call.1} parent=71 // pred_fallthru
          _
      $region72: #{tpu_custom_call.1} parent=5 // pred_fallthru
        _
      %p1855 = scmp.le.s32.totalorder 2, %s30
      // Predicated region
      $region117: #{tpu_custom_call.1} parent=5 // pred_check
        %p1856 = pneg %p1855
      $region118: #{tpu_custom_call.1} parent=5 // pred_check_branch
        %1858 = sbr.rel (%p1856) target = $region120
      $region119: #{tpu_custom_call.1} parent=5 // pred_region
        %s1859 = ssub.s32 %s30, 2
        // Predicated region
        $region121: #{tpu_custom_call.1} parent=119 // pred_check
          %p1860 = pneg %p337
        $region122: #{tpu_custom_call.1} parent=119 // pred_check_branch
          %1862 = sbr.rel (%p1860) target = $region124
        $region123: #{tpu_custom_call.1} parent=119 // pred_region
          %s1863 = sand.u32 %s322, 1
          %s1864 = scalar_lea.sflag [#allocation4], %s1863
          %s1865 = sand.u32 %s322, 1
          %s1866 = smul.addr %s1865, 8
          %s1867 = scalar_lea.vmem [#allocation19], %s1866
          %1869 = dma.done %s1864, 128
        $region124: #{tpu_custom_call.1} parent=119 // pred_fallthru
          _
      $region120: #{tpu_custom_call.1} parent=5 // pred_fallthru
        _
    $region6: #{tpu_custom_call.1} parent=1 // loop_footer
      %s34 = sadd.s32 1, %s30
    $region7: #{tpu_custom_call.1} parent=1 // loop_footer_branch
      %29 = sbr.rel target = $region3
    $region8: #{tpu_custom_call.1} parent=1 // loop_exit
      _
    %1870 = vsyncpa [#allocation3], 1
    %s1871 = scalar_lea.sflag [#allocation3], 1
    %1872 = vsyncpa %s1871, 1
    %1873 = vsyncpa [#allocation6], 1
    %1874 = vsyncpa [#allocation9], 1
    %1875 = vsyncpa [#allocation12], 1
    %1876 = vsyncpa [#allocation15], 1
    %1877 = vsyncpa [#allocation18], 1
    %1878 = vsyncpa [#allocation4], 1
    %s1879 = scalar_lea.sflag [#allocation4], 1
    %1880 = vsyncpa %s1879, 1

</llo_original>
